<compile_context>
chip_gen: v5e
topology: v5e:2x2
jax: 0.10.0
libtpu: 0.0.40
codegen_flags: <defaults>
</compile_context>

<pallas_src>
import functools
import math

import jax
import jax.numpy as jnp
from jax import lax
from jax.experimental import pallas as pl
from jax.experimental.pallas import tpu as pltpu


# ----------------------------------------------------------------------------
# Fused Pallas kernel: skip_conv (+up_f) -> ResBlock (conv1/conv2/downsample)
# ----------------------------------------------------------------------------
def _upsample_block_kernel(
    skip_ref, up_ref, ws_ref, bs_ref, w1_ref, b1_ref, w2_ref, b2_ref, *rest,
    H, W, has_downsample, compute_dtype,
):
    if has_downsample:
        wd_ref, bd_ref, o_ref, pad_s, pad_u, pad_o = rest
    else:
        o_ref, pad_s, pad_u, pad_o = rest

    up_c = pad_u.shape[-1]
    out_c = pad_o.shape[-1]

    # Zero the padded scratch buffers once per grid step: the 1-px halo ring stays
    # zero while only the interiors are rewritten below.  (Padding lives entirely in
    # VMEM; there is no HBM-side padded copy of any activation.)
    pad_s[...] = jnp.zeros_like(pad_s)
    pad_u[...] = jnp.zeros_like(pad_u)
    pad_o[...] = jnp.zeros_like(pad_o)

    def conv3x3(pad_ref, w_ref, b_ref):
        # im2col: build one (H*W, 9*C) patch slab and do a single MXU matmul
        # (K = 9*C = 36..144) instead of nine K=C matmuls + 8 serial VPU adds.
        xp = pad_ref[...]                                      # (H+2, W+2, C), f32
        c = xp.shape[-1]
        taps = [
            xp[dy:dy + H, dx:dx + W, :].reshape(H * W, c)
            for dy in range(3) for dx in range(3)
        ]
        slab = jnp.concatenate(taps, axis=-1).astype(compute_dtype)   # (H*W, 9*C)
        acc = jnp.dot(slab, w_ref[...].astype(compute_dtype),
                      preferred_element_type=jnp.float32)
        return acc + b_ref[...]                                # (H*W, Cout), f32

    # x = skip_conv(skip_f) + up_f        (residual add fused, x stays in VMEM)
    pad_s[pl.ds(1, H), pl.ds(1, W), :] = skip_ref[0].astype(jnp.float32)
    x = conv3x3(pad_s, ws_ref, bs_ref)                         # (H*W, up_c)
    x = x + up_ref[0].reshape(H * W, up_c).astype(jnp.float32)

    # ResBlock identity path: downsample(x) uses the pre-ReLU x -> do it before
    # pad_u is reused for relu(x).
    if has_downsample:
        pad_u[pl.ds(1, H), pl.ds(1, W), :] = x.reshape(H, W, up_c)
        x_id = conv3x3(pad_u, wd_ref, bd_ref)                  # (H*W, out_c)
    else:
        x_id = x                                               # up_c == out_c

    # r = conv1(relu(x))   (pad_u reused: interior fully overwritten, halo still 0)
    pad_u[pl.ds(1, H), pl.ds(1, W), :] = jnp.maximum(x, 0.0).reshape(H, W, up_c)
    r = conv3x3(pad_u, w1_ref, b1_ref)                         # (H*W, out_c)

    # r = conv2(relu(r))
    pad_o[pl.ds(1, H), pl.ds(1, W), :] = jnp.maximum(r, 0.0).reshape(H, W, out_c)
    r = conv3x3(pad_o, w2_ref, b2_ref)                         # (H*W, out_c)

    # out = identity + r  -> single store of the block output (NHWC tile).
    o_ref[0] = (x_id + r).reshape(H, W, out_c).astype(o_ref.dtype)


# ----------------------------------------------------------------------------
# Wrapper: NCHW in / NCHW out, single fused pallas_call per forward
# ----------------------------------------------------------------------------
def upsample_block_forward(params, skip_f_nchw, up_f_nchw, *, compute_dtype=jnp.float32):
    N, skip_c, H, W = skip_f_nchw.shape
    up_c = up_f_nchw.shape[1]
    ws, bs = params["skip_conv"]
    w1, b1 = params["conv1"]
    w2, b2 = params["conv2"]
    out_c = w1.shape[-1]
    has_ds = "downsample" in params

    # NCHW -> NHWC (channels on the TPU lane axis inside the kernel).
    skip = jnp.transpose(skip_f_nchw, (0, 2, 3, 1))
    up = jnp.transpose(up_f_nchw, (0, 2, 3, 1))

    # Weights as (9*Cin, Cout) im2col matrices, biases as (1, Cout) (free reshapes).
    def _wb(w, b):
        return w.reshape(9 * w.shape[2], w.shape[3]), b.reshape(1, -1)

    wsf, bsf = _wb(ws, bs)
    w1f, b1f = _wb(w1, b1)
    w2f, b2f = _wb(w2, b2)

    inputs = [skip, up, wsf, bsf, w1f, b1f, w2f, b2f]
    in_specs = [
        pl.BlockSpec((1, H, W, skip_c), lambda n: (n, 0, 0, 0)),
        pl.BlockSpec((1, H, W, up_c), lambda n: (n, 0, 0, 0)),
        # Constant block indices: fetched into VMEM once, no re-DMA across the N grid.
        pl.BlockSpec(wsf.shape, lambda n: (0, 0)),
        pl.BlockSpec(bsf.shape, lambda n: (0, 0)),
        pl.BlockSpec(w1f.shape, lambda n: (0, 0)),
        pl.BlockSpec(b1f.shape, lambda n: (0, 0)),
        pl.BlockSpec(w2f.shape, lambda n: (0, 0)),
        pl.BlockSpec(b2f.shape, lambda n: (0, 0)),
    ]
    if has_ds:
        wd, bd = params["downsample"]
        wdf, bdf = _wb(wd, bd)
        inputs += [wdf, bdf]
        in_specs += [pl.BlockSpec(wdf.shape, lambda n: (0, 0)),
                     pl.BlockSpec(bdf.shape, lambda n: (0, 0))]

    kernel = functools.partial(
        _upsample_block_kernel, H=H, W=W, has_downsample=has_ds,
        compute_dtype=compute_dtype,
    )

    out = pl.pallas_call(
        kernel,
        out_shape=jax.ShapeDtypeStruct((N, H, W, out_c), skip.dtype),
        grid=(N,),
        in_specs=in_specs,
        out_specs=pl.BlockSpec((1, H, W, out_c), lambda n: (n, 0, 0, 0)),
        scratch_shapes=[
            pltpu.VMEM((H + 2, W + 2, skip_c), jnp.float32),
            pltpu.VMEM((H + 2, W + 2, up_c), jnp.float32),
            pltpu.VMEM((H + 2, W + 2, out_c), jnp.float32),
        ],
        compiler_params=pltpu.CompilerParams(dimension_semantics=("parallel",)),
    )(*inputs)

    return jnp.transpose(out, (0, 3, 1, 2))   # NHWC -> NCHW


# ----------------------------------------------------------------------------
# Parameter init (deterministic, PyTorch-like kaiming-uniform bounds)
# ----------------------------------------------------------------------------
def _init_conv(key, cin, cout):
    kw, kb = jax.random.split(key)
    bound = 1.0 / math.sqrt(cin * 9)
    w = jax.random.uniform(kw, (3, 3, cin, cout), jnp.float32, -bound, bound)
    b = jax.random.uniform(kb, (cout,), jnp.float32, -bound, bound)
    return w, b


def init_upsample_block(key, skip_c, up_c, out_c):
    keys = jax.random.split(key, 4)
    params = {
        "skip_conv": _init_conv(keys[0], skip_c, up_c),
        "conv1": _init_conv(keys[1], up_c, out_c),
        "conv2": _init_conv(keys[2], out_c, out_c),
    }
    if up_c != out_c:
        params["downsample"] = _init_conv(keys[3], up_c, out_c)
    return params


# ----------------------------------------------------------------------------
# Pure-JAX reference (for correctness check)
# ----------------------------------------------------------------------------
def _conv_ref(x_nhwc, w_hwio, b):
    y = lax.conv_general_dilated(
        x_nhwc, w_hwio, (1, 1), "SAME",
        dimension_numbers=("NHWC", "HWIO", "NHWC"),
    )
    return y + b


def upsample_block_ref(params, skip_f_nchw, up_f_nchw):
    skip = jnp.transpose(skip_f_nchw, (0, 2, 3, 1))
    up = jnp.transpose(up_f_nchw, (0, 2, 3, 1))
    ws, bs = params["skip_conv"]
    w1, b1 = params["conv1"]
    w2, b2 = params["conv2"]
    x = _conv_ref(skip, ws, bs) + up
    r = _conv_ref(jnp.maximum(x, 0.0), w1, b1)
    r = _conv_ref(jnp.maximum(r, 0.0), w2, b2)
    if "downsample" in params:
        wd, bd = params["downsample"]
        x = _conv_ref(x, wd, bd)
    out = x + r
    return jnp.transpose(out, (0, 3, 1, 2))


# ----------------------------------------------------------------------------
if __name__ == "__main__":
    key = jax.random.PRNGKey(0)
    k_params, k_skip, k_up, k_params2, k_up2 = jax.random.split(key, 5)

    N, H, W = 2, 16, 16
    fwd = jax.jit(upsample_block_forward)

    # Config A: up_c != out_c -> ResBlock downsample path.
    skip_c, up_c, out_c = 4, 8, 16
    params = init_upsample_block(k_params, skip_c, up_c, out_c)
    skip_f = jax.random.normal(k_skip, (N, skip_c, H, W), jnp.float32)
    up_f = jax.random.normal(k_up, (N, up_c, H, W), jnp.float32)

    out = jax.block_until_ready(fwd(params, skip_f, up_f))
    ref = jax.block_until_ready(upsample_block_ref(params, skip_f, up_f))
    assert out.shape == (N, out_c, H, W), out.shape
    assert jnp.allclose(out, ref, atol=1e-4, rtol=1e-4), float(jnp.max(jnp.abs(out - ref)))

    # Config B: up_c == out_c -> identity path (no downsample conv).
    skip_c2, up_c2, out_c2 = 4, 16, 16
    params2 = init_upsample_block(k_params2, skip_c2, up_c2, out_c2)
    up_f2 = jax.random.normal(k_up2, (N, up_c2, H, W), jnp.float32)

    out2 = jax.block_until_ready(fwd(params2, skip_f, up_f2))
    ref2 = jax.block_until_ready(upsample_block_ref(params2, skip_f, up_f2))
    assert out2.shape == (N, out_c2, H, W), out2.shape
    assert jnp.allclose(out2, ref2, atol=1e-4, rtol=1e-4), float(jnp.max(jnp.abs(out2 - ref2)))

    print("KERNEL_OK")
</pallas_src>

<mosaic_0001>
module attributes {stable_mosaic.version = 11 : i64} {
  func.func @_upsample_block_kernel(%arg0: i32, %arg1: memref<1x16x16x4xf32, #tpu.memory_space<vmem>>, %arg2: memref<1x16x16x8xf32, #tpu.memory_space<vmem>>, %arg3: memref<36x8xf32, #tpu.memory_space<vmem>>, %arg4: memref<1x8xf32, #tpu.memory_space<vmem>>, %arg5: memref<72x16xf32, #tpu.memory_space<vmem>>, %arg6: memref<1x16xf32, #tpu.memory_space<vmem>>, %arg7: memref<144x16xf32, #tpu.memory_space<vmem>>, %arg8: memref<1x16xf32, #tpu.memory_space<vmem>>, %arg9: memref<72x16xf32, #tpu.memory_space<vmem>>, %arg10: memref<1x16xf32, #tpu.memory_space<vmem>>, %arg11: memref<1x16x16x16xf32, #tpu.memory_space<vmem>>, %arg12: memref<18x18x4xf32, #tpu.memory_space<vmem>>, %arg13: memref<18x18x8xf32, #tpu.memory_space<vmem>>, %arg14: memref<18x18x16xf32, #tpu.memory_space<vmem>>) attributes {dimension_semantics = [#tpu.dimension_semantics<parallel>], iteration_bounds = array<i64: 2>, scalar_prefetch = 0 : i64, scratch_operands = 3 : i64, tpu.core_type = #tpu.core_type<tc>, window_params = [{transform_indices = @transform_0, window_bounds = array<i64: 1, 16, 16, 4>}, {transform_indices = @transform_1, window_bounds = array<i64: 1, 16, 16, 8>}, {pipeline_mode = #tpu.pipeline_mode<synchronous>, transform_indices = @transform_2, window_bounds = array<i64: 36, 8>}, {pipeline_mode = #tpu.pipeline_mode<synchronous>, transform_indices = @transform_3, window_bounds = array<i64: 1, 8>}, {pipeline_mode = #tpu.pipeline_mode<synchronous>, transform_indices = @transform_4, window_bounds = array<i64: 72, 16>}, {pipeline_mode = #tpu.pipeline_mode<synchronous>, transform_indices = @transform_5, window_bounds = array<i64: 1, 16>}, {pipeline_mode = #tpu.pipeline_mode<synchronous>, transform_indices = @transform_6, window_bounds = array<i64: 144, 16>}, {pipeline_mode = #tpu.pipeline_mode<synchronous>, transform_indices = @transform_7, window_bounds = array<i64: 1, 16>}, {pipeline_mode = #tpu.pipeline_mode<synchronous>, transform_indices = @transform_8, window_bounds = array<i64: 72, 16>}, {pipeline_mode = #tpu.pipeline_mode<synchronous>, transform_indices = @transform_9, window_bounds = array<i64: 1, 16>}, {transform_indices = @transform_10, window_bounds = array<i64: 1, 16, 16, 16>}]} {
    %cst = arith.constant 0.000000e+00 : f32
    %0 = vector.broadcast %cst : f32 to vector<18x18x4xf32>
    %c0 = arith.constant 0 : index
    %c0_0 = arith.constant 0 : index
    %c0_1 = arith.constant 0 : index
    %1 = vector.load %arg12[%c0, %c0_0, %c0_1] : memref<18x18x4xf32, #tpu.memory_space<vmem>>, vector<18x18x4xf32>
    tpu.vector_store %arg12[%c0, %c0_0, %c0_1], %0 {strides = array<i32>} : memref<18x18x4xf32, #tpu.memory_space<vmem>>, vector<18x18x4xf32>,
    %cst_2 = arith.constant 0.000000e+00 : f32
    %2 = vector.broadcast %cst_2 : f32 to vector<18x18x8xf32>
    %c0_3 = arith.constant 0 : index
    %c0_4 = arith.constant 0 : index
    %c0_5 = arith.constant 0 : index
    %3 = vector.load %arg13[%c0_3, %c0_4, %c0_5] : memref<18x18x8xf32, #tpu.memory_space<vmem>>, vector<18x18x8xf32>
    tpu.vector_store %arg13[%c0_3, %c0_4, %c0_5], %2 {strides = array<i32>} : memref<18x18x8xf32, #tpu.memory_space<vmem>>, vector<18x18x8xf32>,
    %cst_6 = arith.constant 0.000000e+00 : f32
    %4 = vector.broadcast %cst_6 : f32 to vector<18x18x16xf32>
    %c0_7 = arith.constant 0 : index
    %c0_8 = arith.constant 0 : index
    %c0_9 = arith.constant 0 : index
    %5 = vector.load %arg14[%c0_7, %c0_8, %c0_9] : memref<18x18x16xf32, #tpu.memory_space<vmem>>, vector<18x18x16xf32>
    tpu.vector_store %arg14[%c0_7, %c0_8, %c0_9], %4 {strides = array<i32>} : memref<18x18x16xf32, #tpu.memory_space<vmem>>, vector<18x18x16xf32>,
    %c0_10 = arith.constant 0 : index
    %c0_11 = arith.constant 0 : index
    %c0_12 = arith.constant 0 : index
    %c0_13 = arith.constant 0 : index
    %6 = vector.load %arg1[%c0_10, %c0_11, %c0_12, %c0_13] : memref<1x16x16x4xf32, #tpu.memory_space<vmem>>, vector<1x16x16x4xf32>
    %7 = vector.shape_cast %6 : vector<1x16x16x4xf32> to vector<16x16x4xf32>
    %c1 = arith.constant 1 : index
    %c1_14 = arith.constant 1 : index
    %c0_15 = arith.constant 0 : index
    %8 = vector.load %arg12[%c1, %c1_14, %c0_15] : memref<18x18x4xf32, #tpu.memory_space<vmem>>, vector<16x16x4xf32>
    tpu.vector_store %arg12[%c1, %c1_14, %c0_15], %7 {strides = array<i32>} : memref<18x18x4xf32, #tpu.memory_space<vmem>>, vector<16x16x4xf32>,
    %c0_16 = arith.constant 0 : index
    %c0_17 = arith.constant 0 : index
    %c0_18 = arith.constant 0 : index
    %9 = vector.load %arg12[%c0_16, %c0_17, %c0_18] : memref<18x18x4xf32, #tpu.memory_space<vmem>>, vector<18x18x4xf32>
    %10 = vector.extract_strided_slice %9 {offsets = [0, 0, 0], sizes = [16, 16, 4], strides = [1, 1, 1]} : vector<18x18x4xf32> to vector<16x16x4xf32>
    %11 = vector.shape_cast %10 : vector<16x16x4xf32> to vector<256x4xf32>
    %12 = vector.extract_strided_slice %9 {offsets = [0, 1, 0], sizes = [16, 16, 4], strides = [1, 1, 1]} : vector<18x18x4xf32> to vector<16x16x4xf32>
    %13 = vector.shape_cast %12 : vector<16x16x4xf32> to vector<256x4xf32>
    %14 = vector.extract_strided_slice %9 {offsets = [0, 2, 0], sizes = [16, 16, 4], strides = [1, 1, 1]} : vector<18x18x4xf32> to vector<16x16x4xf32>
    %15 = vector.shape_cast %14 : vector<16x16x4xf32> to vector<256x4xf32>
    %16 = vector.extract_strided_slice %9 {offsets = [1, 0, 0], sizes = [16, 16, 4], strides = [1, 1, 1]} : vector<18x18x4xf32> to vector<16x16x4xf32>
    %17 = vector.shape_cast %16 : vector<16x16x4xf32> to vector<256x4xf32>
    %18 = vector.extract_strided_slice %9 {offsets = [1, 1, 0], sizes = [16, 16, 4], strides = [1, 1, 1]} : vector<18x18x4xf32> to vector<16x16x4xf32>
    %19 = vector.shape_cast %18 : vector<16x16x4xf32> to vector<256x4xf32>
    %20 = vector.extract_strided_slice %9 {offsets = [1, 2, 0], sizes = [16, 16, 4], strides = [1, 1, 1]} : vector<18x18x4xf32> to vector<16x16x4xf32>
    %21 = vector.shape_cast %20 : vector<16x16x4xf32> to vector<256x4xf32>
    %22 = vector.extract_strided_slice %9 {offsets = [2, 0, 0], sizes = [16, 16, 4], strides = [1, 1, 1]} : vector<18x18x4xf32> to vector<16x16x4xf32>
    %23 = vector.shape_cast %22 : vector<16x16x4xf32> to vector<256x4xf32>
    %24 = vector.extract_strided_slice %9 {offsets = [2, 1, 0], sizes = [16, 16, 4], strides = [1, 1, 1]} : vector<18x18x4xf32> to vector<16x16x4xf32>
    %25 = vector.shape_cast %24 : vector<16x16x4xf32> to vector<256x4xf32>
    %26 = vector.extract_strided_slice %9 {offsets = [2, 2, 0], sizes = [16, 16, 4], strides = [1, 1, 1]} : vector<18x18x4xf32> to vector<16x16x4xf32>
    %27 = vector.shape_cast %26 : vector<16x16x4xf32> to vector<256x4xf32>
    %28 = tpu.concatenate %11, %13, %15, %17, %19, %21, %23, %25, %27 in 1 : vector<256x4xf32>, vector<256x4xf32>, vector<256x4xf32>, vector<256x4xf32>, vector<256x4xf32>, vector<256x4xf32>, vector<256x4xf32>, vector<256x4xf32>, vector<256x4xf32> -> vector<256x36xf32>
    %c0_19 = arith.constant 0 : index
    %c0_20 = arith.constant 0 : index
    %29 = vector.load %arg3[%c0_19, %c0_20] : memref<36x8xf32, #tpu.memory_space<vmem>>, vector<36x8xf32>
    %cst_21 = arith.constant dense<0.000000e+00> : vector<256x8xf32>
    %30 = tpu.matmul %28, %29, %cst_21 {dimension_numbers = #tpu.dot_dimension_numbers<[1], [0], [0], [1], [0, 0, 1, 1], [], []>} : vector<256x36xf32>, vector<36x8xf32>, vector<256x8xf32> -> vector<256x8xf32>
    %c0_22 = arith.constant 0 : index
    %c0_23 = arith.constant 0 : index
    %31 = vector.load %arg4[%c0_22, %c0_23] : memref<1x8xf32, #tpu.memory_space<vmem>>, vector<1x8xf32>
    %32 = vector.broadcast %31 : vector<1x8xf32> to vector<256x8xf32>
    %33 = arith.addf %30, %32 : vector<256x8xf32>
    %c0_24 = arith.constant 0 : index
    %c0_25 = arith.constant 0 : index
    %c0_26 = arith.constant 0 : index
    %c0_27 = arith.constant 0 : index
    %34 = vector.load %arg2[%c0_24, %c0_25, %c0_26, %c0_27] : memref<1x16x16x8xf32, #tpu.memory_space<vmem>>, vector<1x16x16x8xf32>
    %35 = vector.shape_cast %34 : vector<1x16x16x8xf32> to vector<16x16x8xf32>
    %36 = vector.shape_cast %35 : vector<16x16x8xf32> to vector<256x8xf32>
    %37 = arith.addf %33, %36 : vector<256x8xf32>
    %38 = vector.shape_cast %37 : vector<256x8xf32> to vector<16x16x8xf32>
    %c1_28 = arith.constant 1 : index
    %c1_29 = arith.constant 1 : index
    %c0_30 = arith.constant 0 : index
    %39 = vector.load %arg13[%c1_28, %c1_29, %c0_30] : memref<18x18x8xf32, #tpu.memory_space<vmem>>, vector<16x16x8xf32>
    tpu.vector_store %arg13[%c1_28, %c1_29, %c0_30], %38 {strides = array<i32>} : memref<18x18x8xf32, #tpu.memory_space<vmem>>, vector<16x16x8xf32>,
    %c0_31 = arith.constant 0 : index
    %c0_32 = arith.constant 0 : index
    %c0_33 = arith.constant 0 : index
    %40 = vector.load %arg13[%c0_31, %c0_32, %c0_33] : memref<18x18x8xf32, #tpu.memory_space<vmem>>, vector<18x18x8xf32>
    %41 = vector.extract_strided_slice %40 {offsets = [0, 0, 0], sizes = [16, 16, 8], strides = [1, 1, 1]} : vector<18x18x8xf32> to vector<16x16x8xf32>
    %42 = vector.shape_cast %41 : vector<16x16x8xf32> to vector<256x8xf32>
    %43 = vector.extract_strided_slice %40 {offsets = [0, 1, 0], sizes = [16, 16, 8], strides = [1, 1, 1]} : vector<18x18x8xf32> to vector<16x16x8xf32>
    %44 = vector.shape_cast %43 : vector<16x16x8xf32> to vector<256x8xf32>
    %45 = vector.extract_strided_slice %40 {offsets = [0, 2, 0], sizes = [16, 16, 8], strides = [1, 1, 1]} : vector<18x18x8xf32> to vector<16x16x8xf32>
    %46 = vector.shape_cast %45 : vector<16x16x8xf32> to vector<256x8xf32>
    %47 = vector.extract_strided_slice %40 {offsets = [1, 0, 0], sizes = [16, 16, 8], strides = [1, 1, 1]} : vector<18x18x8xf32> to vector<16x16x8xf32>
    %48 = vector.shape_cast %47 : vector<16x16x8xf32> to vector<256x8xf32>
    %49 = vector.extract_strided_slice %40 {offsets = [1, 1, 0], sizes = [16, 16, 8], strides = [1, 1, 1]} : vector<18x18x8xf32> to vector<16x16x8xf32>
    %50 = vector.shape_cast %49 : vector<16x16x8xf32> to vector<256x8xf32>
    %51 = vector.extract_strided_slice %40 {offsets = [1, 2, 0], sizes = [16, 16, 8], strides = [1, 1, 1]} : vector<18x18x8xf32> to vector<16x16x8xf32>
    %52 = vector.shape_cast %51 : vector<16x16x8xf32> to vector<256x8xf32>
    %53 = vector.extract_strided_slice %40 {offsets = [2, 0, 0], sizes = [16, 16, 8], strides = [1, 1, 1]} : vector<18x18x8xf32> to vector<16x16x8xf32>
    %54 = vector.shape_cast %53 : vector<16x16x8xf32> to vector<256x8xf32>
    %55 = vector.extract_strided_slice %40 {offsets = [2, 1, 0], sizes = [16, 16, 8], strides = [1, 1, 1]} : vector<18x18x8xf32> to vector<16x16x8xf32>
    %56 = vector.shape_cast %55 : vector<16x16x8xf32> to vector<256x8xf32>
    %57 = vector.extract_strided_slice %40 {offsets = [2, 2, 0], sizes = [16, 16, 8], strides = [1, 1, 1]} : vector<18x18x8xf32> to vector<16x16x8xf32>
    %58 = vector.shape_cast %57 : vector<16x16x8xf32> to vector<256x8xf32>
    %59 = tpu.concatenate %42, %44, %46, %48, %50, %52, %54, %56, %58 in 1 : vector<256x8xf32>, vector<256x8xf32>, vector<256x8xf32>, vector<256x8xf32>, vector<256x8xf32>, vector<256x8xf32>, vector<256x8xf32>, vector<256x8xf32>, vector<256x8xf32> -> vector<256x72xf32>
    %c0_34 = arith.constant 0 : index
    %c0_35 = arith.constant 0 : index
    %60 = vector.load %arg9[%c0_34, %c0_35] : memref<72x16xf32, #tpu.memory_space<vmem>>, vector<72x16xf32>
    %cst_36 = arith.constant dense<0.000000e+00> : vector<256x16xf32>
    %61 = tpu.matmul %59, %60, %cst_36 {dimension_numbers = #tpu.dot_dimension_numbers<[1], [0], [0], [1], [0, 0, 1, 1], [], []>} : vector<256x72xf32>, vector<72x16xf32>, vector<256x16xf32> -> vector<256x16xf32>
    %c0_37 = arith.constant 0 : index
    %c0_38 = arith.constant 0 : index
    %62 = vector.load %arg10[%c0_37, %c0_38] : memref<1x16xf32, #tpu.memory_space<vmem>>, vector<1x16xf32>
    %63 = vector.broadcast %62 : vector<1x16xf32> to vector<256x16xf32>
    %64 = arith.addf %61, %63 : vector<256x16xf32>
    %cst_39 = arith.constant 0.000000e+00 : f32
    %65 = vector.broadcast %cst_39 : f32 to vector<256x8xf32>
    %66 = arith.maximumf %37, %65 : vector<256x8xf32>
    %67 = vector.shape_cast %66 : vector<256x8xf32> to vector<16x16x8xf32>
    %c1_40 = arith.constant 1 : index
    %c1_41 = arith.constant 1 : index
    %c0_42 = arith.constant 0 : index
    %68 = vector.load %arg13[%c1_40, %c1_41, %c0_42] : memref<18x18x8xf32, #tpu.memory_space<vmem>>, vector<16x16x8xf32>
    tpu.vector_store %arg13[%c1_40, %c1_41, %c0_42], %67 {strides = array<i32>} : memref<18x18x8xf32, #tpu.memory_space<vmem>>, vector<16x16x8xf32>,
    %c0_43 = arith.constant 0 : index
    %c0_44 = arith.constant 0 : index
    %c0_45 = arith.constant 0 : index
    %69 = vector.load %arg13[%c0_43, %c0_44, %c0_45] : memref<18x18x8xf32, #tpu.memory_space<vmem>>, vector<18x18x8xf32>
    %70 = vector.extract_strided_slice %69 {offsets = [0, 0, 0], sizes = [16, 16, 8], strides = [1, 1, 1]} : vector<18x18x8xf32> to vector<16x16x8xf32>
    %71 = vector.shape_cast %70 : vector<16x16x8xf32> to vector<256x8xf32>
    %72 = vector.extract_strided_slice %69 {offsets = [0, 1, 0], sizes = [16, 16, 8], strides = [1, 1, 1]} : vector<18x18x8xf32> to vector<16x16x8xf32>
    %73 = vector.shape_cast %72 : vector<16x16x8xf32> to vector<256x8xf32>
    %74 = vector.extract_strided_slice %69 {offsets = [0, 2, 0], sizes = [16, 16, 8], strides = [1, 1, 1]} : vector<18x18x8xf32> to vector<16x16x8xf32>
    %75 = vector.shape_cast %74 : vector<16x16x8xf32> to vector<256x8xf32>
    %76 = vector.extract_strided_slice %69 {offsets = [1, 0, 0], sizes = [16, 16, 8], strides = [1, 1, 1]} : vector<18x18x8xf32> to vector<16x16x8xf32>
    %77 = vector.shape_cast %76 : vector<16x16x8xf32> to vector<256x8xf32>
    %78 = vector.extract_strided_slice %69 {offsets = [1, 1, 0], sizes = [16, 16, 8], strides = [1, 1, 1]} : vector<18x18x8xf32> to vector<16x16x8xf32>
    %79 = vector.shape_cast %78 : vector<16x16x8xf32> to vector<256x8xf32>
    %80 = vector.extract_strided_slice %69 {offsets = [1, 2, 0], sizes = [16, 16, 8], strides = [1, 1, 1]} : vector<18x18x8xf32> to vector<16x16x8xf32>
    %81 = vector.shape_cast %80 : vector<16x16x8xf32> to vector<256x8xf32>
    %82 = vector.extract_strided_slice %69 {offsets = [2, 0, 0], sizes = [16, 16, 8], strides = [1, 1, 1]} : vector<18x18x8xf32> to vector<16x16x8xf32>
    %83 = vector.shape_cast %82 : vector<16x16x8xf32> to vector<256x8xf32>
    %84 = vector.extract_strided_slice %69 {offsets = [2, 1, 0], sizes = [16, 16, 8], strides = [1, 1, 1]} : vector<18x18x8xf32> to vector<16x16x8xf32>
    %85 = vector.shape_cast %84 : vector<16x16x8xf32> to vector<256x8xf32>
    %86 = vector.extract_strided_slice %69 {offsets = [2, 2, 0], sizes = [16, 16, 8], strides = [1, 1, 1]} : vector<18x18x8xf32> to vector<16x16x8xf32>
    %87 = vector.shape_cast %86 : vector<16x16x8xf32> to vector<256x8xf32>
    %88 = tpu.concatenate %71, %73, %75, %77, %79, %81, %83, %85, %87 in 1 : vector<256x8xf32>, vector<256x8xf32>, vector<256x8xf32>, vector<256x8xf32>, vector<256x8xf32>, vector<256x8xf32>, vector<256x8xf32>, vector<256x8xf32>, vector<256x8xf32> -> vector<256x72xf32>
    %c0_46 = arith.constant 0 : index
    %c0_47 = arith.constant 0 : index
    %89 = vector.load %arg5[%c0_46, %c0_47] : memref<72x16xf32, #tpu.memory_space<vmem>>, vector<72x16xf32>
    %cst_48 = arith.constant dense<0.000000e+00> : vector<256x16xf32>
    %90 = tpu.matmul %88, %89, %cst_48 {dimension_numbers = #tpu.dot_dimension_numbers<[1], [0], [0], [1], [0, 0, 1, 1], [], []>} : vector<256x72xf32>, vector<72x16xf32>, vector<256x16xf32> -> vector<256x16xf32>
    %c0_49 = arith.constant 0 : index
    %c0_50 = arith.constant 0 : index
    %91 = vector.load %arg6[%c0_49, %c0_50] : memref<1x16xf32, #tpu.memory_space<vmem>>, vector<1x16xf32>
    %92 = vector.broadcast %91 : vector<1x16xf32> to vector<256x16xf32>
    %93 = arith.addf %90, %92 : vector<256x16xf32>
    %cst_51 = arith.constant 0.000000e+00 : f32
    %94 = vector.broadcast %cst_51 : f32 to vector<256x16xf32>
    %95 = arith.maximumf %93, %94 : vector<256x16xf32>
    %96 = vector.shape_cast %95 : vector<256x16xf32> to vector<16x16x16xf32>
    %c1_52 = arith.constant 1 : index
    %c1_53 = arith.constant 1 : index
    %c0_54 = arith.constant 0 : index
    %97 = vector.load %arg14[%c1_52, %c1_53, %c0_54] : memref<18x18x16xf32, #tpu.memory_space<vmem>>, vector<16x16x16xf32>
    tpu.vector_store %arg14[%c1_52, %c1_53, %c0_54], %96 {strides = array<i32>} : memref<18x18x16xf32, #tpu.memory_space<vmem>>, vector<16x16x16xf32>,
    %c0_55 = arith.constant 0 : index
    %c0_56 = arith.constant 0 : index
    %c0_57 = arith.constant 0 : index
    %98 = vector.load %arg14[%c0_55, %c0_56, %c0_57] : memref<18x18x16xf32, #tpu.memory_space<vmem>>, vector<18x18x16xf32>
    %99 = vector.extract_strided_slice %98 {offsets = [0, 0, 0], sizes = [16, 16, 16], strides = [1, 1, 1]} : vector<18x18x16xf32> to vector<16x16x16xf32>
    %100 = vector.shape_cast %99 : vector<16x16x16xf32> to vector<256x16xf32>
    %101 = vector.extract_strided_slice %98 {offsets = [0, 1, 0], sizes = [16, 16, 16], strides = [1, 1, 1]} : vector<18x18x16xf32> to vector<16x16x16xf32>
    %102 = vector.shape_cast %101 : vector<16x16x16xf32> to vector<256x16xf32>
    %103 = vector.extract_strided_slice %98 {offsets = [0, 2, 0], sizes = [16, 16, 16], strides = [1, 1, 1]} : vector<18x18x16xf32> to vector<16x16x16xf32>
    %104 = vector.shape_cast %103 : vector<16x16x16xf32> to vector<256x16xf32>
    %105 = vector.extract_strided_slice %98 {offsets = [1, 0, 0], sizes = [16, 16, 16], strides = [1, 1, 1]} : vector<18x18x16xf32> to vector<16x16x16xf32>
    %106 = vector.shape_cast %105 : vector<16x16x16xf32> to vector<256x16xf32>
    %107 = vector.extract_strided_slice %98 {offsets = [1, 1, 0], sizes = [16, 16, 16], strides = [1, 1, 1]} : vector<18x18x16xf32> to vector<16x16x16xf32>
    %108 = vector.shape_cast %107 : vector<16x16x16xf32> to vector<256x16xf32>
    %109 = vector.extract_strided_slice %98 {offsets = [1, 2, 0], sizes = [16, 16, 16], strides = [1, 1, 1]} : vector<18x18x16xf32> to vector<16x16x16xf32>
    %110 = vector.shape_cast %109 : vector<16x16x16xf32> to vector<256x16xf32>
    %111 = vector.extract_strided_slice %98 {offsets = [2, 0, 0], sizes = [16, 16, 16], strides = [1, 1, 1]} : vector<18x18x16xf32> to vector<16x16x16xf32>
    %112 = vector.shape_cast %111 : vector<16x16x16xf32> to vector<256x16xf32>
    %113 = vector.extract_strided_slice %98 {offsets = [2, 1, 0], sizes = [16, 16, 16], strides = [1, 1, 1]} : vector<18x18x16xf32> to vector<16x16x16xf32>
    %114 = vector.shape_cast %113 : vector<16x16x16xf32> to vector<256x16xf32>
    %115 = vector.extract_strided_slice %98 {offsets = [2, 2, 0], sizes = [16, 16, 16], strides = [1, 1, 1]} : vector<18x18x16xf32> to vector<16x16x16xf32>
    %116 = vector.shape_cast %115 : vector<16x16x16xf32> to vector<256x16xf32>
    %117 = tpu.concatenate %100, %102, %104, %106, %108, %110, %112, %114, %116 in 1 : vector<256x16xf32>, vector<256x16xf32>, vector<256x16xf32>, vector<256x16xf32>, vector<256x16xf32>, vector<256x16xf32>, vector<256x16xf32>, vector<256x16xf32>, vector<256x16xf32> -> vector<256x144xf32>
    %c0_58 = arith.constant 0 : index
    %c0_59 = arith.constant 0 : index
    %118 = vector.load %arg7[%c0_58, %c0_59] : memref<144x16xf32, #tpu.memory_space<vmem>>, vector<144x16xf32>
    %cst_60 = arith.constant dense<0.000000e+00> : vector<256x16xf32>
    %119 = tpu.matmul %117, %118, %cst_60 {dimension_numbers = #tpu.dot_dimension_numbers<[1], [0], [0], [1], [0, 0, 1, 1], [], []>} : vector<256x144xf32>, vector<144x16xf32>, vector<256x16xf32> -> vector<256x16xf32>
    %c0_61 = arith.constant 0 : index
    %c0_62 = arith.constant 0 : index
    %120 = vector.load %arg8[%c0_61, %c0_62] : memref<1x16xf32, #tpu.memory_space<vmem>>, vector<1x16xf32>
    %121 = vector.broadcast %120 : vector<1x16xf32> to vector<256x16xf32>
    %122 = arith.addf %119, %121 : vector<256x16xf32>
    %123 = arith.addf %64, %122 : vector<256x16xf32>
    %124 = vector.shape_cast %123 : vector<256x16xf32> to vector<16x16x16xf32>
    %c0_63 = arith.constant 0 : index
    %c0_64 = arith.constant 0 : index
    %c0_65 = arith.constant 0 : index
    %c0_66 = arith.constant 0 : index
    %125 = vector.load %arg11[%c0_63, %c0_64, %c0_65, %c0_66] : memref<1x16x16x16xf32, #tpu.memory_space<vmem>>, vector<1x16x16x16xf32>
    %126 = vector.shape_cast %125 : vector<1x16x16x16xf32> to vector<16x16x16xf32>
    %127 = vector.shape_cast %124 : vector<16x16x16xf32> to vector<1x16x16x16xf32>
    tpu.vector_store %arg11[%c0_63, %c0_64, %c0_65, %c0_66], %127 {strides = array<i32>} : memref<1x16x16x16xf32, #tpu.memory_space<vmem>>, vector<1x16x16x16xf32>,
    return
  }
  func.func @transform_0(%arg0: i32) -> (i32, i32, i32, i32) {
    %c0_i32 = arith.constant 0 : i32
    %c0_i32_0 = arith.constant 0 : i32
    %c0_i32_1 = arith.constant 0 : i32
    %c0_i32_2 = arith.constant 0 : i32
    return %arg0, %c0_i32, %c0_i32_0, %c0_i32_1 : i32, i32, i32, i32
  }
  func.func @transform_1(%arg0: i32) -> (i32, i32, i32, i32) {
    %c0_i32 = arith.constant 0 : i32
    %c0_i32_0 = arith.constant 0 : i32
    %c0_i32_1 = arith.constant 0 : i32
    %c0_i32_2 = arith.constant 0 : i32
    return %arg0, %c0_i32, %c0_i32_0, %c0_i32_1 : i32, i32, i32, i32
  }
  func.func @transform_2(%arg0: i32) -> (i32, i32) {
    %c0_i32 = arith.constant 0 : i32
    %c0_i32_0 = arith.constant 0 : i32
    %c0_i32_1 = arith.constant 0 : i32
    return %c0_i32, %c0_i32_0 : i32, i32
  }
  func.func @transform_3(%arg0: i32) -> (i32, i32) {
    %c0_i32 = arith.constant 0 : i32
    %c0_i32_0 = arith.constant 0 : i32
    %c0_i32_1 = arith.constant 0 : i32
    return %c0_i32, %c0_i32_0 : i32, i32
  }
  func.func @transform_4(%arg0: i32) -> (i32, i32) {
    %c0_i32 = arith.constant 0 : i32
    %c0_i32_0 = arith.constant 0 : i32
    %c0_i32_1 = arith.constant 0 : i32
    return %c0_i32, %c0_i32_0 : i32, i32
  }
  func.func @transform_5(%arg0: i32) -> (i32, i32) {
    %c0_i32 = arith.constant 0 : i32
    %c0_i32_0 = arith.constant 0 : i32
    %c0_i32_1 = arith.constant 0 : i32
    return %c0_i32, %c0_i32_0 : i32, i32
  }
  func.func @transform_6(%arg0: i32) -> (i32, i32) {
    %c0_i32 = arith.constant 0 : i32
    %c0_i32_0 = arith.constant 0 : i32
    %c0_i32_1 = arith.constant 0 : i32
    return %c0_i32, %c0_i32_0 : i32, i32
  }
  func.func @transform_7(%arg0: i32) -> (i32, i32) {
    %c0_i32 = arith.constant 0 : i32
    %c0_i32_0 = arith.constant 0 : i32
    %c0_i32_1 = arith.constant 0 : i32
    return %c0_i32, %c0_i32_0 : i32, i32
  }
  func.func @transform_8(%arg0: i32) -> (i32, i32) {
    %c0_i32 = arith.constant 0 : i32
    %c0_i32_0 = arith.constant 0 : i32
    %c0_i32_1 = arith.constant 0 : i32
    return %c0_i32, %c0_i32_0 : i32, i32
  }
  func.func @transform_9(%arg0: i32) -> (i32, i32) {
    %c0_i32 = arith.constant 0 : i32
    %c0_i32_0 = arith.constant 0 : i32
    %c0_i32_1 = arith.constant 0 : i32
    return %c0_i32, %c0_i32_0 : i32, i32
  }
  func.func @transform_10(%arg0: i32) -> (i32, i32, i32, i32) {
    %c0_i32 = arith.constant 0 : i32
    %c0_i32_0 = arith.constant 0 : i32
    %c0_i32_1 = arith.constant 0 : i32
    %c0_i32_2 = arith.constant 0 : i32
    return %arg0, %c0_i32, %c0_i32_0, %c0_i32_1 : i32, i32, i32, i32
  }
}

</mosaic_0001>

<llo_original>
// kernel: upsample_block_forward.1
$region0: #{upsample_block_forward.1}
  #allocation0 [shape = 'u32[]', space=smem, size = 0x4, offset = 0x4, fixed_abs, tag = 'smem constant byte address 0x4 - core index']
  #allocation1 [shape = 'u32[72,128]{1,0:T(1,128)}', space=vmem, size = 0x9000, scoped, tag = 'internal scratch']
  #allocation2 [shape = 'f32[18,18,4]{2,1,0:T(8,128)}', space=vmem, size = 0x36000, scoped, tag = 'scratch operand']
  #allocation3 [shape = 'f32[18,18,8]{2,1,0:T(8,128)}', space=vmem, size = 0x36000, scoped, tag = 'scratch operand']
  #allocation4 [shape = 'f32[18,18,16]{2,1,0:T(8,128)}', space=vmem, size = 0x36000, scoped, tag = 'scratch operand']
  %s0 = inlined_call_operand.vmem [shape: f32[2,16,16,4], index: 0, kind: input, shape index: {}]
  %s1 = inlined_call_operand.vmem [shape: f32[2,16,16,8], index: 1, kind: input, shape index: {}]
  %s2 = inlined_call_operand.vmem [shape: f32[36,8], index: 2, kind: input, shape index: {}]
  %s3 = inlined_call_operand.vmem [shape: f32[1,8], index: 3, kind: input, shape index: {}]
  %s4 = inlined_call_operand.vmem [shape: f32[72,16], index: 4, kind: input, shape index: {}]
  %s5 = inlined_call_operand.vmem [shape: f32[1,16], index: 5, kind: input, shape index: {}]
  %s6 = inlined_call_operand.vmem [shape: f32[144,16], index: 6, kind: input, shape index: {}]
  %s7 = inlined_call_operand.vmem [shape: f32[1,16], index: 7, kind: input, shape index: {}]
  %s8 = inlined_call_operand.vmem [shape: f32[72,16], index: 8, kind: input, shape index: {}]
  %s9 = inlined_call_operand.vmem [shape: f32[1,16], index: 9, kind: input, shape index: {}]
  %s10 = inlined_call_operand.vmem [shape: f32[2,16,16,16], index: 10, kind: output, shape index: {}]
  %s11 = sld [smem:[#allocation0]]
  $region73: #{upsample_block_forward.1} parent=0
    _
  %s13 = ssub.s32 1, %s11
  %s14 = scalar_select 0, %s13, %s11
  loop: start=0, step=1, limit=4
  $region2: #{upsample_block_forward.1} parent=0 // loop_pre_header
    _
  $region3: #{upsample_block_forward.1} parent=0 // loop_header
    %s16 = sphi 0, %s20
    %p17 = scmp.ge.s32.totalorder %s16, 4
    %s26 = sphi 0, %s28
    %s29 = sphi 0, %s26
    %s30 = sphi 0, %s29
    %s46 = sphi 0, %s30
    %s52 = sphi 0, %s54
    %s55 = sphi 0, %s52
    %s56 = sphi 0, %s55
    %s72 = sphi 0, %s56
    %s76 = sphi 0, %s76
    %s78 = sphi 0, %s76
    %s79 = sphi 0, %s78
    %s93 = sphi 0, %s79
    %s97 = sphi 0, %s97
    %s99 = sphi 0, %s97
    %s100 = sphi 0, %s99
    %s114 = sphi 0, %s100
    %s118 = sphi 0, %s118
    %s120 = sphi 0, %s118
    %s121 = sphi 0, %s120
    %s135 = sphi 0, %s121
    %s139 = sphi 0, %s139
    %s141 = sphi 0, %s139
    %s142 = sphi 0, %s141
    %s156 = sphi 0, %s142
    %s160 = sphi 0, %s160
    %s162 = sphi 0, %s160
    %s163 = sphi 0, %s162
    %s177 = sphi 0, %s163
    %s181 = sphi 0, %s181
    %s183 = sphi 0, %s181
    %s184 = sphi 0, %s183
    %s198 = sphi 0, %s184
    %s202 = sphi 0, %s202
    %s204 = sphi 0, %s202
    %s205 = sphi 0, %s204
    %s219 = sphi 0, %s205
    %s223 = sphi 0, %s223
    %s225 = sphi 0, %s223
    %s226 = sphi 0, %s225
    %s240 = sphi 0, %s226
    %s246 = sphi 0, %s248
    %s249 = sphi 0, %s246
    %s250 = sphi 0, %s249
    %s266 = sphi 0, %s250
  $region4: #{upsample_block_forward.1} parent=0 // loop_header_branch
    %19 = sbr.rel (%p17) target = $region8
  $region5: #{upsample_block_forward.1} parent=0 // loop_body
    %s21 = ssub.s32 %s16, 1
    %s22 = ssub.s32 %s16, 2
    %s23 = sadd.s32 %s16, 1
    %s24 = ssub.s32 %s16, %s23
    %p25 = scmp.eq.s32.totalorder %s24, 0
    %s27 = sadd.s32 %s26, 1
    %s28 = scalar_select %p25, %s26, %s27
    %p31 = pneg %p25
    %p32 = scmp.eq.s32.totalorder %s16, 1
    %p33 = por %p31, %p32
    %p34 = scmp.ne.s32.totalorder %s26, %s29
    %p35 = scmp.eq.s32.totalorder %s16, 0
    %p36 = por %p34, %p35
    %p37 = scmp.ne.s32.totalorder %s26, %s29
    %p38 = scmp.eq.s32.totalorder %s21, 1
    %p39 = por %p37, %p38
    %p40 = scmp.ne.s32.totalorder %s29, %s30
    %p41 = scmp.eq.s32.totalorder %s21, 0
    %p42 = por %p40, %p41
    %p43 = scmp.ne.s32.totalorder %s29, %s30
    %p44 = scmp.eq.s32.totalorder %s22, 1
    %p45 = por %p43, %p44
    %p47 = scmp.ne.s32.totalorder %s30, %s46
    %p48 = scmp.eq.s32.totalorder %s22, 0
    %p49 = por %p47, %p48
    %s50 = ssub.s32 %s16, %s23
    %p51 = scmp.eq.s32.totalorder %s50, 0
    %s53 = sadd.s32 %s52, 1
    %s54 = scalar_select %p51, %s52, %s53
    %p57 = pneg %p51
    %p58 = scmp.eq.s32.totalorder %s16, 1
    %p59 = por %p57, %p58
    %p60 = scmp.ne.s32.totalorder %s52, %s55
    %p61 = scmp.eq.s32.totalorder %s16, 0
    %p62 = por %p60, %p61
    %p63 = scmp.ne.s32.totalorder %s52, %s55
    %p64 = scmp.eq.s32.totalorder %s21, 1
    %p65 = por %p63, %p64
    %p66 = scmp.ne.s32.totalorder %s55, %s56
    %p67 = scmp.eq.s32.totalorder %s21, 0
    %p68 = por %p66, %p67
    %p69 = scmp.ne.s32.totalorder %s55, %s56
    %p70 = scmp.eq.s32.totalorder %s22, 1
    %p71 = por %p69, %p70
    %p73 = scmp.ne.s32.totalorder %s56, %s72
    %p74 = scmp.eq.s32.totalorder %s22, 0
    %p75 = por %p73, %p74
    %s77 = sadd.s32 %s76, 1
    %p80 = scmp.eq.s32.totalorder %s16, 1
    %p81 = scmp.ne.s32.totalorder %s76, %s78
    %p82 = scmp.eq.s32.totalorder %s16, 0
    %p83 = por %p81, %p82
    %p84 = scmp.ne.s32.totalorder %s76, %s78
    %p85 = scmp.eq.s32.totalorder %s21, 1
    %p86 = por %p84, %p85
    %p87 = scmp.ne.s32.totalorder %s78, %s79
    %p88 = scmp.eq.s32.totalorder %s21, 0
    %p89 = por %p87, %p88
    %p90 = scmp.ne.s32.totalorder %s78, %s79
    %p91 = scmp.eq.s32.totalorder %s22, 1
    %p92 = por %p90, %p91
    %p94 = scmp.ne.s32.totalorder %s79, %s93
    %p95 = scmp.eq.s32.totalorder %s22, 0
    %p96 = por %p94, %p95
    %s98 = sadd.s32 %s97, 1
    %p101 = scmp.eq.s32.totalorder %s16, 1
    %p102 = scmp.ne.s32.totalorder %s97, %s99
    %p103 = scmp.eq.s32.totalorder %s16, 0
    %p104 = por %p102, %p103
    %p105 = scmp.ne.s32.totalorder %s97, %s99
    %p106 = scmp.eq.s32.totalorder %s21, 1
    %p107 = por %p105, %p106
    %p108 = scmp.ne.s32.totalorder %s99, %s100
    %p109 = scmp.eq.s32.totalorder %s21, 0
    %p110 = por %p108, %p109
    %p111 = scmp.ne.s32.totalorder %s99, %s100
    %p112 = scmp.eq.s32.totalorder %s22, 1
    %p113 = por %p111, %p112
    %p115 = scmp.ne.s32.totalorder %s100, %s114
    %p116 = scmp.eq.s32.totalorder %s22, 0
    %p117 = por %p115, %p116
    %s119 = sadd.s32 %s118, 1
    %p122 = scmp.eq.s32.totalorder %s16, 1
    %p123 = scmp.ne.s32.totalorder %s118, %s120
    %p124 = scmp.eq.s32.totalorder %s16, 0
    %p125 = por %p123, %p124
    %p126 = scmp.ne.s32.totalorder %s118, %s120
    %p127 = scmp.eq.s32.totalorder %s21, 1
    %p128 = por %p126, %p127
    %p129 = scmp.ne.s32.totalorder %s120, %s121
    %p130 = scmp.eq.s32.totalorder %s21, 0
    %p131 = por %p129, %p130
    %p132 = scmp.ne.s32.totalorder %s120, %s121
    %p133 = scmp.eq.s32.totalorder %s22, 1
    %p134 = por %p132, %p133
    %p136 = scmp.ne.s32.totalorder %s121, %s135
    %p137 = scmp.eq.s32.totalorder %s22, 0
    %p138 = por %p136, %p137
    %s140 = sadd.s32 %s139, 1
    %p143 = scmp.eq.s32.totalorder %s16, 1
    %p144 = scmp.ne.s32.totalorder %s139, %s141
    %p145 = scmp.eq.s32.totalorder %s16, 0
    %p146 = por %p144, %p145
    %p147 = scmp.ne.s32.totalorder %s139, %s141
    %p148 = scmp.eq.s32.totalorder %s21, 1
    %p149 = por %p147, %p148
    %p150 = scmp.ne.s32.totalorder %s141, %s142
    %p151 = scmp.eq.s32.totalorder %s21, 0
    %p152 = por %p150, %p151
    %p153 = scmp.ne.s32.totalorder %s141, %s142
    %p154 = scmp.eq.s32.totalorder %s22, 1
    %p155 = por %p153, %p154
    %p157 = scmp.ne.s32.totalorder %s142, %s156
    %p158 = scmp.eq.s32.totalorder %s22, 0
    %p159 = por %p157, %p158
    %s161 = sadd.s32 %s160, 1
    %p164 = scmp.eq.s32.totalorder %s16, 1
    %p165 = scmp.ne.s32.totalorder %s160, %s162
    %p166 = scmp.eq.s32.totalorder %s16, 0
    %p167 = por %p165, %p166
    %p168 = scmp.ne.s32.totalorder %s160, %s162
    %p169 = scmp.eq.s32.totalorder %s21, 1
    %p170 = por %p168, %p169
    %p171 = scmp.ne.s32.totalorder %s162, %s163
    %p172 = scmp.eq.s32.totalorder %s21, 0
    %p173 = por %p171, %p172
    %p174 = scmp.ne.s32.totalorder %s162, %s163
    %p175 = scmp.eq.s32.totalorder %s22, 1
    %p176 = por %p174, %p175
    %p178 = scmp.ne.s32.totalorder %s163, %s177
    %p179 = scmp.eq.s32.totalorder %s22, 0
    %p180 = por %p178, %p179
    %s182 = sadd.s32 %s181, 1
    %p185 = scmp.eq.s32.totalorder %s16, 1
    %p186 = scmp.ne.s32.totalorder %s181, %s183
    %p187 = scmp.eq.s32.totalorder %s16, 0
    %p188 = por %p186, %p187
    %p189 = scmp.ne.s32.totalorder %s181, %s183
    %p190 = scmp.eq.s32.totalorder %s21, 1
    %p191 = por %p189, %p190
    %p192 = scmp.ne.s32.totalorder %s183, %s184
    %p193 = scmp.eq.s32.totalorder %s21, 0
    %p194 = por %p192, %p193
    %p195 = scmp.ne.s32.totalorder %s183, %s184
    %p196 = scmp.eq.s32.totalorder %s22, 1
    %p197 = por %p195, %p196
    %p199 = scmp.ne.s32.totalorder %s184, %s198
    %p200 = scmp.eq.s32.totalorder %s22, 0
    %p201 = por %p199, %p200
    %s203 = sadd.s32 %s202, 1
    %p206 = scmp.eq.s32.totalorder %s16, 1
    %p207 = scmp.ne.s32.totalorder %s202, %s204
    %p208 = scmp.eq.s32.totalorder %s16, 0
    %p209 = por %p207, %p208
    %p210 = scmp.ne.s32.totalorder %s202, %s204
    %p211 = scmp.eq.s32.totalorder %s21, 1
    %p212 = por %p210, %p211
    %p213 = scmp.ne.s32.totalorder %s204, %s205
    %p214 = scmp.eq.s32.totalorder %s21, 0
    %p215 = por %p213, %p214
    %p216 = scmp.ne.s32.totalorder %s204, %s205
    %p217 = scmp.eq.s32.totalorder %s22, 1
    %p218 = por %p216, %p217
    %p220 = scmp.ne.s32.totalorder %s205, %s219
    %p221 = scmp.eq.s32.totalorder %s22, 0
    %p222 = por %p220, %p221
    %s224 = sadd.s32 %s223, 1
    %p227 = scmp.eq.s32.totalorder %s16, 1
    %p228 = scmp.ne.s32.totalorder %s223, %s225
    %p229 = scmp.eq.s32.totalorder %s16, 0
    %p230 = por %p228, %p229
    %p231 = scmp.ne.s32.totalorder %s223, %s225
    %p232 = scmp.eq.s32.totalorder %s21, 1
    %p233 = por %p231, %p232
    %p234 = scmp.ne.s32.totalorder %s225, %s226
    %p235 = scmp.eq.s32.totalorder %s21, 0
    %p236 = por %p234, %p235
    %p237 = scmp.ne.s32.totalorder %s225, %s226
    %p238 = scmp.eq.s32.totalorder %s22, 1
    %p239 = por %p237, %p238
    %p241 = scmp.ne.s32.totalorder %s226, %s240
    %p242 = scmp.eq.s32.totalorder %s22, 0
    %p243 = por %p241, %p242
    %s244 = ssub.s32 %s16, %s23
    %p245 = scmp.eq.s32.totalorder %s244, 0
    %s247 = sadd.s32 %s246, 1
    %s248 = scalar_select %p245, %s246, %s247
    %p251 = pneg %p245
    %p252 = scmp.eq.s32.totalorder %s16, 1
    %p253 = por %p251, %p252
    %p254 = scmp.ne.s32.totalorder %s246, %s249
    %p255 = scmp.eq.s32.totalorder %s16, 0
    %p256 = por %p254, %p255
    %p257 = scmp.ne.s32.totalorder %s246, %s249
    %p258 = scmp.eq.s32.totalorder %s21, 1
    %p259 = por %p257, %p258
    %p260 = scmp.ne.s32.totalorder %s249, %s250
    %p261 = scmp.eq.s32.totalorder %s21, 0
    %p262 = por %p260, %p261
    %p263 = scmp.ne.s32.totalorder %s249, %s250
    %p264 = scmp.eq.s32.totalorder %s22, 1
    %p265 = por %p263, %p264
    %p267 = scmp.ne.s32.totalorder %s250, %s266
    %p268 = scmp.eq.s32.totalorder %s22, 0
    %p269 = por %p267, %p268
    %p270 = scmp.le.s32.totalorder 1, %s16
    %p271 = scmp.lt.s32.totalorder %s16, 3
    %p272 = pnand %p270, %p271
    %p273 = pneg %p272
    // Predicated region
    $region9: #{upsample_block_forward.1} parent=5 // pred_check
      _
    $region10: #{upsample_block_forward.1} parent=5 // pred_check_branch
      %275 = sbr.rel (%p272) target = $region12
    $region11: #{upsample_block_forward.1} parent=5 // pred_region
      %s276 = ssub.s32 %s16, 1
      // Predicated region
      $region13: #{upsample_block_forward.1} parent=11 // pred_check
        %p277 = pneg %p89
      $region14: #{upsample_block_forward.1} parent=11 // pred_check_branch
        %279 = sbr.rel (%p277) target = $region16
      $region15: #{upsample_block_forward.1} parent=11 // pred_region
        _
      $region16: #{upsample_block_forward.1} parent=11 // pred_fallthru
        _
      // Predicated region
      $region17: #{upsample_block_forward.1} parent=11 // pred_check
        %p280 = pneg %p110
      $region18: #{upsample_block_forward.1} parent=11 // pred_check_branch
        %282 = sbr.rel (%p280) target = $region20
      $region19: #{upsample_block_forward.1} parent=11 // pred_region
        _
      $region20: #{upsample_block_forward.1} parent=11 // pred_fallthru
        _
      // Predicated region
      $region21: #{upsample_block_forward.1} parent=11 // pred_check
        %p283 = pneg %p131
      $region22: #{upsample_block_forward.1} parent=11 // pred_check_branch
        %285 = sbr.rel (%p283) target = $region24
      $region23: #{upsample_block_forward.1} parent=11 // pred_region
        _
      $region24: #{upsample_block_forward.1} parent=11 // pred_fallthru
        _
      // Predicated region
      $region25: #{upsample_block_forward.1} parent=11 // pred_check
        %p286 = pneg %p152
      $region26: #{upsample_block_forward.1} parent=11 // pred_check_branch
        %288 = sbr.rel (%p286) target = $region28
      $region27: #{upsample_block_forward.1} parent=11 // pred_region
        _
      $region28: #{upsample_block_forward.1} parent=11 // pred_fallthru
        _
      // Predicated region
      $region29: #{upsample_block_forward.1} parent=11 // pred_check
        %p289 = pneg %p173
      $region30: #{upsample_block_forward.1} parent=11 // pred_check_branch
        %291 = sbr.rel (%p289) target = $region32
      $region31: #{upsample_block_forward.1} parent=11 // pred_region
        _
      $region32: #{upsample_block_forward.1} parent=11 // pred_fallthru
        _
      // Predicated region
      $region33: #{upsample_block_forward.1} parent=11 // pred_check
        %p292 = pneg %p194
      $region34: #{upsample_block_forward.1} parent=11 // pred_check_branch
        %294 = sbr.rel (%p292) target = $region36
      $region35: #{upsample_block_forward.1} parent=11 // pred_region
        _
      $region36: #{upsample_block_forward.1} parent=11 // pred_fallthru
        _
      // Predicated region
      $region37: #{upsample_block_forward.1} parent=11 // pred_check
        %p295 = pneg %p215
      $region38: #{upsample_block_forward.1} parent=11 // pred_check_branch
        %297 = sbr.rel (%p295) target = $region40
      $region39: #{upsample_block_forward.1} parent=11 // pred_region
        _
      $region40: #{upsample_block_forward.1} parent=11 // pred_fallthru
        _
      // Predicated region
      $region41: #{upsample_block_forward.1} parent=11 // pred_check
        %p298 = pneg %p236
      $region42: #{upsample_block_forward.1} parent=11 // pred_check_branch
        %300 = sbr.rel (%p298) target = $region44
      $region43: #{upsample_block_forward.1} parent=11 // pred_region
        _
      $region44: #{upsample_block_forward.1} parent=11 // pred_fallthru
        _
    $region12: #{upsample_block_forward.1} parent=5 // pred_fallthru
      _
    %p301 = scmp.lt.s32.totalorder %s16, 2
    // Predicated region
    $region45: #{upsample_block_forward.1} parent=5 // pred_check
      %p302 = pneg %p301
    $region46: #{upsample_block_forward.1} parent=5 // pred_check_branch
      %304 = sbr.rel (%p302) target = $region48
    $region47: #{upsample_block_forward.1} parent=5 // pred_region
      // Predicated region
      $region49: #{upsample_block_forward.1} parent=47 // pred_check
        %p305 = pneg %p36
      $region50: #{upsample_block_forward.1} parent=47 // pred_check_branch
        %307 = sbr.rel (%p305) target = $region52
      $region51: #{upsample_block_forward.1} parent=47 // pred_region
        %p308 = scmp.lt.s32.totalorder %s16, 1
        %s309 = scalar_select %p308, %s16, 1
        %s310 = smul.addr %s309, 32
        %s311 = smul.addr %s310, 8
        %s312 = scalar_lea.vmem %s0, %s311
      $region52: #{upsample_block_forward.1} parent=47 // pred_fallthru
        _
      // Predicated region
      $region53: #{upsample_block_forward.1} parent=47 // pred_check
        %p313 = pneg %p62
      $region54: #{upsample_block_forward.1} parent=47 // pred_check_branch
        %315 = sbr.rel (%p313) target = $region56
      $region55: #{upsample_block_forward.1} parent=47 // pred_region
        %p316 = scmp.lt.s32.totalorder %s16, 1
        %s317 = scalar_select %p316, %s16, 1
        %s318 = smul.addr %s317, 32
        %s319 = smul.addr %s318, 8
        %s320 = scalar_lea.vmem %s1, %s319
      $region56: #{upsample_block_forward.1} parent=47 // pred_fallthru
        _
    $region48: #{upsample_block_forward.1} parent=5 // pred_fallthru
      _
    %p321 = scmp.le.s32.totalorder 1, %s16
    %p322 = scmp.lt.s32.totalorder %s16, 3
    %p323 = pnand %p321, %p322
    %p324 = pneg %p323
    // Predicated region
    $region57: #{upsample_block_forward.1} parent=5 // pred_check
      _
    $region58: #{upsample_block_forward.1} parent=5 // pred_check_branch
      %326 = sbr.rel (%p323) target = $region60
    $region59: #{upsample_block_forward.1} parent=5 // pred_region
      %s327 = ssub.s32 %s16, 1
      %p328 = scmp.lt.s32.totalorder %s21, 1
      %s329 = scalar_select %p328, %s21, 1
      %s330 = smul.addr %s329, 32
      %s331 = smul.addr %s330, 8
      %s332 = scalar_lea.vmem %s0, %s331
      %p333 = pneg %p42
      %p334 = pneg %p39
      %p335 = scmp.lt.s32.totalorder %s21, 1
      %s336 = scalar_select %p335, %s21, 1
      %s337 = smul.addr %s336, 32
      %s338 = smul.addr %s337, 8
      %s339 = scalar_lea.vmem %s1, %s338
      %p340 = pneg %p68
      %p341 = pneg %p65
      %p342 = pneg %p89
      %p343 = pneg %p86
      %p344 = pneg %p110
      %p345 = pneg %p107
      %p346 = pneg %p131
      %p347 = pneg %p128
      %p348 = pneg %p152
      %p349 = pneg %p149
      %p350 = pneg %p173
      %p351 = pneg %p170
      %p352 = pneg %p194
      %p353 = pneg %p191
      %p354 = pneg %p215
      %p355 = pneg %p212
      %p356 = pneg %p236
      %p357 = pneg %p233
      %p358 = pneg %p262
      %p359 = pneg %p259
      %p360 = scmp.lt.s32.totalorder %s21, 1
      %s361 = scalar_select %p360, %s21, 1
      %s362 = smul.addr %s361, 32
      %s363 = smul.addr %s362, 8
      %s364 = scalar_lea.vmem %s10, %s363
      %p365 = scmp.lt.s32.totalorder %s21, 1
      %s366 = scalar_select %p365, %s21, 1
      %s367 = smul.addr %s366, 32
      %s368 = smul.addr %s367, 8
      %s369 = scalar_lea.vmem %s0, %s368
      %p370 = scmp.lt.s32.totalorder %s21, 1
      %s371 = scalar_select %p370, %s21, 1
      %s372 = smul.addr %s371, 32
      %s373 = smul.addr %s372, 8
      %s374 = scalar_lea.vmem %s1, %s373
      %p375 = scmp.lt.s32.totalorder %s21, 1
      %s376 = scalar_select %p375, %s21, 1
      %s377 = smul.addr %s376, 32
      %s378 = smul.addr %s377, 8
      %s379 = scalar_lea.vmem %s10, %s378
      %vm380 = vcmask 31744
      %381 = vst.msk [vmem:[#allocation2] sm:$0xff] %vm380, 0.0
      %382 = vst.msk [vmem:[#allocation2 + $0x8] sm:$0xff] %vm380, 0.0
      %vm383 = vcmask 25600
      %384 = vst.msk [vmem:[#allocation2 + $0x10] sm:$0x3] %vm383, 0.0
      %385 = vst.msk [vmem:[#allocation2 + $0x18] sm:$0xff] %vm380, 0.0
      %386 = vst.msk [vmem:[#allocation2 + $0x20] sm:$0xff] %vm380, 0.0
      %387 = vst.msk [vmem:[#allocation2 + $0x28] sm:$0x3] %vm383, 0.0
      %388 = vst.msk [vmem:[#allocation2 + $0x30] sm:$0xff] %vm380, 0.0
      %389 = vst.msk [vmem:[#allocation2 + $0x38] sm:$0xff] %vm380, 0.0
      %390 = vst.msk [vmem:[#allocation2 + $0x40] sm:$0x3] %vm383, 0.0
      %391 = vst.msk [vmem:[#allocation2 + $0x48] sm:$0xff] %vm380, 0.0
      %392 = vst.msk [vmem:[#allocation2 + $0x50] sm:$0xff] %vm380, 0.0
      %393 = vst.msk [vmem:[#allocation2 + $0x58] sm:$0x3] %vm383, 0.0
      %394 = vst.msk [vmem:[#allocation2 + $0x60] sm:$0xff] %vm380, 0.0
      %395 = vst.msk [vmem:[#allocation2 + $0x68] sm:$0xff] %vm380, 0.0
      %396 = vst.msk [vmem:[#allocation2 + $0x70] sm:$0x3] %vm383, 0.0
      %397 = vst.msk [vmem:[#allocation2 + $0x78] sm:$0xff] %vm380, 0.0
      %398 = vst.msk [vmem:[#allocation2 + $0x80] sm:$0xff] %vm380, 0.0
      %399 = vst.msk [vmem:[#allocation2 + $0x88] sm:$0x3] %vm383, 0.0
      %400 = vst.msk [vmem:[#allocation2 + $0x90] sm:$0xff] %vm380, 0.0
      %401 = vst.msk [vmem:[#allocation2 + $0x98] sm:$0xff] %vm380, 0.0
      %402 = vst.msk [vmem:[#allocation2 + $0xa0] sm:$0x3] %vm383, 0.0
      %403 = vst.msk [vmem:[#allocation2 + $0xa8] sm:$0xff] %vm380, 0.0
      %404 = vst.msk [vmem:[#allocation2 + $0xb0] sm:$0xff] %vm380, 0.0
      %405 = vst.msk [vmem:[#allocation2 + $0xb8] sm:$0x3] %vm383, 0.0
      %406 = vst.msk [vmem:[#allocation2 + $0xc0] sm:$0xff] %vm380, 0.0
      %407 = vst.msk [vmem:[#allocation2 + $0xc8] sm:$0xff] %vm380, 0.0
      %408 = vst.msk [vmem:[#allocation2 + $0xd0] sm:$0x3] %vm383, 0.0
      %409 = vst.msk [vmem:[#allocation2 + $0xd8] sm:$0xff] %vm380, 0.0
      %410 = vst.msk [vmem:[#allocation2 + $0xe0] sm:$0xff] %vm380, 0.0
      %411 = vst.msk [vmem:[#allocation2 + $0xe8] sm:$0x3] %vm383, 0.0
      %412 = vst.msk [vmem:[#allocation2 + $0xf0] sm:$0xff] %vm380, 0.0
      %413 = vst.msk [vmem:[#allocation2 + $0xf8] sm:$0xff] %vm380, 0.0
      %414 = vst.msk [vmem:[#allocation2 + $0x100] sm:$0x3] %vm383, 0.0
      %415 = vst.msk [vmem:[#allocation2 + $0x108] sm:$0xff] %vm380, 0.0
      %416 = vst.msk [vmem:[#allocation2 + $0x110] sm:$0xff] %vm380, 0.0
      %417 = vst.msk [vmem:[#allocation2 + $0x118] sm:$0x3] %vm383, 0.0
      %418 = vst.msk [vmem:[#allocation2 + $0x120] sm:$0xff] %vm380, 0.0
      %419 = vst.msk [vmem:[#allocation2 + $0x128] sm:$0xff] %vm380, 0.0
      %420 = vst.msk [vmem:[#allocation2 + $0x130] sm:$0x3] %vm383, 0.0
      %421 = vst.msk [vmem:[#allocation2 + $0x138] sm:$0xff] %vm380, 0.0
      %422 = vst.msk [vmem:[#allocation2 + $0x140] sm:$0xff] %vm380, 0.0
      %423 = vst.msk [vmem:[#allocation2 + $0x148] sm:$0x3] %vm383, 0.0
      %424 = vst.msk [vmem:[#allocation2 + $0x150] sm:$0xff] %vm380, 0.0
      %425 = vst.msk [vmem:[#allocation2 + $0x158] sm:$0xff] %vm380, 0.0
      %426 = vst.msk [vmem:[#allocation2 + $0x160] sm:$0x3] %vm383, 0.0
      %427 = vst.msk [vmem:[#allocation2 + $0x168] sm:$0xff] %vm380, 0.0
      %428 = vst.msk [vmem:[#allocation2 + $0x170] sm:$0xff] %vm380, 0.0
      %429 = vst.msk [vmem:[#allocation2 + $0x178] sm:$0x3] %vm383, 0.0
      %430 = vst.msk [vmem:[#allocation2 + $0x180] sm:$0xff] %vm380, 0.0
      %431 = vst.msk [vmem:[#allocation2 + $0x188] sm:$0xff] %vm380, 0.0
      %432 = vst.msk [vmem:[#allocation2 + $0x190] sm:$0x3] %vm383, 0.0
      %433 = vst.msk [vmem:[#allocation2 + $0x198] sm:$0xff] %vm380, 0.0
      %434 = vst.msk [vmem:[#allocation2 + $0x1a0] sm:$0xff] %vm380, 0.0
      %435 = vst.msk [vmem:[#allocation2 + $0x1a8] sm:$0x3] %vm383, 0.0
      %vm436 = vcmask 64512
      %437 = vst.msk [vmem:[#allocation3] sm:$0xff] %vm436, 0.0
      %438 = vst.msk [vmem:[#allocation3 + $0x8] sm:$0xff] %vm436, 0.0
      %vm439 = vcmask 58368
      %440 = vst.msk [vmem:[#allocation3 + $0x10] sm:$0x3] %vm439, 0.0
      %441 = vst.msk [vmem:[#allocation3 + $0x18] sm:$0xff] %vm436, 0.0
      %442 = vst.msk [vmem:[#allocation3 + $0x20] sm:$0xff] %vm436, 0.0
      %443 = vst.msk [vmem:[#allocation3 + $0x28] sm:$0x3] %vm439, 0.0
      %444 = vst.msk [vmem:[#allocation3 + $0x30] sm:$0xff] %vm436, 0.0
      %445 = vst.msk [vmem:[#allocation3 + $0x38] sm:$0xff] %vm436, 0.0
      %446 = vst.msk [vmem:[#allocation3 + $0x40] sm:$0x3] %vm439, 0.0
      %447 = vst.msk [vmem:[#allocation3 + $0x48] sm:$0xff] %vm436, 0.0
      %448 = vst.msk [vmem:[#allocation3 + $0x50] sm:$0xff] %vm436, 0.0
      %449 = vst.msk [vmem:[#allocation3 + $0x58] sm:$0x3] %vm439, 0.0
      %450 = vst.msk [vmem:[#allocation3 + $0x60] sm:$0xff] %vm436, 0.0
      %451 = vst.msk [vmem:[#allocation3 + $0x68] sm:$0xff] %vm436, 0.0
      %452 = vst.msk [vmem:[#allocation3 + $0x70] sm:$0x3] %vm439, 0.0
      %453 = vst.msk [vmem:[#allocation3 + $0x78] sm:$0xff] %vm436, 0.0
      %454 = vst.msk [vmem:[#allocation3 + $0x80] sm:$0xff] %vm436, 0.0
      %455 = vst.msk [vmem:[#allocation3 + $0x88] sm:$0x3] %vm439, 0.0
      %456 = vst.msk [vmem:[#allocation3 + $0x90] sm:$0xff] %vm436, 0.0
      %457 = vst.msk [vmem:[#allocation3 + $0x98] sm:$0xff] %vm436, 0.0
      %458 = vst.msk [vmem:[#allocation3 + $0xa0] sm:$0x3] %vm439, 0.0
      %459 = vst.msk [vmem:[#allocation3 + $0xa8] sm:$0xff] %vm436, 0.0
      %460 = vst.msk [vmem:[#allocation3 + $0xb0] sm:$0xff] %vm436, 0.0
      %461 = vst.msk [vmem:[#allocation3 + $0xb8] sm:$0x3] %vm439, 0.0
      %462 = vst.msk [vmem:[#allocation3 + $0xc0] sm:$0xff] %vm436, 0.0
      %463 = vst.msk [vmem:[#allocation3 + $0xc8] sm:$0xff] %vm436, 0.0
      %464 = vst.msk [vmem:[#allocation3 + $0xd0] sm:$0x3] %vm439, 0.0
      %465 = vst.msk [vmem:[#allocation3 + $0xd8] sm:$0xff] %vm436, 0.0
      %466 = vst.msk [vmem:[#allocation3 + $0xe0] sm:$0xff] %vm436, 0.0
      %467 = vst.msk [vmem:[#allocation3 + $0xe8] sm:$0x3] %vm439, 0.0
      %468 = vst.msk [vmem:[#allocation3 + $0xf0] sm:$0xff] %vm436, 0.0
      %469 = vst.msk [vmem:[#allocation3 + $0xf8] sm:$0xff] %vm436, 0.0
      %470 = vst.msk [vmem:[#allocation3 + $0x100] sm:$0x3] %vm439, 0.0
      %471 = vst.msk [vmem:[#allocation3 + $0x108] sm:$0xff] %vm436, 0.0
      %472 = vst.msk [vmem:[#allocation3 + $0x110] sm:$0xff] %vm436, 0.0
      %473 = vst.msk [vmem:[#allocation3 + $0x118] sm:$0x3] %vm439, 0.0
      %474 = vst.msk [vmem:[#allocation3 + $0x120] sm:$0xff] %vm436, 0.0
      %475 = vst.msk [vmem:[#allocation3 + $0x128] sm:$0xff] %vm436, 0.0
      %476 = vst.msk [vmem:[#allocation3 + $0x130] sm:$0x3] %vm439, 0.0
      %477 = vst.msk [vmem:[#allocation3 + $0x138] sm:$0xff] %vm436, 0.0
      %478 = vst.msk [vmem:[#allocation3 + $0x140] sm:$0xff] %vm436, 0.0
      %479 = vst.msk [vmem:[#allocation3 + $0x148] sm:$0x3] %vm439, 0.0
      %480 = vst.msk [vmem:[#allocation3 + $0x150] sm:$0xff] %vm436, 0.0
      %481 = vst.msk [vmem:[#allocation3 + $0x158] sm:$0xff] %vm436, 0.0
      %482 = vst.msk [vmem:[#allocation3 + $0x160] sm:$0x3] %vm439, 0.0
      %483 = vst.msk [vmem:[#allocation3 + $0x168] sm:$0xff] %vm436, 0.0
      %484 = vst.msk [vmem:[#allocation3 + $0x170] sm:$0xff] %vm436, 0.0
      %485 = vst.msk [vmem:[#allocation3 + $0x178] sm:$0x3] %vm439, 0.0
      %486 = vst.msk [vmem:[#allocation3 + $0x180] sm:$0xff] %vm436, 0.0
      %487 = vst.msk [vmem:[#allocation3 + $0x188] sm:$0xff] %vm436, 0.0
      %488 = vst.msk [vmem:[#allocation3 + $0x190] sm:$0x3] %vm439, 0.0
      %489 = vst.msk [vmem:[#allocation3 + $0x198] sm:$0xff] %vm436, 0.0
      %490 = vst.msk [vmem:[#allocation3 + $0x1a0] sm:$0xff] %vm436, 0.0
      %491 = vst.msk [vmem:[#allocation3 + $0x1a8] sm:$0x3] %vm439, 0.0
      %vm492 = vcmask 130048
      %493 = vst.msk [vmem:[#allocation4] sm:$0xff] %vm492, 0.0
      %494 = vst.msk [vmem:[#allocation4 + $0x8] sm:$0xff] %vm492, 0.0
      %vm495 = vcmask 123904
      %496 = vst.msk [vmem:[#allocation4 + $0x10] sm:$0x3] %vm495, 0.0
      %497 = vst.msk [vmem:[#allocation4 + $0x18] sm:$0xff] %vm492, 0.0
      %498 = vst.msk [vmem:[#allocation4 + $0x20] sm:$0xff] %vm492, 0.0
      %499 = vst.msk [vmem:[#allocation4 + $0x28] sm:$0x3] %vm495, 0.0
      %500 = vst.msk [vmem:[#allocation4 + $0x30] sm:$0xff] %vm492, 0.0
      %501 = vst.msk [vmem:[#allocation4 + $0x38] sm:$0xff] %vm492, 0.0
      %502 = vst.msk [vmem:[#allocation4 + $0x40] sm:$0x3] %vm495, 0.0
      %503 = vst.msk [vmem:[#allocation4 + $0x48] sm:$0xff] %vm492, 0.0
      %504 = vst.msk [vmem:[#allocation4 + $0x50] sm:$0xff] %vm492, 0.0
      %505 = vst.msk [vmem:[#allocation4 + $0x58] sm:$0x3] %vm495, 0.0
      %506 = vst.msk [vmem:[#allocation4 + $0x60] sm:$0xff] %vm492, 0.0
      %507 = vst.msk [vmem:[#allocation4 + $0x68] sm:$0xff] %vm492, 0.0
      %508 = vst.msk [vmem:[#allocation4 + $0x70] sm:$0x3] %vm495, 0.0
      %509 = vst.msk [vmem:[#allocation4 + $0x78] sm:$0xff] %vm492, 0.0
      %510 = vst.msk [vmem:[#allocation4 + $0x80] sm:$0xff] %vm492, 0.0
      %511 = vst.msk [vmem:[#allocation4 + $0x88] sm:$0x3] %vm495, 0.0
      %512 = vst.msk [vmem:[#allocation4 + $0x90] sm:$0xff] %vm492, 0.0
      %513 = vst.msk [vmem:[#allocation4 + $0x98] sm:$0xff] %vm492, 0.0
      %514 = vst.msk [vmem:[#allocation4 + $0xa0] sm:$0x3] %vm495, 0.0
      %515 = vst.msk [vmem:[#allocation4 + $0xa8] sm:$0xff] %vm492, 0.0
      %516 = vst.msk [vmem:[#allocation4 + $0xb0] sm:$0xff] %vm492, 0.0
      %517 = vst.msk [vmem:[#allocation4 + $0xb8] sm:$0x3] %vm495, 0.0
      %518 = vst.msk [vmem:[#allocation4 + $0xc0] sm:$0xff] %vm492, 0.0
      %519 = vst.msk [vmem:[#allocation4 + $0xc8] sm:$0xff] %vm492, 0.0
      %520 = vst.msk [vmem:[#allocation4 + $0xd0] sm:$0x3] %vm495, 0.0
      %521 = vst.msk [vmem:[#allocation4 + $0xd8] sm:$0xff] %vm492, 0.0
      %522 = vst.msk [vmem:[#allocation4 + $0xe0] sm:$0xff] %vm492, 0.0
      %523 = vst.msk [vmem:[#allocation4 + $0xe8] sm:$0x3] %vm495, 0.0
      %524 = vst.msk [vmem:[#allocation4 + $0xf0] sm:$0xff] %vm492, 0.0
      %525 = vst.msk [vmem:[#allocation4 + $0xf8] sm:$0xff] %vm492, 0.0
      %526 = vst.msk [vmem:[#allocation4 + $0x100] sm:$0x3] %vm495, 0.0
      %527 = vst.msk [vmem:[#allocation4 + $0x108] sm:$0xff] %vm492, 0.0
      %528 = vst.msk [vmem:[#allocation4 + $0x110] sm:$0xff] %vm492, 0.0
      %529 = vst.msk [vmem:[#allocation4 + $0x118] sm:$0x3] %vm495, 0.0
      %530 = vst.msk [vmem:[#allocation4 + $0x120] sm:$0xff] %vm492, 0.0
      %531 = vst.msk [vmem:[#allocation4 + $0x128] sm:$0xff] %vm492, 0.0
      %532 = vst.msk [vmem:[#allocation4 + $0x130] sm:$0x3] %vm495, 0.0
      %533 = vst.msk [vmem:[#allocation4 + $0x138] sm:$0xff] %vm492, 0.0
      %534 = vst.msk [vmem:[#allocation4 + $0x140] sm:$0xff] %vm492, 0.0
      %535 = vst.msk [vmem:[#allocation4 + $0x148] sm:$0x3] %vm495, 0.0
      %536 = vst.msk [vmem:[#allocation4 + $0x150] sm:$0xff] %vm492, 0.0
      %537 = vst.msk [vmem:[#allocation4 + $0x158] sm:$0xff] %vm492, 0.0
      %538 = vst.msk [vmem:[#allocation4 + $0x160] sm:$0x3] %vm495, 0.0
      %539 = vst.msk [vmem:[#allocation4 + $0x168] sm:$0xff] %vm492, 0.0
      %540 = vst.msk [vmem:[#allocation4 + $0x170] sm:$0xff] %vm492, 0.0
      %541 = vst.msk [vmem:[#allocation4 + $0x178] sm:$0x3] %vm495, 0.0
      %542 = vst.msk [vmem:[#allocation4 + $0x180] sm:$0xff] %vm492, 0.0
      %543 = vst.msk [vmem:[#allocation4 + $0x188] sm:$0xff] %vm492, 0.0
      %544 = vst.msk [vmem:[#allocation4 + $0x190] sm:$0x3] %vm495, 0.0
      %545 = vst.msk [vmem:[#allocation4 + $0x198] sm:$0xff] %vm492, 0.0
      %546 = vst.msk [vmem:[#allocation4 + $0x1a0] sm:$0xff] %vm492, 0.0
      %547 = vst.msk [vmem:[#allocation4 + $0x1a8] sm:$0x3] %vm495, 0.0
      %v548 = vld [vmem:[%s369] sm:$0xff]
      %v549 = vld [vmem:[%s369 + $0x8] sm:$0xff]
      %v550 = vld [vmem:[%s369 + $0x10] sm:$0xff]
      %v551 = vld [vmem:[%s369 + $0x18] sm:$0xff]
      %v552 = vld [vmem:[%s369 + $0x20] sm:$0xff]
      %v553 = vld [vmem:[%s369 + $0x28] sm:$0xff]
      %v554 = vld [vmem:[%s369 + $0x30] sm:$0xff]
      %v555 = vld [vmem:[%s369 + $0x38] sm:$0xff]
      %v556 = vld [vmem:[%s369 + $0x40] sm:$0xff]
      %v557 = vld [vmem:[%s369 + $0x48] sm:$0xff]
      %v558 = vld [vmem:[%s369 + $0x50] sm:$0xff]
      %v559 = vld [vmem:[%s369 + $0x58] sm:$0xff]
      %v560 = vld [vmem:[%s369 + $0x60] sm:$0xff]
      %v561 = vld [vmem:[%s369 + $0x68] sm:$0xff]
      %v562 = vld [vmem:[%s369 + $0x70] sm:$0xff]
      %v563 = vld [vmem:[%s369 + $0x78] sm:$0xff]
      %v564 = vld [vmem:[%s369 + $0x80] sm:$0xff]
      %v565 = vld [vmem:[%s369 + $0x88] sm:$0xff]
      %v566 = vld [vmem:[%s369 + $0x90] sm:$0xff]
      %v567 = vld [vmem:[%s369 + $0x98] sm:$0xff]
      %v568 = vld [vmem:[%s369 + $0xa0] sm:$0xff]
      %v569 = vld [vmem:[%s369 + $0xa8] sm:$0xff]
      %v570 = vld [vmem:[%s369 + $0xb0] sm:$0xff]
      %v571 = vld [vmem:[%s369 + $0xb8] sm:$0xff]
      %v572 = vld [vmem:[%s369 + $0xc0] sm:$0xff]
      %v573 = vld [vmem:[%s369 + $0xc8] sm:$0xff]
      %v574 = vld [vmem:[%s369 + $0xd0] sm:$0xff]
      %v575 = vld [vmem:[%s369 + $0xd8] sm:$0xff]
      %v576 = vld [vmem:[%s369 + $0xe0] sm:$0xff]
      %v577 = vld [vmem:[%s369 + $0xe8] sm:$0xff]
      %v578 = vld [vmem:[%s369 + $0xf0] sm:$0xff]
      %v579 = vld [vmem:[%s369 + $0xf8] sm:$0xff]
      %s580 = scalar_lea.vmem [#allocation2], 24
      %581 = vst.msk [vmem:[%s580 + $0x1] sm:$0xff] %vm380, %v548
      %582 = vst.msk [vmem:[%s580 + $0x9] sm:$0xff] %vm380, %v549
      %583 = vst.msk [vmem:[%s580 + $0x19] sm:$0xff] %vm380, %v550
      %584 = vst.msk [vmem:[%s580 + $0x21] sm:$0xff] %vm380, %v551
      %585 = vst.msk [vmem:[%s580 + $0x31] sm:$0xff] %vm380, %v552
      %586 = vst.msk [vmem:[%s580 + $0x39] sm:$0xff] %vm380, %v553
      %587 = vst.msk [vmem:[%s580 + $0x49] sm:$0xff] %vm380, %v554
      %588 = vst.msk [vmem:[%s580 + $0x51] sm:$0xff] %vm380, %v555
      %589 = vst.msk [vmem:[%s580 + $0x61] sm:$0xff] %vm380, %v556
      %590 = vst.msk [vmem:[%s580 + $0x69] sm:$0xff] %vm380, %v557
      %591 = vst.msk [vmem:[%s580 + $0x79] sm:$0xff] %vm380, %v558
      %592 = vst.msk [vmem:[%s580 + $0x81] sm:$0xff] %vm380, %v559
      %593 = vst.msk [vmem:[%s580 + $0x91] sm:$0xff] %vm380, %v560
      %594 = vst.msk [vmem:[%s580 + $0x99] sm:$0xff] %vm380, %v561
      %595 = vst.msk [vmem:[%s580 + $0xa9] sm:$0xff] %vm380, %v562
      %596 = vst.msk [vmem:[%s580 + $0xb1] sm:$0xff] %vm380, %v563
      %597 = vst.msk [vmem:[%s580 + $0xc1] sm:$0xff] %vm380, %v564
      %598 = vst.msk [vmem:[%s580 + $0xc9] sm:$0xff] %vm380, %v565
      %599 = vst.msk [vmem:[%s580 + $0xd9] sm:$0xff] %vm380, %v566
      %600 = vst.msk [vmem:[%s580 + $0xe1] sm:$0xff] %vm380, %v567
      %601 = vst.msk [vmem:[%s580 + $0xf1] sm:$0xff] %vm380, %v568
      %602 = vst.msk [vmem:[%s580 + $0xf9] sm:$0xff] %vm380, %v569
      %603 = vst.msk [vmem:[%s580 + $0x109] sm:$0xff] %vm380, %v570
      %604 = vst.msk [vmem:[%s580 + $0x111] sm:$0xff] %vm380, %v571
      %605 = vst.msk [vmem:[%s580 + $0x121] sm:$0xff] %vm380, %v572
      %606 = vst.msk [vmem:[%s580 + $0x129] sm:$0xff] %vm380, %v573
      %607 = vst.msk [vmem:[%s580 + $0x139] sm:$0xff] %vm380, %v574
      %608 = vst.msk [vmem:[%s580 + $0x141] sm:$0xff] %vm380, %v575
      %609 = vst.msk [vmem:[%s580 + $0x151] sm:$0xff] %vm380, %v576
      %610 = vst.msk [vmem:[%s580 + $0x159] sm:$0xff] %vm380, %v577
      %611 = vst.msk [vmem:[%s580 + $0x169] sm:$0xff] %vm380, %v578
      %612 = vst.msk [vmem:[%s580 + $0x171] sm:$0xff] %vm380, %v579
      %v613 = vld [vmem:[#allocation2] sm:$0xff]
      %v614 = vld [vmem:[#allocation2 + $0x8] sm:$0xff]
      %v615 = vld [vmem:[#allocation2 + $0x10] sm:$0x3]
      %v616 = vld [vmem:[#allocation2 + $0x18] sm:$0xff]
      %v617 = vld [vmem:[#allocation2 + $0x20] sm:$0xff]
      %v618 = vld [vmem:[#allocation2 + $0x28] sm:$0x3]
      %v619 = vld [vmem:[#allocation2 + $0x30] sm:$0xff]
      %v620 = vld [vmem:[#allocation2 + $0x38] sm:$0xff]
      %v621 = vld [vmem:[#allocation2 + $0x40] sm:$0x3]
      %v622 = vld [vmem:[#allocation2 + $0x48] sm:$0xff]
      %v623 = vld [vmem:[#allocation2 + $0x50] sm:$0xff]
      %v624 = vld [vmem:[#allocation2 + $0x58] sm:$0x3]
      %v625 = vld [vmem:[#allocation2 + $0x60] sm:$0xff]
      %v626 = vld [vmem:[#allocation2 + $0x68] sm:$0xff]
      %v627 = vld [vmem:[#allocation2 + $0x70] sm:$0x3]
      %v628 = vld [vmem:[#allocation2 + $0x78] sm:$0xff]
      %v629 = vld [vmem:[#allocation2 + $0x80] sm:$0xff]
      %v630 = vld [vmem:[#allocation2 + $0x88] sm:$0x3]
      %v631 = vld [vmem:[#allocation2 + $0x90] sm:$0xff]
      %v632 = vld [vmem:[#allocation2 + $0x98] sm:$0xff]
      %v633 = vld [vmem:[#allocation2 + $0xa0] sm:$0x3]
      %v634 = vld [vmem:[#allocation2 + $0xa8] sm:$0xff]
      %v635 = vld [vmem:[#allocation2 + $0xb0] sm:$0xff]
      %v636 = vld [vmem:[#allocation2 + $0xb8] sm:$0x3]
      %v637 = vld [vmem:[#allocation2 + $0xc0] sm:$0xff]
      %v638 = vld [vmem:[#allocation2 + $0xc8] sm:$0xff]
      %v639 = vld [vmem:[#allocation2 + $0xd0] sm:$0x3]
      %v640 = vld [vmem:[#allocation2 + $0xd8] sm:$0xff]
      %v641 = vld [vmem:[#allocation2 + $0xe0] sm:$0xff]
      %v642 = vld [vmem:[#allocation2 + $0xe8] sm:$0x3]
      %v643 = vld [vmem:[#allocation2 + $0xf0] sm:$0xff]
      %v644 = vld [vmem:[#allocation2 + $0xf8] sm:$0xff]
      %v645 = vld [vmem:[#allocation2 + $0x100] sm:$0x3]
      %v646 = vld [vmem:[#allocation2 + $0x108] sm:$0xff]
      %v647 = vld [vmem:[#allocation2 + $0x110] sm:$0xff]
      %v648 = vld [vmem:[#allocation2 + $0x118] sm:$0x3]
      %v649 = vld [vmem:[#allocation2 + $0x120] sm:$0xff]
      %v650 = vld [vmem:[#allocation2 + $0x128] sm:$0xff]
      %v651 = vld [vmem:[#allocation2 + $0x130] sm:$0x3]
      %v652 = vld [vmem:[#allocation2 + $0x138] sm:$0xff]
      %v653 = vld [vmem:[#allocation2 + $0x140] sm:$0xff]
      %v654 = vld [vmem:[#allocation2 + $0x148] sm:$0x3]
      %v655 = vld [vmem:[#allocation2 + $0x150] sm:$0xff]
      %v656 = vld [vmem:[#allocation2 + $0x158] sm:$0xff]
      %v657 = vld [vmem:[#allocation2 + $0x160] sm:$0x3]
      %v658 = vld [vmem:[#allocation2 + $0x168] sm:$0xff]
      %v659 = vld [vmem:[#allocation2 + $0x170] sm:$0xff]
      %v660 = vld [vmem:[#allocation2 + $0x178] sm:$0x3]
      %v661 = vld [vmem:[#allocation2 + $0x180] sm:$0xff]
      %v662 = vld [vmem:[#allocation2 + $0x188] sm:$0xff]
      %v663 = vld [vmem:[#allocation2 + $0x190] sm:$0x3]
      %v664 = vld [vmem:[#allocation2 + $0x198] sm:$0xff]
      %v665 = vld [vmem:[#allocation2 + $0x1a0] sm:$0xff]
      %v666 = vld [vmem:[#allocation2 + $0x1a8] sm:$0x3]
      %vm715 = vcmask 1046528
      %v716 = vrot.slane %v613, 1
      %v717 = vrot.slane %v614, 1
      %v718 = vsel %vm715, %v716, %v717
      %v719 = vrot.slane %v615, 1
      %v720 = vsel %vm715, %v717, %v719
      %v721 = vrot.slane %v616, 1
      %v722 = vrot.slane %v617, 1
      %v723 = vsel %vm715, %v721, %v722
      %v724 = vrot.slane %v618, 1
      %v725 = vsel %vm715, %v722, %v724
      %v726 = vrot.slane %v619, 1
      %v727 = vrot.slane %v620, 1
      %v728 = vsel %vm715, %v726, %v727
      %v729 = vrot.slane %v621, 1
      %v730 = vsel %vm715, %v727, %v729
      %v731 = vrot.slane %v622, 1
      %v732 = vrot.slane %v623, 1
      %v733 = vsel %vm715, %v731, %v732
      %v734 = vrot.slane %v624, 1
      %v735 = vsel %vm715, %v732, %v734
      %v736 = vrot.slane %v625, 1
      %v737 = vrot.slane %v626, 1
      %v738 = vsel %vm715, %v736, %v737
      %v739 = vrot.slane %v627, 1
      %v740 = vsel %vm715, %v737, %v739
      %v741 = vrot.slane %v628, 1
      %v742 = vrot.slane %v629, 1
      %v743 = vsel %vm715, %v741, %v742
      %v744 = vrot.slane %v630, 1
      %v745 = vsel %vm715, %v742, %v744
      %v746 = vrot.slane %v631, 1
      %v747 = vrot.slane %v632, 1
      %v748 = vsel %vm715, %v746, %v747
      %v749 = vrot.slane %v633, 1
      %v750 = vsel %vm715, %v747, %v749
      %v751 = vrot.slane %v634, 1
      %v752 = vrot.slane %v635, 1
      %v753 = vsel %vm715, %v751, %v752
      %v754 = vrot.slane %v636, 1
      %v755 = vsel %vm715, %v752, %v754
      %v756 = vrot.slane %v637, 1
      %v757 = vrot.slane %v638, 1
      %v758 = vsel %vm715, %v756, %v757
      %v759 = vrot.slane %v639, 1
      %v760 = vsel %vm715, %v757, %v759
      %v761 = vrot.slane %v640, 1
      %v762 = vrot.slane %v641, 1
      %v763 = vsel %vm715, %v761, %v762
      %v764 = vrot.slane %v642, 1
      %v765 = vsel %vm715, %v762, %v764
      %v766 = vrot.slane %v643, 1
      %v767 = vrot.slane %v644, 1
      %v768 = vsel %vm715, %v766, %v767
      %v769 = vrot.slane %v645, 1
      %v770 = vsel %vm715, %v767, %v769
      %v771 = vrot.slane %v646, 1
      %v772 = vrot.slane %v647, 1
      %v773 = vsel %vm715, %v771, %v772
      %v774 = vrot.slane %v648, 1
      %v775 = vsel %vm715, %v772, %v774
      %v776 = vrot.slane %v649, 1
      %v777 = vrot.slane %v650, 1
      %v778 = vsel %vm715, %v776, %v777
      %v779 = vrot.slane %v651, 1
      %v780 = vsel %vm715, %v777, %v779
      %v781 = vrot.slane %v652, 1
      %v782 = vrot.slane %v653, 1
      %v783 = vsel %vm715, %v781, %v782
      %v784 = vrot.slane %v654, 1
      %v785 = vsel %vm715, %v782, %v784
      %v786 = vrot.slane %v655, 1
      %v787 = vrot.slane %v656, 1
      %v788 = vsel %vm715, %v786, %v787
      %v789 = vrot.slane %v657, 1
      %v790 = vsel %vm715, %v787, %v789
      %v791 = vrot.slane %v658, 1
      %v792 = vrot.slane %v659, 1
      %v793 = vsel %vm715, %v791, %v792
      %v794 = vrot.slane %v660, 1
      %v795 = vsel %vm715, %v792, %v794
      %vm796 = vcmask 1045504
      %v797 = vrot.slane %v613, 2
      %v798 = vrot.slane %v614, 2
      %v799 = vsel %vm796, %v797, %v798
      %v800 = vrot.slane %v615, 2
      %v801 = vsel %vm796, %v798, %v800
      %v802 = vrot.slane %v616, 2
      %v803 = vrot.slane %v617, 2
      %v804 = vsel %vm796, %v802, %v803
      %v805 = vrot.slane %v618, 2
      %v806 = vsel %vm796, %v803, %v805
      %v807 = vrot.slane %v619, 2
      %v808 = vrot.slane %v620, 2
      %v809 = vsel %vm796, %v807, %v808
      %v810 = vrot.slane %v621, 2
      %v811 = vsel %vm796, %v808, %v810
      %v812 = vrot.slane %v622, 2
      %v813 = vrot.slane %v623, 2
      %v814 = vsel %vm796, %v812, %v813
      %v815 = vrot.slane %v624, 2
      %v816 = vsel %vm796, %v813, %v815
      %v817 = vrot.slane %v625, 2
      %v818 = vrot.slane %v626, 2
      %v819 = vsel %vm796, %v817, %v818
      %v820 = vrot.slane %v627, 2
      %v821 = vsel %vm796, %v818, %v820
      %v822 = vrot.slane %v628, 2
      %v823 = vrot.slane %v629, 2
      %v824 = vsel %vm796, %v822, %v823
      %v825 = vrot.slane %v630, 2
      %v826 = vsel %vm796, %v823, %v825
      %v827 = vrot.slane %v631, 2
      %v828 = vrot.slane %v632, 2
      %v829 = vsel %vm796, %v827, %v828
      %v830 = vrot.slane %v633, 2
      %v831 = vsel %vm796, %v828, %v830
      %v832 = vrot.slane %v634, 2
      %v833 = vrot.slane %v635, 2
      %v834 = vsel %vm796, %v832, %v833
      %v835 = vrot.slane %v636, 2
      %v836 = vsel %vm796, %v833, %v835
      %v837 = vrot.slane %v637, 2
      %v838 = vrot.slane %v638, 2
      %v839 = vsel %vm796, %v837, %v838
      %v840 = vrot.slane %v639, 2
      %v841 = vsel %vm796, %v838, %v840
      %v842 = vrot.slane %v640, 2
      %v843 = vrot.slane %v641, 2
      %v844 = vsel %vm796, %v842, %v843
      %v845 = vrot.slane %v642, 2
      %v846 = vsel %vm796, %v843, %v845
      %v847 = vrot.slane %v643, 2
      %v848 = vrot.slane %v644, 2
      %v849 = vsel %vm796, %v847, %v848
      %v850 = vrot.slane %v645, 2
      %v851 = vsel %vm796, %v848, %v850
      %v852 = vrot.slane %v646, 2
      %v853 = vrot.slane %v647, 2
      %v854 = vsel %vm796, %v852, %v853
      %v855 = vrot.slane %v648, 2
      %v856 = vsel %vm796, %v853, %v855
      %v857 = vrot.slane %v649, 2
      %v858 = vrot.slane %v650, 2
      %v859 = vsel %vm796, %v857, %v858
      %v860 = vrot.slane %v651, 2
      %v861 = vsel %vm796, %v858, %v860
      %v862 = vrot.slane %v652, 2
      %v863 = vrot.slane %v653, 2
      %v864 = vsel %vm796, %v862, %v863
      %v865 = vrot.slane %v654, 2
      %v866 = vsel %vm796, %v863, %v865
      %v867 = vrot.slane %v655, 2
      %v868 = vrot.slane %v656, 2
      %v869 = vsel %vm796, %v867, %v868
      %v870 = vrot.slane %v657, 2
      %v871 = vsel %vm796, %v868, %v870
      %v872 = vrot.slane %v658, 2
      %v873 = vrot.slane %v659, 2
      %v874 = vsel %vm796, %v872, %v873
      %v875 = vrot.slane %v660, 2
      %v876 = vsel %vm796, %v873, %v875
      %v880 = vrot.slane %v661, 1
      %v881 = vrot.slane %v662, 1
      %v882 = vsel %vm715, %v880, %v881
      %v883 = vrot.slane %v663, 1
      %v884 = vsel %vm715, %v881, %v883
      %v885 = vrot.slane %v661, 2
      %v886 = vrot.slane %v662, 2
      %v887 = vsel %vm796, %v885, %v886
      %v888 = vrot.slane %v663, 2
      %v889 = vsel %vm796, %v886, %v888
      %v893 = vrot.slane %v664, 1
      %v894 = vrot.slane %v665, 1
      %v895 = vsel %vm715, %v893, %v894
      %v896 = vrot.slane %v666, 1
      %v897 = vsel %vm715, %v894, %v896
      %v898 = vrot.slane %v664, 2
      %v899 = vrot.slane %v665, 2
      %v900 = vsel %vm796, %v898, %v899
      %v901 = vrot.slane %v666, 2
      %v902 = vsel %vm796, %v899, %v901
      %903 = vrot.lane.b32.xlu0 %v718, 4
      %v904 = vpop.permute.xlu0 %903
      %905 = vrot.lane.b32.xlu0 %v720, 4
      %v906 = vpop.permute.xlu0 %905
      %907 = vrot.lane.b32.xlu0 %v723, 4
      %v908 = vpop.permute.xlu0 %907
      %909 = vrot.lane.b32.xlu0 %v725, 4
      %v910 = vpop.permute.xlu0 %909
      %911 = vrot.lane.b32.xlu0 %v728, 4
      %v912 = vpop.permute.xlu0 %911
      %913 = vrot.lane.b32.xlu0 %v730, 4
      %v914 = vpop.permute.xlu0 %913
      %915 = vrot.lane.b32.xlu0 %v733, 4
      %v916 = vpop.permute.xlu0 %915
      %917 = vrot.lane.b32.xlu0 %v735, 4
      %v918 = vpop.permute.xlu0 %917
      %919 = vrot.lane.b32.xlu0 %v738, 4
      %v920 = vpop.permute.xlu0 %919
      %921 = vrot.lane.b32.xlu0 %v740, 4
      %v922 = vpop.permute.xlu0 %921
      %923 = vrot.lane.b32.xlu0 %v743, 4
      %v924 = vpop.permute.xlu0 %923
      %925 = vrot.lane.b32.xlu0 %v745, 4
      %v926 = vpop.permute.xlu0 %925
      %927 = vrot.lane.b32.xlu0 %v748, 4
      %v928 = vpop.permute.xlu0 %927
      %929 = vrot.lane.b32.xlu0 %v750, 4
      %v930 = vpop.permute.xlu0 %929
      %931 = vrot.lane.b32.xlu0 %v753, 4
      %v932 = vpop.permute.xlu0 %931
      %933 = vrot.lane.b32.xlu0 %v755, 4
      %v934 = vpop.permute.xlu0 %933
      %935 = vrot.lane.b32.xlu0 %v758, 4
      %v936 = vpop.permute.xlu0 %935
      %937 = vrot.lane.b32.xlu0 %v760, 4
      %v938 = vpop.permute.xlu0 %937
      %939 = vrot.lane.b32.xlu0 %v763, 4
      %v940 = vpop.permute.xlu0 %939
      %941 = vrot.lane.b32.xlu0 %v765, 4
      %v942 = vpop.permute.xlu0 %941
      %943 = vrot.lane.b32.xlu0 %v768, 4
      %v944 = vpop.permute.xlu0 %943
      %945 = vrot.lane.b32.xlu0 %v770, 4
      %v946 = vpop.permute.xlu0 %945
      %947 = vrot.lane.b32.xlu0 %v773, 4
      %v948 = vpop.permute.xlu0 %947
      %949 = vrot.lane.b32.xlu0 %v775, 4
      %v950 = vpop.permute.xlu0 %949
      %951 = vrot.lane.b32.xlu0 %v778, 4
      %v952 = vpop.permute.xlu0 %951
      %953 = vrot.lane.b32.xlu0 %v780, 4
      %v954 = vpop.permute.xlu0 %953
      %955 = vrot.lane.b32.xlu0 %v783, 4
      %v956 = vpop.permute.xlu0 %955
      %957 = vrot.lane.b32.xlu0 %v785, 4
      %v958 = vpop.permute.xlu0 %957
      %959 = vrot.lane.b32.xlu0 %v788, 4
      %v960 = vpop.permute.xlu0 %959
      %961 = vrot.lane.b32.xlu0 %v790, 4
      %v962 = vpop.permute.xlu0 %961
      %963 = vrot.lane.b32.xlu0 %v793, 4
      %v964 = vpop.permute.xlu0 %963
      %965 = vrot.lane.b32.xlu0 %v795, 4
      %v966 = vpop.permute.xlu0 %965
      %999 = vrot.lane.b32.xlu0 %v799, 8
      %v1000 = vpop.permute.xlu0 %999
      %1001 = vrot.lane.b32.xlu0 %v801, 8
      %v1002 = vpop.permute.xlu0 %1001
      %1003 = vrot.lane.b32.xlu0 %v804, 8
      %v1004 = vpop.permute.xlu0 %1003
      %1005 = vrot.lane.b32.xlu0 %v806, 8
      %v1006 = vpop.permute.xlu0 %1005
      %1007 = vrot.lane.b32.xlu0 %v809, 8
      %v1008 = vpop.permute.xlu0 %1007
      %1009 = vrot.lane.b32.xlu0 %v811, 8
      %v1010 = vpop.permute.xlu0 %1009
      %1011 = vrot.lane.b32.xlu0 %v814, 8
      %v1012 = vpop.permute.xlu0 %1011
      %1013 = vrot.lane.b32.xlu0 %v816, 8
      %v1014 = vpop.permute.xlu0 %1013
      %1015 = vrot.lane.b32.xlu0 %v819, 8
      %v1016 = vpop.permute.xlu0 %1015
      %1017 = vrot.lane.b32.xlu0 %v821, 8
      %v1018 = vpop.permute.xlu0 %1017
      %1019 = vrot.lane.b32.xlu0 %v824, 8
      %v1020 = vpop.permute.xlu0 %1019
      %1021 = vrot.lane.b32.xlu0 %v826, 8
      %v1022 = vpop.permute.xlu0 %1021
      %1023 = vrot.lane.b32.xlu0 %v829, 8
      %v1024 = vpop.permute.xlu0 %1023
      %1025 = vrot.lane.b32.xlu0 %v831, 8
      %v1026 = vpop.permute.xlu0 %1025
      %1027 = vrot.lane.b32.xlu0 %v834, 8
      %v1028 = vpop.permute.xlu0 %1027
      %1029 = vrot.lane.b32.xlu0 %v836, 8
      %v1030 = vpop.permute.xlu0 %1029
      %1031 = vrot.lane.b32.xlu0 %v839, 8
      %v1032 = vpop.permute.xlu0 %1031
      %1033 = vrot.lane.b32.xlu0 %v841, 8
      %v1034 = vpop.permute.xlu0 %1033
      %1035 = vrot.lane.b32.xlu0 %v844, 8
      %v1036 = vpop.permute.xlu0 %1035
      %1037 = vrot.lane.b32.xlu0 %v846, 8
      %v1038 = vpop.permute.xlu0 %1037
      %1039 = vrot.lane.b32.xlu0 %v849, 8
      %v1040 = vpop.permute.xlu0 %1039
      %1041 = vrot.lane.b32.xlu0 %v851, 8
      %v1042 = vpop.permute.xlu0 %1041
      %1043 = vrot.lane.b32.xlu0 %v854, 8
      %v1044 = vpop.permute.xlu0 %1043
      %1045 = vrot.lane.b32.xlu0 %v856, 8
      %v1046 = vpop.permute.xlu0 %1045
      %1047 = vrot.lane.b32.xlu0 %v859, 8
      %v1048 = vpop.permute.xlu0 %1047
      %1049 = vrot.lane.b32.xlu0 %v861, 8
      %v1050 = vpop.permute.xlu0 %1049
      %1051 = vrot.lane.b32.xlu0 %v864, 8
      %v1052 = vpop.permute.xlu0 %1051
      %1053 = vrot.lane.b32.xlu0 %v866, 8
      %v1054 = vpop.permute.xlu0 %1053
      %1055 = vrot.lane.b32.xlu0 %v869, 8
      %v1056 = vpop.permute.xlu0 %1055
      %1057 = vrot.lane.b32.xlu0 %v871, 8
      %v1058 = vpop.permute.xlu0 %1057
      %1059 = vrot.lane.b32.xlu0 %v874, 8
      %v1060 = vpop.permute.xlu0 %1059
      %1061 = vrot.lane.b32.xlu0 %v876, 8
      %v1062 = vpop.permute.xlu0 %1061
      %1095 = vrot.lane.b32.xlu0 %v616, 12
      %v1096 = vpop.permute.xlu0 %1095
      %1097 = vrot.lane.b32.xlu0 %v617, 12
      %v1098 = vpop.permute.xlu0 %1097
      %1099 = vrot.lane.b32.xlu0 %v619, 12
      %v1100 = vpop.permute.xlu0 %1099
      %1101 = vrot.lane.b32.xlu0 %v620, 12
      %v1102 = vpop.permute.xlu0 %1101
      %1103 = vrot.lane.b32.xlu0 %v622, 12
      %v1104 = vpop.permute.xlu0 %1103
      %1105 = vrot.lane.b32.xlu0 %v623, 12
      %v1106 = vpop.permute.xlu0 %1105
      %1107 = vrot.lane.b32.xlu0 %v625, 12
      %v1108 = vpop.permute.xlu0 %1107
      %1109 = vrot.lane.b32.xlu0 %v626, 12
      %v1110 = vpop.permute.xlu0 %1109
      %1111 = vrot.lane.b32.xlu0 %v628, 12
      %v1112 = vpop.permute.xlu0 %1111
      %1113 = vrot.lane.b32.xlu0 %v629, 12
      %v1114 = vpop.permute.xlu0 %1113
      %1115 = vrot.lane.b32.xlu0 %v631, 12
      %v1116 = vpop.permute.xlu0 %1115
      %1117 = vrot.lane.b32.xlu0 %v632, 12
      %v1118 = vpop.permute.xlu0 %1117
      %1119 = vrot.lane.b32.xlu0 %v634, 12
      %v1120 = vpop.permute.xlu0 %1119
      %1121 = vrot.lane.b32.xlu0 %v635, 12
      %v1122 = vpop.permute.xlu0 %1121
      %1123 = vrot.lane.b32.xlu0 %v637, 12
      %v1124 = vpop.permute.xlu0 %1123
      %1125 = vrot.lane.b32.xlu0 %v638, 12
      %v1126 = vpop.permute.xlu0 %1125
      %1127 = vrot.lane.b32.xlu0 %v640, 12
      %v1128 = vpop.permute.xlu0 %1127
      %1129 = vrot.lane.b32.xlu0 %v641, 12
      %v1130 = vpop.permute.xlu0 %1129
      %1131 = vrot.lane.b32.xlu0 %v643, 12
      %v1132 = vpop.permute.xlu0 %1131
      %1133 = vrot.lane.b32.xlu0 %v644, 12
      %v1134 = vpop.permute.xlu0 %1133
      %1135 = vrot.lane.b32.xlu0 %v646, 12
      %v1136 = vpop.permute.xlu0 %1135
      %1137 = vrot.lane.b32.xlu0 %v647, 12
      %v1138 = vpop.permute.xlu0 %1137
      %1139 = vrot.lane.b32.xlu0 %v649, 12
      %v1140 = vpop.permute.xlu0 %1139
      %1141 = vrot.lane.b32.xlu0 %v650, 12
      %v1142 = vpop.permute.xlu0 %1141
      %1143 = vrot.lane.b32.xlu0 %v652, 12
      %v1144 = vpop.permute.xlu0 %1143
      %1145 = vrot.lane.b32.xlu0 %v653, 12
      %v1146 = vpop.permute.xlu0 %1145
      %1147 = vrot.lane.b32.xlu0 %v655, 12
      %v1148 = vpop.permute.xlu0 %1147
      %1149 = vrot.lane.b32.xlu0 %v656, 12
      %v1150 = vpop.permute.xlu0 %1149
      %1151 = vrot.lane.b32.xlu0 %v658, 12
      %v1152 = vpop.permute.xlu0 %1151
      %1153 = vrot.lane.b32.xlu0 %v659, 12
      %v1154 = vpop.permute.xlu0 %1153
      %1155 = vrot.lane.b32.xlu0 %v661, 12
      %v1156 = vpop.permute.xlu0 %1155
      %1157 = vrot.lane.b32.xlu0 %v662, 12
      %v1158 = vpop.permute.xlu0 %1157
      %1191 = vrot.lane.b32.xlu0 %v723, 16
      %v1192 = vpop.permute.xlu0 %1191
      %1193 = vrot.lane.b32.xlu0 %v725, 16
      %v1194 = vpop.permute.xlu0 %1193
      %1195 = vrot.lane.b32.xlu0 %v728, 16
      %v1196 = vpop.permute.xlu0 %1195
      %1197 = vrot.lane.b32.xlu0 %v730, 16
      %v1198 = vpop.permute.xlu0 %1197
      %1199 = vrot.lane.b32.xlu0 %v733, 16
      %v1200 = vpop.permute.xlu0 %1199
      %1201 = vrot.lane.b32.xlu0 %v735, 16
      %v1202 = vpop.permute.xlu0 %1201
      %1203 = vrot.lane.b32.xlu0 %v738, 16
      %v1204 = vpop.permute.xlu0 %1203
      %1205 = vrot.lane.b32.xlu0 %v740, 16
      %v1206 = vpop.permute.xlu0 %1205
      %1207 = vrot.lane.b32.xlu0 %v743, 16
      %v1208 = vpop.permute.xlu0 %1207
      %1209 = vrot.lane.b32.xlu0 %v745, 16
      %v1210 = vpop.permute.xlu0 %1209
      %1211 = vrot.lane.b32.xlu0 %v748, 16
      %v1212 = vpop.permute.xlu0 %1211
      %1213 = vrot.lane.b32.xlu0 %v750, 16
      %v1214 = vpop.permute.xlu0 %1213
      %1215 = vrot.lane.b32.xlu0 %v753, 16
      %v1216 = vpop.permute.xlu0 %1215
      %1217 = vrot.lane.b32.xlu0 %v755, 16
      %v1218 = vpop.permute.xlu0 %1217
      %1219 = vrot.lane.b32.xlu0 %v758, 16
      %v1220 = vpop.permute.xlu0 %1219
      %1221 = vrot.lane.b32.xlu0 %v760, 16
      %v1222 = vpop.permute.xlu0 %1221
      %1223 = vrot.lane.b32.xlu0 %v763, 16
      %v1224 = vpop.permute.xlu0 %1223
      %1225 = vrot.lane.b32.xlu0 %v765, 16
      %v1226 = vpop.permute.xlu0 %1225
      %1227 = vrot.lane.b32.xlu0 %v768, 16
      %v1228 = vpop.permute.xlu0 %1227
      %1229 = vrot.lane.b32.xlu0 %v770, 16
      %v1230 = vpop.permute.xlu0 %1229
      %1231 = vrot.lane.b32.xlu0 %v773, 16
      %v1232 = vpop.permute.xlu0 %1231
      %1233 = vrot.lane.b32.xlu0 %v775, 16
      %v1234 = vpop.permute.xlu0 %1233
      %1235 = vrot.lane.b32.xlu0 %v778, 16
      %v1236 = vpop.permute.xlu0 %1235
      %1237 = vrot.lane.b32.xlu0 %v780, 16
      %v1238 = vpop.permute.xlu0 %1237
      %1239 = vrot.lane.b32.xlu0 %v783, 16
      %v1240 = vpop.permute.xlu0 %1239
      %1241 = vrot.lane.b32.xlu0 %v785, 16
      %v1242 = vpop.permute.xlu0 %1241
      %1243 = vrot.lane.b32.xlu0 %v788, 16
      %v1244 = vpop.permute.xlu0 %1243
      %1245 = vrot.lane.b32.xlu0 %v790, 16
      %v1246 = vpop.permute.xlu0 %1245
      %1247 = vrot.lane.b32.xlu0 %v793, 16
      %v1248 = vpop.permute.xlu0 %1247
      %1249 = vrot.lane.b32.xlu0 %v795, 16
      %v1250 = vpop.permute.xlu0 %1249
      %1251 = vrot.lane.b32.xlu0 %v882, 16
      %v1252 = vpop.permute.xlu0 %1251
      %1253 = vrot.lane.b32.xlu0 %v884, 16
      %v1254 = vpop.permute.xlu0 %1253
      %1287 = vrot.lane.b32.xlu0 %v804, 20
      %v1288 = vpop.permute.xlu0 %1287
      %1289 = vrot.lane.b32.xlu0 %v806, 20
      %v1290 = vpop.permute.xlu0 %1289
      %1291 = vrot.lane.b32.xlu0 %v809, 20
      %v1292 = vpop.permute.xlu0 %1291
      %1293 = vrot.lane.b32.xlu0 %v811, 20
      %v1294 = vpop.permute.xlu0 %1293
      %1295 = vrot.lane.b32.xlu0 %v814, 20
      %v1296 = vpop.permute.xlu0 %1295
      %1297 = vrot.lane.b32.xlu0 %v816, 20
      %v1298 = vpop.permute.xlu0 %1297
      %1299 = vrot.lane.b32.xlu0 %v819, 20
      %v1300 = vpop.permute.xlu0 %1299
      %1301 = vrot.lane.b32.xlu0 %v821, 20
      %v1302 = vpop.permute.xlu0 %1301
      %1303 = vrot.lane.b32.xlu0 %v824, 20
      %v1304 = vpop.permute.xlu0 %1303
      %1305 = vrot.lane.b32.xlu0 %v826, 20
      %v1306 = vpop.permute.xlu0 %1305
      %1307 = vrot.lane.b32.xlu0 %v829, 20
      %v1308 = vpop.permute.xlu0 %1307
      %1309 = vrot.lane.b32.xlu0 %v831, 20
      %v1310 = vpop.permute.xlu0 %1309
      %1311 = vrot.lane.b32.xlu0 %v834, 20
      %v1312 = vpop.permute.xlu0 %1311
      %1313 = vrot.lane.b32.xlu0 %v836, 20
      %v1314 = vpop.permute.xlu0 %1313
      %1315 = vrot.lane.b32.xlu0 %v839, 20
      %v1316 = vpop.permute.xlu0 %1315
      %1317 = vrot.lane.b32.xlu0 %v841, 20
      %v1318 = vpop.permute.xlu0 %1317
      %1319 = vrot.lane.b32.xlu0 %v844, 20
      %v1320 = vpop.permute.xlu0 %1319
      %1321 = vrot.lane.b32.xlu0 %v846, 20
      %v1322 = vpop.permute.xlu0 %1321
      %1323 = vrot.lane.b32.xlu0 %v849, 20
      %v1324 = vpop.permute.xlu0 %1323
      %1325 = vrot.lane.b32.xlu0 %v851, 20
      %v1326 = vpop.permute.xlu0 %1325
      %1327 = vrot.lane.b32.xlu0 %v854, 20
      %v1328 = vpop.permute.xlu0 %1327
      %1329 = vrot.lane.b32.xlu0 %v856, 20
      %v1330 = vpop.permute.xlu0 %1329
      %1331 = vrot.lane.b32.xlu0 %v859, 20
      %v1332 = vpop.permute.xlu0 %1331
      %1333 = vrot.lane.b32.xlu0 %v861, 20
      %v1334 = vpop.permute.xlu0 %1333
      %1335 = vrot.lane.b32.xlu0 %v864, 20
      %v1336 = vpop.permute.xlu0 %1335
      %1337 = vrot.lane.b32.xlu0 %v866, 20
      %v1338 = vpop.permute.xlu0 %1337
      %1339 = vrot.lane.b32.xlu0 %v869, 20
      %v1340 = vpop.permute.xlu0 %1339
      %1341 = vrot.lane.b32.xlu0 %v871, 20
      %v1342 = vpop.permute.xlu0 %1341
      %1343 = vrot.lane.b32.xlu0 %v874, 20
      %v1344 = vpop.permute.xlu0 %1343
      %1345 = vrot.lane.b32.xlu0 %v876, 20
      %v1346 = vpop.permute.xlu0 %1345
      %1347 = vrot.lane.b32.xlu0 %v887, 20
      %v1348 = vpop.permute.xlu0 %1347
      %1349 = vrot.lane.b32.xlu0 %v889, 20
      %v1350 = vpop.permute.xlu0 %1349
      %1383 = vrot.lane.b32.xlu0 %v619, 24
      %v1384 = vpop.permute.xlu0 %1383
      %1385 = vrot.lane.b32.xlu0 %v620, 24
      %v1386 = vpop.permute.xlu0 %1385
      %1387 = vrot.lane.b32.xlu0 %v622, 24
      %v1388 = vpop.permute.xlu0 %1387
      %1389 = vrot.lane.b32.xlu0 %v623, 24
      %v1390 = vpop.permute.xlu0 %1389
      %1391 = vrot.lane.b32.xlu0 %v625, 24
      %v1392 = vpop.permute.xlu0 %1391
      %1393 = vrot.lane.b32.xlu0 %v626, 24
      %v1394 = vpop.permute.xlu0 %1393
      %1395 = vrot.lane.b32.xlu0 %v628, 24
      %v1396 = vpop.permute.xlu0 %1395
      %1397 = vrot.lane.b32.xlu0 %v629, 24
      %v1398 = vpop.permute.xlu0 %1397
      %1399 = vrot.lane.b32.xlu0 %v631, 24
      %v1400 = vpop.permute.xlu0 %1399
      %1401 = vrot.lane.b32.xlu0 %v632, 24
      %v1402 = vpop.permute.xlu0 %1401
      %1403 = vrot.lane.b32.xlu0 %v634, 24
      %v1404 = vpop.permute.xlu0 %1403
      %1405 = vrot.lane.b32.xlu0 %v635, 24
      %v1406 = vpop.permute.xlu0 %1405
      %1407 = vrot.lane.b32.xlu0 %v637, 24
      %v1408 = vpop.permute.xlu0 %1407
      %1409 = vrot.lane.b32.xlu0 %v638, 24
      %v1410 = vpop.permute.xlu0 %1409
      %1411 = vrot.lane.b32.xlu0 %v640, 24
      %v1412 = vpop.permute.xlu0 %1411
      %1413 = vrot.lane.b32.xlu0 %v641, 24
      %v1414 = vpop.permute.xlu0 %1413
      %1415 = vrot.lane.b32.xlu0 %v643, 24
      %v1416 = vpop.permute.xlu0 %1415
      %1417 = vrot.lane.b32.xlu0 %v644, 24
      %v1418 = vpop.permute.xlu0 %1417
      %1419 = vrot.lane.b32.xlu0 %v646, 24
      %v1420 = vpop.permute.xlu0 %1419
      %1421 = vrot.lane.b32.xlu0 %v647, 24
      %v1422 = vpop.permute.xlu0 %1421
      %1423 = vrot.lane.b32.xlu0 %v649, 24
      %v1424 = vpop.permute.xlu0 %1423
      %1425 = vrot.lane.b32.xlu0 %v650, 24
      %v1426 = vpop.permute.xlu0 %1425
      %1427 = vrot.lane.b32.xlu0 %v652, 24
      %v1428 = vpop.permute.xlu0 %1427
      %1429 = vrot.lane.b32.xlu0 %v653, 24
      %v1430 = vpop.permute.xlu0 %1429
      %1431 = vrot.lane.b32.xlu0 %v655, 24
      %v1432 = vpop.permute.xlu0 %1431
      %1433 = vrot.lane.b32.xlu0 %v656, 24
      %v1434 = vpop.permute.xlu0 %1433
      %1435 = vrot.lane.b32.xlu0 %v658, 24
      %v1436 = vpop.permute.xlu0 %1435
      %1437 = vrot.lane.b32.xlu0 %v659, 24
      %v1438 = vpop.permute.xlu0 %1437
      %1439 = vrot.lane.b32.xlu0 %v661, 24
      %v1440 = vpop.permute.xlu0 %1439
      %1441 = vrot.lane.b32.xlu0 %v662, 24
      %v1442 = vpop.permute.xlu0 %1441
      %1443 = vrot.lane.b32.xlu0 %v664, 24
      %v1444 = vpop.permute.xlu0 %1443
      %1445 = vrot.lane.b32.xlu0 %v665, 24
      %v1446 = vpop.permute.xlu0 %1445
      %1479 = vrot.lane.b32.xlu0 %v728, 28
      %v1480 = vpop.permute.xlu0 %1479
      %1481 = vrot.lane.b32.xlu0 %v730, 28
      %v1482 = vpop.permute.xlu0 %1481
      %1483 = vrot.lane.b32.xlu0 %v733, 28
      %v1484 = vpop.permute.xlu0 %1483
      %1485 = vrot.lane.b32.xlu0 %v735, 28
      %v1486 = vpop.permute.xlu0 %1485
      %1487 = vrot.lane.b32.xlu0 %v738, 28
      %v1488 = vpop.permute.xlu0 %1487
      %1489 = vrot.lane.b32.xlu0 %v740, 28
      %v1490 = vpop.permute.xlu0 %1489
      %1491 = vrot.lane.b32.xlu0 %v743, 28
      %v1492 = vpop.permute.xlu0 %1491
      %1493 = vrot.lane.b32.xlu0 %v745, 28
      %v1494 = vpop.permute.xlu0 %1493
      %1495 = vrot.lane.b32.xlu0 %v748, 28
      %v1496 = vpop.permute.xlu0 %1495
      %1497 = vrot.lane.b32.xlu0 %v750, 28
      %v1498 = vpop.permute.xlu0 %1497
      %1499 = vrot.lane.b32.xlu0 %v753, 28
      %v1500 = vpop.permute.xlu0 %1499
      %1501 = vrot.lane.b32.xlu0 %v755, 28
      %v1502 = vpop.permute.xlu0 %1501
      %1503 = vrot.lane.b32.xlu0 %v758, 28
      %v1504 = vpop.permute.xlu0 %1503
      %1505 = vrot.lane.b32.xlu0 %v760, 28
      %v1506 = vpop.permute.xlu0 %1505
      %1507 = vrot.lane.b32.xlu0 %v763, 28
      %v1508 = vpop.permute.xlu0 %1507
      %1509 = vrot.lane.b32.xlu0 %v765, 28
      %v1510 = vpop.permute.xlu0 %1509
      %1511 = vrot.lane.b32.xlu0 %v768, 28
      %v1512 = vpop.permute.xlu0 %1511
      %1513 = vrot.lane.b32.xlu0 %v770, 28
      %v1514 = vpop.permute.xlu0 %1513
      %1515 = vrot.lane.b32.xlu0 %v773, 28
      %v1516 = vpop.permute.xlu0 %1515
      %1517 = vrot.lane.b32.xlu0 %v775, 28
      %v1518 = vpop.permute.xlu0 %1517
      %1519 = vrot.lane.b32.xlu0 %v778, 28
      %v1520 = vpop.permute.xlu0 %1519
      %1521 = vrot.lane.b32.xlu0 %v780, 28
      %v1522 = vpop.permute.xlu0 %1521
      %1523 = vrot.lane.b32.xlu0 %v783, 28
      %v1524 = vpop.permute.xlu0 %1523
      %1525 = vrot.lane.b32.xlu0 %v785, 28
      %v1526 = vpop.permute.xlu0 %1525
      %1527 = vrot.lane.b32.xlu0 %v788, 28
      %v1528 = vpop.permute.xlu0 %1527
      %1529 = vrot.lane.b32.xlu0 %v790, 28
      %v1530 = vpop.permute.xlu0 %1529
      %1531 = vrot.lane.b32.xlu0 %v793, 28
      %v1532 = vpop.permute.xlu0 %1531
      %1533 = vrot.lane.b32.xlu0 %v795, 28
      %v1534 = vpop.permute.xlu0 %1533
      %1535 = vrot.lane.b32.xlu0 %v882, 28
      %v1536 = vpop.permute.xlu0 %1535
      %1537 = vrot.lane.b32.xlu0 %v884, 28
      %v1538 = vpop.permute.xlu0 %1537
      %1539 = vrot.lane.b32.xlu0 %v895, 28
      %v1540 = vpop.permute.xlu0 %1539
      %1541 = vrot.lane.b32.xlu0 %v897, 28
      %v1542 = vpop.permute.xlu0 %1541
      %1575 = vrot.lane.b32.xlu0 %v809, 32
      %v1576 = vpop.permute.xlu0 %1575
      %1577 = vrot.lane.b32.xlu0 %v811, 32
      %v1578 = vpop.permute.xlu0 %1577
      %1579 = vrot.lane.b32.xlu0 %v814, 32
      %v1580 = vpop.permute.xlu0 %1579
      %1581 = vrot.lane.b32.xlu0 %v816, 32
      %v1582 = vpop.permute.xlu0 %1581
      %1583 = vrot.lane.b32.xlu0 %v819, 32
      %v1584 = vpop.permute.xlu0 %1583
      %1585 = vrot.lane.b32.xlu0 %v821, 32
      %v1586 = vpop.permute.xlu0 %1585
      %1587 = vrot.lane.b32.xlu0 %v824, 32
      %v1588 = vpop.permute.xlu0 %1587
      %1589 = vrot.lane.b32.xlu0 %v826, 32
      %v1590 = vpop.permute.xlu0 %1589
      %1591 = vrot.lane.b32.xlu0 %v829, 32
      %v1592 = vpop.permute.xlu0 %1591
      %1593 = vrot.lane.b32.xlu0 %v831, 32
      %v1594 = vpop.permute.xlu0 %1593
      %1595 = vrot.lane.b32.xlu0 %v834, 32
      %v1596 = vpop.permute.xlu0 %1595
      %1597 = vrot.lane.b32.xlu0 %v836, 32
      %v1598 = vpop.permute.xlu0 %1597
      %1599 = vrot.lane.b32.xlu0 %v839, 32
      %v1600 = vpop.permute.xlu0 %1599
      %1601 = vrot.lane.b32.xlu0 %v841, 32
      %v1602 = vpop.permute.xlu0 %1601
      %1603 = vrot.lane.b32.xlu0 %v844, 32
      %v1604 = vpop.permute.xlu0 %1603
      %1605 = vrot.lane.b32.xlu0 %v846, 32
      %v1606 = vpop.permute.xlu0 %1605
      %1607 = vrot.lane.b32.xlu0 %v849, 32
      %v1608 = vpop.permute.xlu0 %1607
      %1609 = vrot.lane.b32.xlu0 %v851, 32
      %v1610 = vpop.permute.xlu0 %1609
      %1611 = vrot.lane.b32.xlu0 %v854, 32
      %v1612 = vpop.permute.xlu0 %1611
      %1613 = vrot.lane.b32.xlu0 %v856, 32
      %v1614 = vpop.permute.xlu0 %1613
      %1615 = vrot.lane.b32.xlu0 %v859, 32
      %v1616 = vpop.permute.xlu0 %1615
      %1617 = vrot.lane.b32.xlu0 %v861, 32
      %v1618 = vpop.permute.xlu0 %1617
      %1619 = vrot.lane.b32.xlu0 %v864, 32
      %v1620 = vpop.permute.xlu0 %1619
      %1621 = vrot.lane.b32.xlu0 %v866, 32
      %v1622 = vpop.permute.xlu0 %1621
      %1623 = vrot.lane.b32.xlu0 %v869, 32
      %v1624 = vpop.permute.xlu0 %1623
      %1625 = vrot.lane.b32.xlu0 %v871, 32
      %v1626 = vpop.permute.xlu0 %1625
      %1627 = vrot.lane.b32.xlu0 %v874, 32
      %v1628 = vpop.permute.xlu0 %1627
      %1629 = vrot.lane.b32.xlu0 %v876, 32
      %v1630 = vpop.permute.xlu0 %1629
      %1631 = vrot.lane.b32.xlu0 %v887, 32
      %v1632 = vpop.permute.xlu0 %1631
      %1633 = vrot.lane.b32.xlu0 %v889, 32
      %v1634 = vpop.permute.xlu0 %1633
      %1635 = vrot.lane.b32.xlu0 %v900, 32
      %v1636 = vpop.permute.xlu0 %1635
      %1637 = vrot.lane.b32.xlu0 %v902, 32
      %v1638 = vpop.permute.xlu0 %1637
      %v1671 = vsel %vm380, %v613, %v904
      %v1672 = vsel %vm380, %v614, %v906
      %v1673 = vsel %vm380, %v616, %v908
      %v1674 = vsel %vm380, %v617, %v910
      %v1675 = vsel %vm380, %v619, %v912
      %v1676 = vsel %vm380, %v620, %v914
      %v1677 = vsel %vm380, %v622, %v916
      %v1678 = vsel %vm380, %v623, %v918
      %v1679 = vsel %vm380, %v625, %v920
      %v1680 = vsel %vm380, %v626, %v922
      %v1681 = vsel %vm380, %v628, %v924
      %v1682 = vsel %vm380, %v629, %v926
      %v1683 = vsel %vm380, %v631, %v928
      %v1684 = vsel %vm380, %v632, %v930
      %v1685 = vsel %vm380, %v634, %v932
      %v1686 = vsel %vm380, %v635, %v934
      %v1687 = vsel %vm380, %v637, %v936
      %v1688 = vsel %vm380, %v638, %v938
      %v1689 = vsel %vm380, %v640, %v940
      %v1690 = vsel %vm380, %v641, %v942
      %v1691 = vsel %vm380, %v643, %v944
      %v1692 = vsel %vm380, %v644, %v946
      %v1693 = vsel %vm380, %v646, %v948
      %v1694 = vsel %vm380, %v647, %v950
      %v1695 = vsel %vm380, %v649, %v952
      %v1696 = vsel %vm380, %v650, %v954
      %v1697 = vsel %vm380, %v652, %v956
      %v1698 = vsel %vm380, %v653, %v958
      %v1699 = vsel %vm380, %v655, %v960
      %v1700 = vsel %vm380, %v656, %v962
      %v1701 = vsel %vm380, %v658, %v964
      %v1702 = vsel %vm380, %v659, %v966
      %v1703 = vsel %vm436, %v1671, %v1000
      %v1704 = vsel %vm436, %v1672, %v1002
      %v1705 = vsel %vm436, %v1673, %v1004
      %v1706 = vsel %vm436, %v1674, %v1006
      %v1707 = vsel %vm436, %v1675, %v1008
      %v1708 = vsel %vm436, %v1676, %v1010
      %v1709 = vsel %vm436, %v1677, %v1012
      %v1710 = vsel %vm436, %v1678, %v1014
      %v1711 = vsel %vm436, %v1679, %v1016
      %v1712 = vsel %vm436, %v1680, %v1018
      %v1713 = vsel %vm436, %v1681, %v1020
      %v1714 = vsel %vm436, %v1682, %v1022
      %v1715 = vsel %vm436, %v1683, %v1024
      %v1716 = vsel %vm436, %v1684, %v1026
      %v1717 = vsel %vm436, %v1685, %v1028
      %v1718 = vsel %vm436, %v1686, %v1030
      %v1719 = vsel %vm436, %v1687, %v1032
      %v1720 = vsel %vm436, %v1688, %v1034
      %v1721 = vsel %vm436, %v1689, %v1036
      %v1722 = vsel %vm436, %v1690, %v1038
      %v1723 = vsel %vm436, %v1691, %v1040
      %v1724 = vsel %vm436, %v1692, %v1042
      %v1725 = vsel %vm436, %v1693, %v1044
      %v1726 = vsel %vm436, %v1694, %v1046
      %v1727 = vsel %vm436, %v1695, %v1048
      %v1728 = vsel %vm436, %v1696, %v1050
      %v1729 = vsel %vm436, %v1697, %v1052
      %v1730 = vsel %vm436, %v1698, %v1054
      %v1731 = vsel %vm436, %v1699, %v1056
      %v1732 = vsel %vm436, %v1700, %v1058
      %v1733 = vsel %vm436, %v1701, %v1060
      %v1734 = vsel %vm436, %v1702, %v1062
      %vm1735 = vcmask 97280
      %v1736 = vsel %vm1735, %v1703, %v1096
      %v1737 = vsel %vm1735, %v1704, %v1098
      %v1738 = vsel %vm1735, %v1705, %v1100
      %v1739 = vsel %vm1735, %v1706, %v1102
      %v1740 = vsel %vm1735, %v1707, %v1104
      %v1741 = vsel %vm1735, %v1708, %v1106
      %v1742 = vsel %vm1735, %v1709, %v1108
      %v1743 = vsel %vm1735, %v1710, %v1110
      %v1744 = vsel %vm1735, %v1711, %v1112
      %v1745 = vsel %vm1735, %v1712, %v1114
      %v1746 = vsel %vm1735, %v1713, %v1116
      %v1747 = vsel %vm1735, %v1714, %v1118
      %v1748 = vsel %vm1735, %v1715, %v1120
      %v1749 = vsel %vm1735, %v1716, %v1122
      %v1750 = vsel %vm1735, %v1717, %v1124
      %v1751 = vsel %vm1735, %v1718, %v1126
      %v1752 = vsel %vm1735, %v1719, %v1128
      %v1753 = vsel %vm1735, %v1720, %v1130
      %v1754 = vsel %vm1735, %v1721, %v1132
      %v1755 = vsel %vm1735, %v1722, %v1134
      %v1756 = vsel %vm1735, %v1723, %v1136
      %v1757 = vsel %vm1735, %v1724, %v1138
      %v1758 = vsel %vm1735, %v1725, %v1140
      %v1759 = vsel %vm1735, %v1726, %v1142
      %v1760 = vsel %vm1735, %v1727, %v1144
      %v1761 = vsel %vm1735, %v1728, %v1146
      %v1762 = vsel %vm1735, %v1729, %v1148
      %v1763 = vsel %vm1735, %v1730, %v1150
      %v1764 = vsel %vm1735, %v1731, %v1152
      %v1765 = vsel %vm1735, %v1732, %v1154
      %v1766 = vsel %vm1735, %v1733, %v1156
      %v1767 = vsel %vm1735, %v1734, %v1158
      %v1768 = vsel %vm492, %v1736, %v1192
      %v1769 = vsel %vm492, %v1737, %v1194
      %v1770 = vsel %vm492, %v1738, %v1196
      %v1771 = vsel %vm492, %v1739, %v1198
      %v1772 = vsel %vm492, %v1740, %v1200
      %v1773 = vsel %vm492, %v1741, %v1202
      %v1774 = vsel %vm492, %v1742, %v1204
      %v1775 = vsel %vm492, %v1743, %v1206
      %v1776 = vsel %vm492, %v1744, %v1208
      %v1777 = vsel %vm492, %v1745, %v1210
      %v1778 = vsel %vm492, %v1746, %v1212
      %v1779 = vsel %vm492, %v1747, %v1214
      %v1780 = vsel %vm492, %v1748, %v1216
      %v1781 = vsel %vm492, %v1749, %v1218
      %v1782 = vsel %vm492, %v1750, %v1220
      %v1783 = vsel %vm492, %v1751, %v1222
      %v1784 = vsel %vm492, %v1752, %v1224
      %v1785 = vsel %vm492, %v1753, %v1226
      %v1786 = vsel %vm492, %v1754, %v1228
      %v1787 = vsel %vm492, %v1755, %v1230
      %v1788 = vsel %vm492, %v1756, %v1232
      %v1789 = vsel %vm492, %v1757, %v1234
      %v1790 = vsel %vm492, %v1758, %v1236
      %v1791 = vsel %vm492, %v1759, %v1238
      %v1792 = vsel %vm492, %v1760, %v1240
      %v1793 = vsel %vm492, %v1761, %v1242
      %v1794 = vsel %vm492, %v1762, %v1244
      %v1795 = vsel %vm492, %v1763, %v1246
      %v1796 = vsel %vm492, %v1764, %v1248
      %v1797 = vsel %vm492, %v1765, %v1250
      %v1798 = vsel %vm492, %v1766, %v1252
      %v1799 = vsel %vm492, %v1767, %v1254
      %vm1800 = vcmask 162816
      %v1801 = vsel %vm1800, %v1768, %v1288
      %v1802 = vsel %vm1800, %v1769, %v1290
      %v1803 = vsel %vm1800, %v1770, %v1292
      %v1804 = vsel %vm1800, %v1771, %v1294
      %v1805 = vsel %vm1800, %v1772, %v1296
      %v1806 = vsel %vm1800, %v1773, %v1298
      %v1807 = vsel %vm1800, %v1774, %v1300
      %v1808 = vsel %vm1800, %v1775, %v1302
      %v1809 = vsel %vm1800, %v1776, %v1304
      %v1810 = vsel %vm1800, %v1777, %v1306
      %v1811 = vsel %vm1800, %v1778, %v1308
      %v1812 = vsel %vm1800, %v1779, %v1310
      %v1813 = vsel %vm1800, %v1780, %v1312
      %v1814 = vsel %vm1800, %v1781, %v1314
      %v1815 = vsel %vm1800, %v1782, %v1316
      %v1816 = vsel %vm1800, %v1783, %v1318
      %v1817 = vsel %vm1800, %v1784, %v1320
      %v1818 = vsel %vm1800, %v1785, %v1322
      %v1819 = vsel %vm1800, %v1786, %v1324
      %v1820 = vsel %vm1800, %v1787, %v1326
      %v1821 = vsel %vm1800, %v1788, %v1328
      %v1822 = vsel %vm1800, %v1789, %v1330
      %v1823 = vsel %vm1800, %v1790, %v1332
      %v1824 = vsel %vm1800, %v1791, %v1334
      %v1825 = vsel %vm1800, %v1792, %v1336
      %v1826 = vsel %vm1800, %v1793, %v1338
      %v1827 = vsel %vm1800, %v1794, %v1340
      %v1828 = vsel %vm1800, %v1795, %v1342
      %v1829 = vsel %vm1800, %v1796, %v1344
      %v1830 = vsel %vm1800, %v1797, %v1346
      %v1831 = vsel %vm1800, %v1798, %v1348
      %v1832 = vsel %vm1800, %v1799, %v1350
      %vm1833 = vcmask 195584
      %v1834 = vsel %vm1833, %v1801, %v1384
      %v1835 = vsel %vm1833, %v1802, %v1386
      %v1836 = vsel %vm1833, %v1803, %v1388
      %v1837 = vsel %vm1833, %v1804, %v1390
      %v1838 = vsel %vm1833, %v1805, %v1392
      %v1839 = vsel %vm1833, %v1806, %v1394
      %v1840 = vsel %vm1833, %v1807, %v1396
      %v1841 = vsel %vm1833, %v1808, %v1398
      %v1842 = vsel %vm1833, %v1809, %v1400
      %v1843 = vsel %vm1833, %v1810, %v1402
      %v1844 = vsel %vm1833, %v1811, %v1404
      %v1845 = vsel %vm1833, %v1812, %v1406
      %v1846 = vsel %vm1833, %v1813, %v1408
      %v1847 = vsel %vm1833, %v1814, %v1410
      %v1848 = vsel %vm1833, %v1815, %v1412
      %v1849 = vsel %vm1833, %v1816, %v1414
      %v1850 = vsel %vm1833, %v1817, %v1416
      %v1851 = vsel %vm1833, %v1818, %v1418
      %v1852 = vsel %vm1833, %v1819, %v1420
      %v1853 = vsel %vm1833, %v1820, %v1422
      %v1854 = vsel %vm1833, %v1821, %v1424
      %v1855 = vsel %vm1833, %v1822, %v1426
      %v1856 = vsel %vm1833, %v1823, %v1428
      %v1857 = vsel %vm1833, %v1824, %v1430
      %v1858 = vsel %vm1833, %v1825, %v1432
      %v1859 = vsel %vm1833, %v1826, %v1434
      %v1860 = vsel %vm1833, %v1827, %v1436
      %v1861 = vsel %vm1833, %v1828, %v1438
      %v1862 = vsel %vm1833, %v1829, %v1440
      %v1863 = vsel %vm1833, %v1830, %v1442
      %v1864 = vsel %vm1833, %v1831, %v1444
      %v1865 = vsel %vm1833, %v1832, %v1446
      %vm1866 = vcmask 228352
      %v1867 = vsel %vm1866, %v1834, %v1480
      %v1868 = vsel %vm1866, %v1835, %v1482
      %v1869 = vsel %vm1866, %v1836, %v1484
      %v1870 = vsel %vm1866, %v1837, %v1486
      %v1871 = vsel %vm1866, %v1838, %v1488
      %v1872 = vsel %vm1866, %v1839, %v1490
      %v1873 = vsel %vm1866, %v1840, %v1492
      %v1874 = vsel %vm1866, %v1841, %v1494
      %v1875 = vsel %vm1866, %v1842, %v1496
      %v1876 = vsel %vm1866, %v1843, %v1498
      %v1877 = vsel %vm1866, %v1844, %v1500
      %v1878 = vsel %vm1866, %v1845, %v1502
      %v1879 = vsel %vm1866, %v1846, %v1504
      %v1880 = vsel %vm1866, %v1847, %v1506
      %v1881 = vsel %vm1866, %v1848, %v1508
      %v1882 = vsel %vm1866, %v1849, %v1510
      %v1883 = vsel %vm1866, %v1850, %v1512
      %v1884 = vsel %vm1866, %v1851, %v1514
      %v1885 = vsel %vm1866, %v1852, %v1516
      %v1886 = vsel %vm1866, %v1853, %v1518
      %v1887 = vsel %vm1866, %v1854, %v1520
      %v1888 = vsel %vm1866, %v1855, %v1522
      %v1889 = vsel %vm1866, %v1856, %v1524
      %v1890 = vsel %vm1866, %v1857, %v1526
      %v1891 = vsel %vm1866, %v1858, %v1528
      %v1892 = vsel %vm1866, %v1859, %v1530
      %v1893 = vsel %vm1866, %v1860, %v1532
      %v1894 = vsel %vm1866, %v1861, %v1534
      %v1895 = vsel %vm1866, %v1862, %v1536
      %v1896 = vsel %vm1866, %v1863, %v1538
      %v1897 = vsel %vm1866, %v1864, %v1540
      %v1898 = vsel %vm1866, %v1865, %v1542
      %vm1899 = vcmask 261120
      %v1900 = vsel %vm1899, %v1867, %v1576
      %v1901 = vsel %vm1899, %v1868, %v1578
      %v1902 = vsel %vm1899, %v1869, %v1580
      %v1903 = vsel %vm1899, %v1870, %v1582
      %v1904 = vsel %vm1899, %v1871, %v1584
      %v1905 = vsel %vm1899, %v1872, %v1586
      %v1906 = vsel %vm1899, %v1873, %v1588
      %v1907 = vsel %vm1899, %v1874, %v1590
      %v1908 = vsel %vm1899, %v1875, %v1592
      %v1909 = vsel %vm1899, %v1876, %v1594
      %v1910 = vsel %vm1899, %v1877, %v1596
      %v1911 = vsel %vm1899, %v1878, %v1598
      %v1912 = vsel %vm1899, %v1879, %v1600
      %v1913 = vsel %vm1899, %v1880, %v1602
      %v1914 = vsel %vm1899, %v1881, %v1604
      %v1915 = vsel %vm1899, %v1882, %v1606
      %v1916 = vsel %vm1899, %v1883, %v1608
      %v1917 = vsel %vm1899, %v1884, %v1610
      %v1918 = vsel %vm1899, %v1885, %v1612
      %v1919 = vsel %vm1899, %v1886, %v1614
      %v1920 = vsel %vm1899, %v1887, %v1616
      %v1921 = vsel %vm1899, %v1888, %v1618
      %v1922 = vsel %vm1899, %v1889, %v1620
      %v1923 = vsel %vm1899, %v1890, %v1622
      %v1924 = vsel %vm1899, %v1891, %v1624
      %v1925 = vsel %vm1899, %v1892, %v1626
      %v1926 = vsel %vm1899, %v1893, %v1628
      %v1927 = vsel %vm1899, %v1894, %v1630
      %v1928 = vsel %vm1899, %v1895, %v1632
      %v1929 = vsel %vm1899, %v1896, %v1634
      %v1930 = vsel %vm1899, %v1897, %v1636
      %v1931 = vsel %vm1899, %v1898, %v1638
      %v1932 = vld [vmem:[%s2] sm:$0xff]
      %v1933 = vld [vmem:[%s2 + $0x8] sm:$0xff]
      %v1934 = vld [vmem:[%s2 + $0x10] sm:$0xff]
      %v1935 = vld [vmem:[%s2 + $0x18] sm:$0xff]
      %v1936 = vld [vmem:[%s2 + $0x20] sm:$0xf]
      %v1937 = vld [vmem:[%s3] sm:$0x1]
      %v1939 = vperm.slane %v1937, 0
      %vm1941 = vcmask 293888
      %v1943 = vsel %vm1941, %v1900, 0
      %v1946 = vsel %vm1941, %v1901, 0
      %v1949 = vsel %vm1941, %v1902, 0
      %v1952 = vsel %vm1941, %v1903, 0
      %v1955 = vsel %vm1941, %v1904, 0
      %v1958 = vsel %vm1941, %v1905, 0
      %v1961 = vsel %vm1941, %v1906, 0
      %v1964 = vsel %vm1941, %v1907, 0
      %v1967 = vsel %vm1941, %v1908, 0
      %v1970 = vsel %vm1941, %v1909, 0
      %v1973 = vsel %vm1941, %v1910, 0
      %v1976 = vsel %vm1941, %v1911, 0
      %v1979 = vsel %vm1941, %v1912, 0
      %v1982 = vsel %vm1941, %v1913, 0
      %v1985 = vsel %vm1941, %v1914, 0
      %v1988 = vsel %vm1941, %v1915, 0
      %v1991 = vsel %vm1941, %v1916, 0
      %v1994 = vsel %vm1941, %v1917, 0
      %v1997 = vsel %vm1941, %v1918, 0
      %v2000 = vsel %vm1941, %v1919, 0
      %v2003 = vsel %vm1941, %v1920, 0
      %v2006 = vsel %vm1941, %v1921, 0
      %v2009 = vsel %vm1941, %v1922, 0
      %v2012 = vsel %vm1941, %v1923, 0
      %v2015 = vsel %vm1941, %v1924, 0
      %v2018 = vsel %vm1941, %v1925, 0
      %v2021 = vsel %vm1941, %v1926, 0
      %v2024 = vsel %vm1941, %v1927, 0
      %v2027 = vsel %vm1941, %v1928, 0
      %v2030 = vsel %vm1941, %v1929, 0
      %v2033 = vsel %vm1941, %v1930, 0
      %v2036 = vsel %vm1941, %v1931, 0
      %vm2038 = vcmask 1043456
      %v2040 = vsel %vm2038, %v1936, 0
      %2042 = vmatpush.msra.mxu0 0.0
      %2043 = vmatpush.msra.mxu0 0.0
      %2044 = vmatpush.msra.mxu0 0.0
      %2045 = vmatpush.msra.mxu0 0.0
      %2046 = vmatpush.msra.mxu0 0.0
      %2047 = vmatpush.msra.mxu0 0.0
      %2048 = vmatpush.msra.mxu0 0.0
      %2049 = vmatpush.msra.mxu0 0.0
      %2050 = vmatpush.msra.mxu0 0.0
      %2051 = vmatpush.msra.mxu0 0.0
      %2052 = vmatpush.msra.mxu0 0.0
      %2053 = vmatpush.msra.mxu0 %v2040
      %2054 = vmatpush.msra.mxu0 %v1935
      %2055 = vmatpush.msra.mxu0 %v1934
      %2056 = vmatpush.msra.mxu0 %v1933
      %2057 = vmatpush.msra.mxu0 %v1932
      %2058 = vmatmul.f32.gmra.mxu0 %v1943
      %v2059 = vpop.f32.mrf.mxu0
      %v2060 = vadd.f32 %v1939, %v2059
      %2061 = vmatmul.f32.gmra.mxu0 %v1946
      %v2062 = vpop.f32.mrf.mxu0
      %v2063 = vadd.f32 %v1939, %v2062
      %2064 = vmatmul.f32.gmra.mxu0 %v1949
      %v2065 = vpop.f32.mrf.mxu0
      %v2066 = vadd.f32 %v1939, %v2065
      %2067 = vmatmul.f32.gmra.mxu0 %v1952
      %v2068 = vpop.f32.mrf.mxu0
      %v2069 = vadd.f32 %v1939, %v2068
      %2070 = vmatmul.f32.gmra.mxu0 %v1955
      %v2071 = vpop.f32.mrf.mxu0
      %v2072 = vadd.f32 %v1939, %v2071
      %2073 = vmatmul.f32.gmra.mxu0 %v1958
      %v2074 = vpop.f32.mrf.mxu0
      %v2075 = vadd.f32 %v1939, %v2074
      %2076 = vmatmul.f32.gmra.mxu0 %v1961
      %v2077 = vpop.f32.mrf.mxu0
      %v2078 = vadd.f32 %v1939, %v2077
      %2079 = vmatmul.f32.gmra.mxu0 %v1964
      %v2080 = vpop.f32.mrf.mxu0
      %v2081 = vadd.f32 %v1939, %v2080
      %2082 = vmatmul.f32.gmra.mxu0 %v1967
      %v2083 = vpop.f32.mrf.mxu0
      %v2084 = vadd.f32 %v1939, %v2083
      %2085 = vmatmul.f32.gmra.mxu0 %v1970
      %v2086 = vpop.f32.mrf.mxu0
      %v2087 = vadd.f32 %v1939, %v2086
      %2088 = vmatmul.f32.gmra.mxu0 %v1973
      %v2089 = vpop.f32.mrf.mxu0
      %v2090 = vadd.f32 %v1939, %v2089
      %2091 = vmatmul.f32.gmra.mxu0 %v1976
      %v2092 = vpop.f32.mrf.mxu0
      %v2093 = vadd.f32 %v1939, %v2092
      %2094 = vmatmul.f32.gmra.mxu0 %v1979
      %v2095 = vpop.f32.mrf.mxu0
      %v2096 = vadd.f32 %v1939, %v2095
      %2097 = vmatmul.f32.gmra.mxu0 %v1982
      %v2098 = vpop.f32.mrf.mxu0
      %v2099 = vadd.f32 %v1939, %v2098
      %2100 = vmatmul.f32.gmra.mxu0 %v1985
      %v2101 = vpop.f32.mrf.mxu0
      %v2102 = vadd.f32 %v1939, %v2101
      %2103 = vmatmul.f32.gmra.mxu0 %v1988
      %v2104 = vpop.f32.mrf.mxu0
      %v2105 = vadd.f32 %v1939, %v2104
      %2106 = vmatmul.f32.gmra.mxu0 %v1991
      %v2107 = vpop.f32.mrf.mxu0
      %v2108 = vadd.f32 %v1939, %v2107
      %2109 = vmatmul.f32.gmra.mxu0 %v1994
      %v2110 = vpop.f32.mrf.mxu0
      %v2111 = vadd.f32 %v1939, %v2110
      %2112 = vmatmul.f32.gmra.mxu0 %v1997
      %v2113 = vpop.f32.mrf.mxu0
      %v2114 = vadd.f32 %v1939, %v2113
      %2115 = vmatmul.f32.gmra.mxu0 %v2000
      %v2116 = vpop.f32.mrf.mxu0
      %v2117 = vadd.f32 %v1939, %v2116
      %2118 = vmatmul.f32.gmra.mxu0 %v2003
      %v2119 = vpop.f32.mrf.mxu0
      %v2120 = vadd.f32 %v1939, %v2119
      %2121 = vmatmul.f32.gmra.mxu0 %v2006
      %v2122 = vpop.f32.mrf.mxu0
      %v2123 = vadd.f32 %v1939, %v2122
      %2124 = vmatmul.f32.gmra.mxu0 %v2009
      %v2125 = vpop.f32.mrf.mxu0
      %v2126 = vadd.f32 %v1939, %v2125
      %2127 = vmatmul.f32.gmra.mxu0 %v2012
      %v2128 = vpop.f32.mrf.mxu0
      %v2129 = vadd.f32 %v1939, %v2128
      %2130 = vmatmul.f32.gmra.mxu0 %v2015
      %v2131 = vpop.f32.mrf.mxu0
      %v2132 = vadd.f32 %v1939, %v2131
      %2133 = vmatmul.f32.gmra.mxu0 %v2018
      %v2134 = vpop.f32.mrf.mxu0
      %v2135 = vadd.f32 %v1939, %v2134
      %2136 = vmatmul.f32.gmra.mxu0 %v2021
      %v2137 = vpop.f32.mrf.mxu0
      %v2138 = vadd.f32 %v1939, %v2137
      %2139 = vmatmul.f32.gmra.mxu0 %v2024
      %v2140 = vpop.f32.mrf.mxu0
      %v2141 = vadd.f32 %v1939, %v2140
      %2142 = vmatmul.f32.gmra.mxu0 %v2027
      %v2143 = vpop.f32.mrf.mxu0
      %v2144 = vadd.f32 %v1939, %v2143
      %2145 = vmatmul.f32.gmra.mxu0 %v2030
      %v2146 = vpop.f32.mrf.mxu0
      %v2147 = vadd.f32 %v1939, %v2146
      %2148 = vmatmul.f32.gmra.mxu0 %v2033
      %v2149 = vpop.f32.mrf.mxu0
      %v2150 = vadd.f32 %v1939, %v2149
      %2151 = vmatmul.f32.gmra.mxu0 %v2036
      %v2152 = vpop.f32.mrf.mxu0
      %v2153 = vadd.f32 %v1939, %v2152
      %2154 = vdwg.mxu0
      %v2155 = vld [vmem:[%s374] sm:$0xff]
      %v2156 = vld [vmem:[%s374 + $0x8] sm:$0xff]
      %v2157 = vld [vmem:[%s374 + $0x10] sm:$0xff]
      %v2158 = vld [vmem:[%s374 + $0x18] sm:$0xff]
      %v2159 = vld [vmem:[%s374 + $0x20] sm:$0xff]
      %v2160 = vld [vmem:[%s374 + $0x28] sm:$0xff]
      %v2161 = vld [vmem:[%s374 + $0x30] sm:$0xff]
      %v2162 = vld [vmem:[%s374 + $0x38] sm:$0xff]
      %v2163 = vld [vmem:[%s374 + $0x40] sm:$0xff]
      %v2164 = vld [vmem:[%s374 + $0x48] sm:$0xff]
      %v2165 = vld [vmem:[%s374 + $0x50] sm:$0xff]
      %v2166 = vld [vmem:[%s374 + $0x58] sm:$0xff]
      %v2167 = vld [vmem:[%s374 + $0x60] sm:$0xff]
      %v2168 = vld [vmem:[%s374 + $0x68] sm:$0xff]
      %v2169 = vld [vmem:[%s374 + $0x70] sm:$0xff]
      %v2170 = vld [vmem:[%s374 + $0x78] sm:$0xff]
      %v2171 = vld [vmem:[%s374 + $0x80] sm:$0xff]
      %v2172 = vld [vmem:[%s374 + $0x88] sm:$0xff]
      %v2173 = vld [vmem:[%s374 + $0x90] sm:$0xff]
      %v2174 = vld [vmem:[%s374 + $0x98] sm:$0xff]
      %v2175 = vld [vmem:[%s374 + $0xa0] sm:$0xff]
      %v2176 = vld [vmem:[%s374 + $0xa8] sm:$0xff]
      %v2177 = vld [vmem:[%s374 + $0xb0] sm:$0xff]
      %v2178 = vld [vmem:[%s374 + $0xb8] sm:$0xff]
      %v2179 = vld [vmem:[%s374 + $0xc0] sm:$0xff]
      %v2180 = vld [vmem:[%s374 + $0xc8] sm:$0xff]
      %v2181 = vld [vmem:[%s374 + $0xd0] sm:$0xff]
      %v2182 = vld [vmem:[%s374 + $0xd8] sm:$0xff]
      %v2183 = vld [vmem:[%s374 + $0xe0] sm:$0xff]
      %v2184 = vld [vmem:[%s374 + $0xe8] sm:$0xff]
      %v2185 = vld [vmem:[%s374 + $0xf0] sm:$0xff]
      %v2186 = vld [vmem:[%s374 + $0xf8] sm:$0xff]
      %v2187 = vadd.f32 %v2060, %v2155
      %v2188 = vadd.f32 %v2063, %v2156
      %v2189 = vadd.f32 %v2066, %v2157
      %v2190 = vadd.f32 %v2069, %v2158
      %v2191 = vadd.f32 %v2072, %v2159
      %v2192 = vadd.f32 %v2075, %v2160
      %v2193 = vadd.f32 %v2078, %v2161
      %v2194 = vadd.f32 %v2081, %v2162
      %v2195 = vadd.f32 %v2084, %v2163
      %v2196 = vadd.f32 %v2087, %v2164
      %v2197 = vadd.f32 %v2090, %v2165
      %v2198 = vadd.f32 %v2093, %v2166
      %v2199 = vadd.f32 %v2096, %v2167
      %v2200 = vadd.f32 %v2099, %v2168
      %v2201 = vadd.f32 %v2102, %v2169
      %v2202 = vadd.f32 %v2105, %v2170
      %v2203 = vadd.f32 %v2108, %v2171
      %v2204 = vadd.f32 %v2111, %v2172
      %v2205 = vadd.f32 %v2114, %v2173
      %v2206 = vadd.f32 %v2117, %v2174
      %v2207 = vadd.f32 %v2120, %v2175
      %v2208 = vadd.f32 %v2123, %v2176
      %v2209 = vadd.f32 %v2126, %v2177
      %v2210 = vadd.f32 %v2129, %v2178
      %v2211 = vadd.f32 %v2132, %v2179
      %v2212 = vadd.f32 %v2135, %v2180
      %v2213 = vadd.f32 %v2138, %v2181
      %v2214 = vadd.f32 %v2141, %v2182
      %v2215 = vadd.f32 %v2144, %v2183
      %v2216 = vadd.f32 %v2147, %v2184
      %v2217 = vadd.f32 %v2150, %v2185
      %v2218 = vadd.f32 %v2153, %v2186
      %s2219 = scalar_lea.vmem [#allocation3], 24
      %2220 = vst.msk [vmem:[%s2219 + $0x1] sm:$0xff] %vm436, %v2187
      %2221 = vst.msk [vmem:[%s2219 + $0x9] sm:$0xff] %vm436, %v2188
      %2222 = vst.msk [vmem:[%s2219 + $0x19] sm:$0xff] %vm436, %v2189
      %2223 = vst.msk [vmem:[%s2219 + $0x21] sm:$0xff] %vm436, %v2190
      %2224 = vst.msk [vmem:[%s2219 + $0x31] sm:$0xff] %vm436, %v2191
      %2225 = vst.msk [vmem:[%s2219 + $0x39] sm:$0xff] %vm436, %v2192
      %2226 = vst.msk [vmem:[%s2219 + $0x49] sm:$0xff] %vm436, %v2193
      %2227 = vst.msk [vmem:[%s2219 + $0x51] sm:$0xff] %vm436, %v2194
      %2228 = vst.msk [vmem:[%s2219 + $0x61] sm:$0xff] %vm436, %v2195
      %2229 = vst.msk [vmem:[%s2219 + $0x69] sm:$0xff] %vm436, %v2196
      %2230 = vst.msk [vmem:[%s2219 + $0x79] sm:$0xff] %vm436, %v2197
      %2231 = vst.msk [vmem:[%s2219 + $0x81] sm:$0xff] %vm436, %v2198
      %2232 = vst.msk [vmem:[%s2219 + $0x91] sm:$0xff] %vm436, %v2199
      %2233 = vst.msk [vmem:[%s2219 + $0x99] sm:$0xff] %vm436, %v2200
      %2234 = vst.msk [vmem:[%s2219 + $0xa9] sm:$0xff] %vm436, %v2201
      %2235 = vst.msk [vmem:[%s2219 + $0xb1] sm:$0xff] %vm436, %v2202
      %2236 = vst.msk [vmem:[%s2219 + $0xc1] sm:$0xff] %vm436, %v2203
      %2237 = vst.msk [vmem:[%s2219 + $0xc9] sm:$0xff] %vm436, %v2204
      %2238 = vst.msk [vmem:[%s2219 + $0xd9] sm:$0xff] %vm436, %v2205
      %2239 = vst.msk [vmem:[%s2219 + $0xe1] sm:$0xff] %vm436, %v2206
      %2240 = vst.msk [vmem:[%s2219 + $0xf1] sm:$0xff] %vm436, %v2207
      %2241 = vst.msk [vmem:[%s2219 + $0xf9] sm:$0xff] %vm436, %v2208
      %2242 = vst.msk [vmem:[%s2219 + $0x109] sm:$0xff] %vm436, %v2209
      %2243 = vst.msk [vmem:[%s2219 + $0x111] sm:$0xff] %vm436, %v2210
      %2244 = vst.msk [vmem:[%s2219 + $0x121] sm:$0xff] %vm436, %v2211
      %2245 = vst.msk [vmem:[%s2219 + $0x129] sm:$0xff] %vm436, %v2212
      %2246 = vst.msk [vmem:[%s2219 + $0x139] sm:$0xff] %vm436, %v2213
      %2247 = vst.msk [vmem:[%s2219 + $0x141] sm:$0xff] %vm436, %v2214
      %2248 = vst.msk [vmem:[%s2219 + $0x151] sm:$0xff] %vm436, %v2215
      %2249 = vst.msk [vmem:[%s2219 + $0x159] sm:$0xff] %vm436, %v2216
      %2250 = vst.msk [vmem:[%s2219 + $0x169] sm:$0xff] %vm436, %v2217
      %2251 = vst.msk [vmem:[%s2219 + $0x171] sm:$0xff] %vm436, %v2218
      %v2252 = vld [vmem:[#allocation3] sm:$0xff]
      %v2253 = vld [vmem:[#allocation3 + $0x8] sm:$0xff]
      %v2254 = vld [vmem:[#allocation3 + $0x10] sm:$0x3]
      %v2255 = vld [vmem:[#allocation3 + $0x18] sm:$0xff]
      %v2256 = vld [vmem:[#allocation3 + $0x20] sm:$0xff]
      %v2257 = vld [vmem:[#allocation3 + $0x28] sm:$0x3]
      %v2258 = vld [vmem:[#allocation3 + $0x30] sm:$0xff]
      %v2259 = vld [vmem:[#allocation3 + $0x38] sm:$0xff]
      %v2260 = vld [vmem:[#allocation3 + $0x40] sm:$0x3]
      %v2261 = vld [vmem:[#allocation3 + $0x48] sm:$0xff]
      %v2262 = vld [vmem:[#allocation3 + $0x50] sm:$0xff]
      %v2263 = vld [vmem:[#allocation3 + $0x58] sm:$0x3]
      %v2264 = vld [vmem:[#allocation3 + $0x60] sm:$0xff]
      %v2265 = vld [vmem:[#allocation3 + $0x68] sm:$0xff]
      %v2266 = vld [vmem:[#allocation3 + $0x70] sm:$0x3]
      %v2267 = vld [vmem:[#allocation3 + $0x78] sm:$0xff]
      %v2268 = vld [vmem:[#allocation3 + $0x80] sm:$0xff]
      %v2269 = vld [vmem:[#allocation3 + $0x88] sm:$0x3]
      %v2270 = vld [vmem:[#allocation3 + $0x90] sm:$0xff]
      %v2271 = vld [vmem:[#allocation3 + $0x98] sm:$0xff]
      %v2272 = vld [vmem:[#allocation3 + $0xa0] sm:$0x3]
      %v2273 = vld [vmem:[#allocation3 + $0xa8] sm:$0xff]
      %v2274 = vld [vmem:[#allocation3 + $0xb0] sm:$0xff]
      %v2275 = vld [vmem:[#allocation3 + $0xb8] sm:$0x3]
      %v2276 = vld [vmem:[#allocation3 + $0xc0] sm:$0xff]
      %v2277 = vld [vmem:[#allocation3 + $0xc8] sm:$0xff]
      %v2278 = vld [vmem:[#allocation3 + $0xd0] sm:$0x3]
      %v2279 = vld [vmem:[#allocation3 + $0xd8] sm:$0xff]
      %v2280 = vld [vmem:[#allocation3 + $0xe0] sm:$0xff]
      %v2281 = vld [vmem:[#allocation3 + $0xe8] sm:$0x3]
      %v2282 = vld [vmem:[#allocation3 + $0xf0] sm:$0xff]
      %v2283 = vld [vmem:[#allocation3 + $0xf8] sm:$0xff]
      %v2284 = vld [vmem:[#allocation3 + $0x100] sm:$0x3]
      %v2285 = vld [vmem:[#allocation3 + $0x108] sm:$0xff]
      %v2286 = vld [vmem:[#allocation3 + $0x110] sm:$0xff]
      %v2287 = vld [vmem:[#allocation3 + $0x118] sm:$0x3]
      %v2288 = vld [vmem:[#allocation3 + $0x120] sm:$0xff]
      %v2289 = vld [vmem:[#allocation3 + $0x128] sm:$0xff]
      %v2290 = vld [vmem:[#allocation3 + $0x130] sm:$0x3]
      %v2291 = vld [vmem:[#allocation3 + $0x138] sm:$0xff]
      %v2292 = vld [vmem:[#allocation3 + $0x140] sm:$0xff]
      %v2293 = vld [vmem:[#allocation3 + $0x148] sm:$0x3]
      %v2294 = vld [vmem:[#allocation3 + $0x150] sm:$0xff]
      %v2295 = vld [vmem:[#allocation3 + $0x158] sm:$0xff]
      %v2296 = vld [vmem:[#allocation3 + $0x160] sm:$0x3]
      %v2297 = vld [vmem:[#allocation3 + $0x168] sm:$0xff]
      %v2298 = vld [vmem:[#allocation3 + $0x170] sm:$0xff]
      %v2299 = vld [vmem:[#allocation3 + $0x178] sm:$0x3]
      %v2300 = vld [vmem:[#allocation3 + $0x180] sm:$0xff]
      %v2301 = vld [vmem:[#allocation3 + $0x188] sm:$0xff]
      %v2302 = vld [vmem:[#allocation3 + $0x190] sm:$0x3]
      %v2303 = vld [vmem:[#allocation3 + $0x198] sm:$0xff]
      %v2304 = vld [vmem:[#allocation3 + $0x1a0] sm:$0xff]
      %v2305 = vld [vmem:[#allocation3 + $0x1a8] sm:$0x3]
      %v2354 = vrot.slane %v2252, 1
      %v2355 = vrot.slane %v2253, 1
      %v2356 = vsel %vm715, %v2354, %v2355
      %v2357 = vrot.slane %v2254, 1
      %v2358 = vsel %vm715, %v2355, %v2357
      %v2359 = vrot.slane %v2255, 1
      %v2360 = vrot.slane %v2256, 1
      %v2361 = vsel %vm715, %v2359, %v2360
      %v2362 = vrot.slane %v2257, 1
      %v2363 = vsel %vm715, %v2360, %v2362
      %v2364 = vrot.slane %v2258, 1
      %v2365 = vrot.slane %v2259, 1
      %v2366 = vsel %vm715, %v2364, %v2365
      %v2367 = vrot.slane %v2260, 1
      %v2368 = vsel %vm715, %v2365, %v2367
      %v2369 = vrot.slane %v2261, 1
      %v2370 = vrot.slane %v2262, 1
      %v2371 = vsel %vm715, %v2369, %v2370
      %v2372 = vrot.slane %v2263, 1
      %v2373 = vsel %vm715, %v2370, %v2372
      %v2374 = vrot.slane %v2264, 1
      %v2375 = vrot.slane %v2265, 1
      %v2376 = vsel %vm715, %v2374, %v2375
      %v2377 = vrot.slane %v2266, 1
      %v2378 = vsel %vm715, %v2375, %v2377
      %v2379 = vrot.slane %v2267, 1
      %v2380 = vrot.slane %v2268, 1
      %v2381 = vsel %vm715, %v2379, %v2380
      %v2382 = vrot.slane %v2269, 1
      %v2383 = vsel %vm715, %v2380, %v2382
      %v2384 = vrot.slane %v2270, 1
      %v2385 = vrot.slane %v2271, 1
      %v2386 = vsel %vm715, %v2384, %v2385
      %v2387 = vrot.slane %v2272, 1
      %v2388 = vsel %vm715, %v2385, %v2387
      %v2389 = vrot.slane %v2273, 1
      %v2390 = vrot.slane %v2274, 1
      %v2391 = vsel %vm715, %v2389, %v2390
      %v2392 = vrot.slane %v2275, 1
      %v2393 = vsel %vm715, %v2390, %v2392
      %v2394 = vrot.slane %v2276, 1
      %v2395 = vrot.slane %v2277, 1
      %v2396 = vsel %vm715, %v2394, %v2395
      %v2397 = vrot.slane %v2278, 1
      %v2398 = vsel %vm715, %v2395, %v2397
      %v2399 = vrot.slane %v2279, 1
      %v2400 = vrot.slane %v2280, 1
      %v2401 = vsel %vm715, %v2399, %v2400
      %v2402 = vrot.slane %v2281, 1
      %v2403 = vsel %vm715, %v2400, %v2402
      %v2404 = vrot.slane %v2282, 1
      %v2405 = vrot.slane %v2283, 1
      %v2406 = vsel %vm715, %v2404, %v2405
      %v2407 = vrot.slane %v2284, 1
      %v2408 = vsel %vm715, %v2405, %v2407
      %v2409 = vrot.slane %v2285, 1
      %v2410 = vrot.slane %v2286, 1
      %v2411 = vsel %vm715, %v2409, %v2410
      %v2412 = vrot.slane %v2287, 1
      %v2413 = vsel %vm715, %v2410, %v2412
      %v2414 = vrot.slane %v2288, 1
      %v2415 = vrot.slane %v2289, 1
      %v2416 = vsel %vm715, %v2414, %v2415
      %v2417 = vrot.slane %v2290, 1
      %v2418 = vsel %vm715, %v2415, %v2417
      %v2419 = vrot.slane %v2291, 1
      %v2420 = vrot.slane %v2292, 1
      %v2421 = vsel %vm715, %v2419, %v2420
      %v2422 = vrot.slane %v2293, 1
      %v2423 = vsel %vm715, %v2420, %v2422
      %v2424 = vrot.slane %v2294, 1
      %v2425 = vrot.slane %v2295, 1
      %v2426 = vsel %vm715, %v2424, %v2425
      %v2427 = vrot.slane %v2296, 1
      %v2428 = vsel %vm715, %v2425, %v2427
      %v2429 = vrot.slane %v2297, 1
      %v2430 = vrot.slane %v2298, 1
      %v2431 = vsel %vm715, %v2429, %v2430
      %v2432 = vrot.slane %v2299, 1
      %v2433 = vsel %vm715, %v2430, %v2432
      %v2434 = vrot.slane %v2252, 2
      %v2435 = vrot.slane %v2253, 2
      %v2436 = vsel %vm796, %v2434, %v2435
      %v2437 = vrot.slane %v2254, 2
      %v2438 = vsel %vm796, %v2435, %v2437
      %v2439 = vrot.slane %v2255, 2
      %v2440 = vrot.slane %v2256, 2
      %v2441 = vsel %vm796, %v2439, %v2440
      %v2442 = vrot.slane %v2257, 2
      %v2443 = vsel %vm796, %v2440, %v2442
      %v2444 = vrot.slane %v2258, 2
      %v2445 = vrot.slane %v2259, 2
      %v2446 = vsel %vm796, %v2444, %v2445
      %v2447 = vrot.slane %v2260, 2
      %v2448 = vsel %vm796, %v2445, %v2447
      %v2449 = vrot.slane %v2261, 2
      %v2450 = vrot.slane %v2262, 2
      %v2451 = vsel %vm796, %v2449, %v2450
      %v2452 = vrot.slane %v2263, 2
      %v2453 = vsel %vm796, %v2450, %v2452
      %v2454 = vrot.slane %v2264, 2
      %v2455 = vrot.slane %v2265, 2
      %v2456 = vsel %vm796, %v2454, %v2455
      %v2457 = vrot.slane %v2266, 2
      %v2458 = vsel %vm796, %v2455, %v2457
      %v2459 = vrot.slane %v2267, 2
      %v2460 = vrot.slane %v2268, 2
      %v2461 = vsel %vm796, %v2459, %v2460
      %v2462 = vrot.slane %v2269, 2
      %v2463 = vsel %vm796, %v2460, %v2462
      %v2464 = vrot.slane %v2270, 2
      %v2465 = vrot.slane %v2271, 2
      %v2466 = vsel %vm796, %v2464, %v2465
      %v2467 = vrot.slane %v2272, 2
      %v2468 = vsel %vm796, %v2465, %v2467
      %v2469 = vrot.slane %v2273, 2
      %v2470 = vrot.slane %v2274, 2
      %v2471 = vsel %vm796, %v2469, %v2470
      %v2472 = vrot.slane %v2275, 2
      %v2473 = vsel %vm796, %v2470, %v2472
      %v2474 = vrot.slane %v2276, 2
      %v2475 = vrot.slane %v2277, 2
      %v2476 = vsel %vm796, %v2474, %v2475
      %v2477 = vrot.slane %v2278, 2
      %v2478 = vsel %vm796, %v2475, %v2477
      %v2479 = vrot.slane %v2279, 2
      %v2480 = vrot.slane %v2280, 2
      %v2481 = vsel %vm796, %v2479, %v2480
      %v2482 = vrot.slane %v2281, 2
      %v2483 = vsel %vm796, %v2480, %v2482
      %v2484 = vrot.slane %v2282, 2
      %v2485 = vrot.slane %v2283, 2
      %v2486 = vsel %vm796, %v2484, %v2485
      %v2487 = vrot.slane %v2284, 2
      %v2488 = vsel %vm796, %v2485, %v2487
      %v2489 = vrot.slane %v2285, 2
      %v2490 = vrot.slane %v2286, 2
      %v2491 = vsel %vm796, %v2489, %v2490
      %v2492 = vrot.slane %v2287, 2
      %v2493 = vsel %vm796, %v2490, %v2492
      %v2494 = vrot.slane %v2288, 2
      %v2495 = vrot.slane %v2289, 2
      %v2496 = vsel %vm796, %v2494, %v2495
      %v2497 = vrot.slane %v2290, 2
      %v2498 = vsel %vm796, %v2495, %v2497
      %v2499 = vrot.slane %v2291, 2
      %v2500 = vrot.slane %v2292, 2
      %v2501 = vsel %vm796, %v2499, %v2500
      %v2502 = vrot.slane %v2293, 2
      %v2503 = vsel %vm796, %v2500, %v2502
      %v2504 = vrot.slane %v2294, 2
      %v2505 = vrot.slane %v2295, 2
      %v2506 = vsel %vm796, %v2504, %v2505
      %v2507 = vrot.slane %v2296, 2
      %v2508 = vsel %vm796, %v2505, %v2507
      %v2509 = vrot.slane %v2297, 2
      %v2510 = vrot.slane %v2298, 2
      %v2511 = vsel %vm796, %v2509, %v2510
      %v2512 = vrot.slane %v2299, 2
      %v2513 = vsel %vm796, %v2510, %v2512
      %v2517 = vrot.slane %v2300, 1
      %v2518 = vrot.slane %v2301, 1
      %v2519 = vsel %vm715, %v2517, %v2518
      %v2520 = vrot.slane %v2302, 1
      %v2521 = vsel %vm715, %v2518, %v2520
      %v2522 = vrot.slane %v2300, 2
      %v2523 = vrot.slane %v2301, 2
      %v2524 = vsel %vm796, %v2522, %v2523
      %v2525 = vrot.slane %v2302, 2
      %v2526 = vsel %vm796, %v2523, %v2525
      %v2530 = vrot.slane %v2303, 1
      %v2531 = vrot.slane %v2304, 1
      %v2532 = vsel %vm715, %v2530, %v2531
      %v2533 = vrot.slane %v2305, 1
      %v2534 = vsel %vm715, %v2531, %v2533
      %v2535 = vrot.slane %v2303, 2
      %v2536 = vrot.slane %v2304, 2
      %v2537 = vsel %vm796, %v2535, %v2536
      %v2538 = vrot.slane %v2305, 2
      %v2539 = vsel %vm796, %v2536, %v2538
      %2540 = vrot.lane.b32.xlu0 %v2356, 8
      %v2541 = vpop.permute.xlu0 %2540
      %2542 = vrot.lane.b32.xlu0 %v2358, 8
      %v2543 = vpop.permute.xlu0 %2542
      %2544 = vrot.lane.b32.xlu0 %v2361, 8
      %v2545 = vpop.permute.xlu0 %2544
      %2546 = vrot.lane.b32.xlu0 %v2363, 8
      %v2547 = vpop.permute.xlu0 %2546
      %2548 = vrot.lane.b32.xlu0 %v2366, 8
      %v2549 = vpop.permute.xlu0 %2548
      %2550 = vrot.lane.b32.xlu0 %v2368, 8
      %v2551 = vpop.permute.xlu0 %2550
      %2552 = vrot.lane.b32.xlu0 %v2371, 8
      %v2553 = vpop.permute.xlu0 %2552
      %2554 = vrot.lane.b32.xlu0 %v2373, 8
      %v2555 = vpop.permute.xlu0 %2554
      %2556 = vrot.lane.b32.xlu0 %v2376, 8
      %v2557 = vpop.permute.xlu0 %2556
      %2558 = vrot.lane.b32.xlu0 %v2378, 8
      %v2559 = vpop.permute.xlu0 %2558
      %2560 = vrot.lane.b32.xlu0 %v2381, 8
      %v2561 = vpop.permute.xlu0 %2560
      %2562 = vrot.lane.b32.xlu0 %v2383, 8
      %v2563 = vpop.permute.xlu0 %2562
      %2564 = vrot.lane.b32.xlu0 %v2386, 8
      %v2565 = vpop.permute.xlu0 %2564
      %2566 = vrot.lane.b32.xlu0 %v2388, 8
      %v2567 = vpop.permute.xlu0 %2566
      %2568 = vrot.lane.b32.xlu0 %v2391, 8
      %v2569 = vpop.permute.xlu0 %2568
      %2570 = vrot.lane.b32.xlu0 %v2393, 8
      %v2571 = vpop.permute.xlu0 %2570
      %2572 = vrot.lane.b32.xlu0 %v2396, 8
      %v2573 = vpop.permute.xlu0 %2572
      %2574 = vrot.lane.b32.xlu0 %v2398, 8
      %v2575 = vpop.permute.xlu0 %2574
      %2576 = vrot.lane.b32.xlu0 %v2401, 8
      %v2577 = vpop.permute.xlu0 %2576
      %2578 = vrot.lane.b32.xlu0 %v2403, 8
      %v2579 = vpop.permute.xlu0 %2578
      %2580 = vrot.lane.b32.xlu0 %v2406, 8
      %v2581 = vpop.permute.xlu0 %2580
      %2582 = vrot.lane.b32.xlu0 %v2408, 8
      %v2583 = vpop.permute.xlu0 %2582
      %2584 = vrot.lane.b32.xlu0 %v2411, 8
      %v2585 = vpop.permute.xlu0 %2584
      %2586 = vrot.lane.b32.xlu0 %v2413, 8
      %v2587 = vpop.permute.xlu0 %2586
      %2588 = vrot.lane.b32.xlu0 %v2416, 8
      %v2589 = vpop.permute.xlu0 %2588
      %2590 = vrot.lane.b32.xlu0 %v2418, 8
      %v2591 = vpop.permute.xlu0 %2590
      %2592 = vrot.lane.b32.xlu0 %v2421, 8
      %v2593 = vpop.permute.xlu0 %2592
      %2594 = vrot.lane.b32.xlu0 %v2423, 8
      %v2595 = vpop.permute.xlu0 %2594
      %2596 = vrot.lane.b32.xlu0 %v2426, 8
      %v2597 = vpop.permute.xlu0 %2596
      %2598 = vrot.lane.b32.xlu0 %v2428, 8
      %v2599 = vpop.permute.xlu0 %2598
      %2600 = vrot.lane.b32.xlu0 %v2431, 8
      %v2601 = vpop.permute.xlu0 %2600
      %2602 = vrot.lane.b32.xlu0 %v2433, 8
      %v2603 = vpop.permute.xlu0 %2602
      %2636 = vrot.lane.b32.xlu0 %v2436, 16
      %v2637 = vpop.permute.xlu0 %2636
      %2638 = vrot.lane.b32.xlu0 %v2438, 16
      %v2639 = vpop.permute.xlu0 %2638
      %2640 = vrot.lane.b32.xlu0 %v2441, 16
      %v2641 = vpop.permute.xlu0 %2640
      %2642 = vrot.lane.b32.xlu0 %v2443, 16
      %v2643 = vpop.permute.xlu0 %2642
      %2644 = vrot.lane.b32.xlu0 %v2446, 16
      %v2645 = vpop.permute.xlu0 %2644
      %2646 = vrot.lane.b32.xlu0 %v2448, 16
      %v2647 = vpop.permute.xlu0 %2646
      %2648 = vrot.lane.b32.xlu0 %v2451, 16
      %v2649 = vpop.permute.xlu0 %2648
      %2650 = vrot.lane.b32.xlu0 %v2453, 16
      %v2651 = vpop.permute.xlu0 %2650
      %2652 = vrot.lane.b32.xlu0 %v2456, 16
      %v2653 = vpop.permute.xlu0 %2652
      %2654 = vrot.lane.b32.xlu0 %v2458, 16
      %v2655 = vpop.permute.xlu0 %2654
      %2656 = vrot.lane.b32.xlu0 %v2461, 16
      %v2657 = vpop.permute.xlu0 %2656
      %2658 = vrot.lane.b32.xlu0 %v2463, 16
      %v2659 = vpop.permute.xlu0 %2658
      %2660 = vrot.lane.b32.xlu0 %v2466, 16
      %v2661 = vpop.permute.xlu0 %2660
      %2662 = vrot.lane.b32.xlu0 %v2468, 16
      %v2663 = vpop.permute.xlu0 %2662
      %2664 = vrot.lane.b32.xlu0 %v2471, 16
      %v2665 = vpop.permute.xlu0 %2664
      %2666 = vrot.lane.b32.xlu0 %v2473, 16
      %v2667 = vpop.permute.xlu0 %2666
      %2668 = vrot.lane.b32.xlu0 %v2476, 16
      %v2669 = vpop.permute.xlu0 %2668
      %2670 = vrot.lane.b32.xlu0 %v2478, 16
      %v2671 = vpop.permute.xlu0 %2670
      %2672 = vrot.lane.b32.xlu0 %v2481, 16
      %v2673 = vpop.permute.xlu0 %2672
      %2674 = vrot.lane.b32.xlu0 %v2483, 16
      %v2675 = vpop.permute.xlu0 %2674
      %2676 = vrot.lane.b32.xlu0 %v2486, 16
      %v2677 = vpop.permute.xlu0 %2676
      %2678 = vrot.lane.b32.xlu0 %v2488, 16
      %v2679 = vpop.permute.xlu0 %2678
      %2680 = vrot.lane.b32.xlu0 %v2491, 16
      %v2681 = vpop.permute.xlu0 %2680
      %2682 = vrot.lane.b32.xlu0 %v2493, 16
      %v2683 = vpop.permute.xlu0 %2682
      %2684 = vrot.lane.b32.xlu0 %v2496, 16
      %v2685 = vpop.permute.xlu0 %2684
      %2686 = vrot.lane.b32.xlu0 %v2498, 16
      %v2687 = vpop.permute.xlu0 %2686
      %2688 = vrot.lane.b32.xlu0 %v2501, 16
      %v2689 = vpop.permute.xlu0 %2688
      %2690 = vrot.lane.b32.xlu0 %v2503, 16
      %v2691 = vpop.permute.xlu0 %2690
      %2692 = vrot.lane.b32.xlu0 %v2506, 16
      %v2693 = vpop.permute.xlu0 %2692
      %2694 = vrot.lane.b32.xlu0 %v2508, 16
      %v2695 = vpop.permute.xlu0 %2694
      %2696 = vrot.lane.b32.xlu0 %v2511, 16
      %v2697 = vpop.permute.xlu0 %2696
      %2698 = vrot.lane.b32.xlu0 %v2513, 16
      %v2699 = vpop.permute.xlu0 %2698
      %2732 = vrot.lane.b32.xlu0 %v2255, 24
      %v2733 = vpop.permute.xlu0 %2732
      %2734 = vrot.lane.b32.xlu0 %v2256, 24
      %v2735 = vpop.permute.xlu0 %2734
      %2736 = vrot.lane.b32.xlu0 %v2258, 24
      %v2737 = vpop.permute.xlu0 %2736
      %2738 = vrot.lane.b32.xlu0 %v2259, 24
      %v2739 = vpop.permute.xlu0 %2738
      %2740 = vrot.lane.b32.xlu0 %v2261, 24
      %v2741 = vpop.permute.xlu0 %2740
      %2742 = vrot.lane.b32.xlu0 %v2262, 24
      %v2743 = vpop.permute.xlu0 %2742
      %2744 = vrot.lane.b32.xlu0 %v2264, 24
      %v2745 = vpop.permute.xlu0 %2744
      %2746 = vrot.lane.b32.xlu0 %v2265, 24
      %v2747 = vpop.permute.xlu0 %2746
      %2748 = vrot.lane.b32.xlu0 %v2267, 24
      %v2749 = vpop.permute.xlu0 %2748
      %2750 = vrot.lane.b32.xlu0 %v2268, 24
      %v2751 = vpop.permute.xlu0 %2750
      %2752 = vrot.lane.b32.xlu0 %v2270, 24
      %v2753 = vpop.permute.xlu0 %2752
      %2754 = vrot.lane.b32.xlu0 %v2271, 24
      %v2755 = vpop.permute.xlu0 %2754
      %2756 = vrot.lane.b32.xlu0 %v2273, 24
      %v2757 = vpop.permute.xlu0 %2756
      %2758 = vrot.lane.b32.xlu0 %v2274, 24
      %v2759 = vpop.permute.xlu0 %2758
      %2760 = vrot.lane.b32.xlu0 %v2276, 24
      %v2761 = vpop.permute.xlu0 %2760
      %2762 = vrot.lane.b32.xlu0 %v2277, 24
      %v2763 = vpop.permute.xlu0 %2762
      %2764 = vrot.lane.b32.xlu0 %v2279, 24
      %v2765 = vpop.permute.xlu0 %2764
      %2766 = vrot.lane.b32.xlu0 %v2280, 24
      %v2767 = vpop.permute.xlu0 %2766
      %2768 = vrot.lane.b32.xlu0 %v2282, 24
      %v2769 = vpop.permute.xlu0 %2768
      %2770 = vrot.lane.b32.xlu0 %v2283, 24
      %v2771 = vpop.permute.xlu0 %2770
      %2772 = vrot.lane.b32.xlu0 %v2285, 24
      %v2773 = vpop.permute.xlu0 %2772
      %2774 = vrot.lane.b32.xlu0 %v2286, 24
      %v2775 = vpop.permute.xlu0 %2774
      %2776 = vrot.lane.b32.xlu0 %v2288, 24
      %v2777 = vpop.permute.xlu0 %2776
      %2778 = vrot.lane.b32.xlu0 %v2289, 24
      %v2779 = vpop.permute.xlu0 %2778
      %2780 = vrot.lane.b32.xlu0 %v2291, 24
      %v2781 = vpop.permute.xlu0 %2780
      %2782 = vrot.lane.b32.xlu0 %v2292, 24
      %v2783 = vpop.permute.xlu0 %2782
      %2784 = vrot.lane.b32.xlu0 %v2294, 24
      %v2785 = vpop.permute.xlu0 %2784
      %2786 = vrot.lane.b32.xlu0 %v2295, 24
      %v2787 = vpop.permute.xlu0 %2786
      %2788 = vrot.lane.b32.xlu0 %v2297, 24
      %v2789 = vpop.permute.xlu0 %2788
      %2790 = vrot.lane.b32.xlu0 %v2298, 24
      %v2791 = vpop.permute.xlu0 %2790
      %2792 = vrot.lane.b32.xlu0 %v2300, 24
      %v2793 = vpop.permute.xlu0 %2792
      %2794 = vrot.lane.b32.xlu0 %v2301, 24
      %v2795 = vpop.permute.xlu0 %2794
      %2828 = vrot.lane.b32.xlu0 %v2361, 32
      %v2829 = vpop.permute.xlu0 %2828
      %2830 = vrot.lane.b32.xlu0 %v2363, 32
      %v2831 = vpop.permute.xlu0 %2830
      %2832 = vrot.lane.b32.xlu0 %v2366, 32
      %v2833 = vpop.permute.xlu0 %2832
      %2834 = vrot.lane.b32.xlu0 %v2368, 32
      %v2835 = vpop.permute.xlu0 %2834
      %2836 = vrot.lane.b32.xlu0 %v2371, 32
      %v2837 = vpop.permute.xlu0 %2836
      %2838 = vrot.lane.b32.xlu0 %v2373, 32
      %v2839 = vpop.permute.xlu0 %2838
      %2840 = vrot.lane.b32.xlu0 %v2376, 32
      %v2841 = vpop.permute.xlu0 %2840
      %2842 = vrot.lane.b32.xlu0 %v2378, 32
      %v2843 = vpop.permute.xlu0 %2842
      %2844 = vrot.lane.b32.xlu0 %v2381, 32
      %v2845 = vpop.permute.xlu0 %2844
      %2846 = vrot.lane.b32.xlu0 %v2383, 32
      %v2847 = vpop.permute.xlu0 %2846
      %2848 = vrot.lane.b32.xlu0 %v2386, 32
      %v2849 = vpop.permute.xlu0 %2848
      %2850 = vrot.lane.b32.xlu0 %v2388, 32
      %v2851 = vpop.permute.xlu0 %2850
      %2852 = vrot.lane.b32.xlu0 %v2391, 32
      %v2853 = vpop.permute.xlu0 %2852
      %2854 = vrot.lane.b32.xlu0 %v2393, 32
      %v2855 = vpop.permute.xlu0 %2854
      %2856 = vrot.lane.b32.xlu0 %v2396, 32
      %v2857 = vpop.permute.xlu0 %2856
      %2858 = vrot.lane.b32.xlu0 %v2398, 32
      %v2859 = vpop.permute.xlu0 %2858
      %2860 = vrot.lane.b32.xlu0 %v2401, 32
      %v2861 = vpop.permute.xlu0 %2860
      %2862 = vrot.lane.b32.xlu0 %v2403, 32
      %v2863 = vpop.permute.xlu0 %2862
      %2864 = vrot.lane.b32.xlu0 %v2406, 32
      %v2865 = vpop.permute.xlu0 %2864
      %2866 = vrot.lane.b32.xlu0 %v2408, 32
      %v2867 = vpop.permute.xlu0 %2866
      %2868 = vrot.lane.b32.xlu0 %v2411, 32
      %v2869 = vpop.permute.xlu0 %2868
      %2870 = vrot.lane.b32.xlu0 %v2413, 32
      %v2871 = vpop.permute.xlu0 %2870
      %2872 = vrot.lane.b32.xlu0 %v2416, 32
      %v2873 = vpop.permute.xlu0 %2872
      %2874 = vrot.lane.b32.xlu0 %v2418, 32
      %v2875 = vpop.permute.xlu0 %2874
      %2876 = vrot.lane.b32.xlu0 %v2421, 32
      %v2877 = vpop.permute.xlu0 %2876
      %2878 = vrot.lane.b32.xlu0 %v2423, 32
      %v2879 = vpop.permute.xlu0 %2878
      %2880 = vrot.lane.b32.xlu0 %v2426, 32
      %v2881 = vpop.permute.xlu0 %2880
      %2882 = vrot.lane.b32.xlu0 %v2428, 32
      %v2883 = vpop.permute.xlu0 %2882
      %2884 = vrot.lane.b32.xlu0 %v2431, 32
      %v2885 = vpop.permute.xlu0 %2884
      %2886 = vrot.lane.b32.xlu0 %v2433, 32
      %v2887 = vpop.permute.xlu0 %2886
      %2888 = vrot.lane.b32.xlu0 %v2519, 32
      %v2889 = vpop.permute.xlu0 %2888
      %2890 = vrot.lane.b32.xlu0 %v2521, 32
      %v2891 = vpop.permute.xlu0 %2890
      %2924 = vrot.lane.b32.xlu0 %v2441, 40
      %v2925 = vpop.permute.xlu0 %2924
      %2926 = vrot.lane.b32.xlu0 %v2443, 40
      %v2927 = vpop.permute.xlu0 %2926
      %2928 = vrot.lane.b32.xlu0 %v2446, 40
      %v2929 = vpop.permute.xlu0 %2928
      %2930 = vrot.lane.b32.xlu0 %v2448, 40
      %v2931 = vpop.permute.xlu0 %2930
      %2932 = vrot.lane.b32.xlu0 %v2451, 40
      %v2933 = vpop.permute.xlu0 %2932
      %2934 = vrot.lane.b32.xlu0 %v2453, 40
      %v2935 = vpop.permute.xlu0 %2934
      %2936 = vrot.lane.b32.xlu0 %v2456, 40
      %v2937 = vpop.permute.xlu0 %2936
      %2938 = vrot.lane.b32.xlu0 %v2458, 40
      %v2939 = vpop.permute.xlu0 %2938
      %2940 = vrot.lane.b32.xlu0 %v2461, 40
      %v2941 = vpop.permute.xlu0 %2940
      %2942 = vrot.lane.b32.xlu0 %v2463, 40
      %v2943 = vpop.permute.xlu0 %2942
      %2944 = vrot.lane.b32.xlu0 %v2466, 40
      %v2945 = vpop.permute.xlu0 %2944
      %2946 = vrot.lane.b32.xlu0 %v2468, 40
      %v2947 = vpop.permute.xlu0 %2946
      %2948 = vrot.lane.b32.xlu0 %v2471, 40
      %v2949 = vpop.permute.xlu0 %2948
      %2950 = vrot.lane.b32.xlu0 %v2473, 40
      %v2951 = vpop.permute.xlu0 %2950
      %2952 = vrot.lane.b32.xlu0 %v2476, 40
      %v2953 = vpop.permute.xlu0 %2952
      %2954 = vrot.lane.b32.xlu0 %v2478, 40
      %v2955 = vpop.permute.xlu0 %2954
      %2956 = vrot.lane.b32.xlu0 %v2481, 40
      %v2957 = vpop.permute.xlu0 %2956
      %2958 = vrot.lane.b32.xlu0 %v2483, 40
      %v2959 = vpop.permute.xlu0 %2958
      %2960 = vrot.lane.b32.xlu0 %v2486, 40
      %v2961 = vpop.permute.xlu0 %2960
      %2962 = vrot.lane.b32.xlu0 %v2488, 40
      %v2963 = vpop.permute.xlu0 %2962
      %2964 = vrot.lane.b32.xlu0 %v2491, 40
      %v2965 = vpop.permute.xlu0 %2964
      %2966 = vrot.lane.b32.xlu0 %v2493, 40
      %v2967 = vpop.permute.xlu0 %2966
      %2968 = vrot.lane.b32.xlu0 %v2496, 40
      %v2969 = vpop.permute.xlu0 %2968
      %2970 = vrot.lane.b32.xlu0 %v2498, 40
      %v2971 = vpop.permute.xlu0 %2970
      %2972 = vrot.lane.b32.xlu0 %v2501, 40
      %v2973 = vpop.permute.xlu0 %2972
      %2974 = vrot.lane.b32.xlu0 %v2503, 40
      %v2975 = vpop.permute.xlu0 %2974
      %2976 = vrot.lane.b32.xlu0 %v2506, 40
      %v2977 = vpop.permute.xlu0 %2976
      %2978 = vrot.lane.b32.xlu0 %v2508, 40
      %v2979 = vpop.permute.xlu0 %2978
      %2980 = vrot.lane.b32.xlu0 %v2511, 40
      %v2981 = vpop.permute.xlu0 %2980
      %2982 = vrot.lane.b32.xlu0 %v2513, 40
      %v2983 = vpop.permute.xlu0 %2982
      %2984 = vrot.lane.b32.xlu0 %v2524, 40
      %v2985 = vpop.permute.xlu0 %2984
      %2986 = vrot.lane.b32.xlu0 %v2526, 40
      %v2987 = vpop.permute.xlu0 %2986
      %3020 = vrot.lane.b32.xlu0 %v2258, 48
      %v3021 = vpop.permute.xlu0 %3020
      %3022 = vrot.lane.b32.xlu0 %v2259, 48
      %v3023 = vpop.permute.xlu0 %3022
      %3024 = vrot.lane.b32.xlu0 %v2261, 48
      %v3025 = vpop.permute.xlu0 %3024
      %3026 = vrot.lane.b32.xlu0 %v2262, 48
      %v3027 = vpop.permute.xlu0 %3026
      %3028 = vrot.lane.b32.xlu0 %v2264, 48
      %v3029 = vpop.permute.xlu0 %3028
      %3030 = vrot.lane.b32.xlu0 %v2265, 48
      %v3031 = vpop.permute.xlu0 %3030
      %3032 = vrot.lane.b32.xlu0 %v2267, 48
      %v3033 = vpop.permute.xlu0 %3032
      %3034 = vrot.lane.b32.xlu0 %v2268, 48
      %v3035 = vpop.permute.xlu0 %3034
      %3036 = vrot.lane.b32.xlu0 %v2270, 48
      %v3037 = vpop.permute.xlu0 %3036
      %3038 = vrot.lane.b32.xlu0 %v2271, 48
      %v3039 = vpop.permute.xlu0 %3038
      %3040 = vrot.lane.b32.xlu0 %v2273, 48
      %v3041 = vpop.permute.xlu0 %3040
      %3042 = vrot.lane.b32.xlu0 %v2274, 48
      %v3043 = vpop.permute.xlu0 %3042
      %3044 = vrot.lane.b32.xlu0 %v2276, 48
      %v3045 = vpop.permute.xlu0 %3044
      %3046 = vrot.lane.b32.xlu0 %v2277, 48
      %v3047 = vpop.permute.xlu0 %3046
      %3048 = vrot.lane.b32.xlu0 %v2279, 48
      %v3049 = vpop.permute.xlu0 %3048
      %3050 = vrot.lane.b32.xlu0 %v2280, 48
      %v3051 = vpop.permute.xlu0 %3050
      %3052 = vrot.lane.b32.xlu0 %v2282, 48
      %v3053 = vpop.permute.xlu0 %3052
      %3054 = vrot.lane.b32.xlu0 %v2283, 48
      %v3055 = vpop.permute.xlu0 %3054
      %3056 = vrot.lane.b32.xlu0 %v2285, 48
      %v3057 = vpop.permute.xlu0 %3056
      %3058 = vrot.lane.b32.xlu0 %v2286, 48
      %v3059 = vpop.permute.xlu0 %3058
      %3060 = vrot.lane.b32.xlu0 %v2288, 48
      %v3061 = vpop.permute.xlu0 %3060
      %3062 = vrot.lane.b32.xlu0 %v2289, 48
      %v3063 = vpop.permute.xlu0 %3062
      %3064 = vrot.lane.b32.xlu0 %v2291, 48
      %v3065 = vpop.permute.xlu0 %3064
      %3066 = vrot.lane.b32.xlu0 %v2292, 48
      %v3067 = vpop.permute.xlu0 %3066
      %3068 = vrot.lane.b32.xlu0 %v2294, 48
      %v3069 = vpop.permute.xlu0 %3068
      %3070 = vrot.lane.b32.xlu0 %v2295, 48
      %v3071 = vpop.permute.xlu0 %3070
      %3072 = vrot.lane.b32.xlu0 %v2297, 48
      %v3073 = vpop.permute.xlu0 %3072
      %3074 = vrot.lane.b32.xlu0 %v2298, 48
      %v3075 = vpop.permute.xlu0 %3074
      %3076 = vrot.lane.b32.xlu0 %v2300, 48
      %v3077 = vpop.permute.xlu0 %3076
      %3078 = vrot.lane.b32.xlu0 %v2301, 48
      %v3079 = vpop.permute.xlu0 %3078
      %3080 = vrot.lane.b32.xlu0 %v2303, 48
      %v3081 = vpop.permute.xlu0 %3080
      %3082 = vrot.lane.b32.xlu0 %v2304, 48
      %v3083 = vpop.permute.xlu0 %3082
      %3116 = vrot.lane.b32.xlu0 %v2366, 56
      %v3117 = vpop.permute.xlu0 %3116
      %3118 = vrot.lane.b32.xlu0 %v2368, 56
      %v3119 = vpop.permute.xlu0 %3118
      %3120 = vrot.lane.b32.xlu0 %v2371, 56
      %v3121 = vpop.permute.xlu0 %3120
      %3122 = vrot.lane.b32.xlu0 %v2373, 56
      %v3123 = vpop.permute.xlu0 %3122
      %3124 = vrot.lane.b32.xlu0 %v2376, 56
      %v3125 = vpop.permute.xlu0 %3124
      %3126 = vrot.lane.b32.xlu0 %v2378, 56
      %v3127 = vpop.permute.xlu0 %3126
      %3128 = vrot.lane.b32.xlu0 %v2381, 56
      %v3129 = vpop.permute.xlu0 %3128
      %3130 = vrot.lane.b32.xlu0 %v2383, 56
      %v3131 = vpop.permute.xlu0 %3130
      %3132 = vrot.lane.b32.xlu0 %v2386, 56
      %v3133 = vpop.permute.xlu0 %3132
      %3134 = vrot.lane.b32.xlu0 %v2388, 56
      %v3135 = vpop.permute.xlu0 %3134
      %3136 = vrot.lane.b32.xlu0 %v2391, 56
      %v3137 = vpop.permute.xlu0 %3136
      %3138 = vrot.lane.b32.xlu0 %v2393, 56
      %v3139 = vpop.permute.xlu0 %3138
      %3140 = vrot.lane.b32.xlu0 %v2396, 56
      %v3141 = vpop.permute.xlu0 %3140
      %3142 = vrot.lane.b32.xlu0 %v2398, 56
      %v3143 = vpop.permute.xlu0 %3142
      %3144 = vrot.lane.b32.xlu0 %v2401, 56
      %v3145 = vpop.permute.xlu0 %3144
      %3146 = vrot.lane.b32.xlu0 %v2403, 56
      %v3147 = vpop.permute.xlu0 %3146
      %3148 = vrot.lane.b32.xlu0 %v2406, 56
      %v3149 = vpop.permute.xlu0 %3148
      %3150 = vrot.lane.b32.xlu0 %v2408, 56
      %v3151 = vpop.permute.xlu0 %3150
      %3152 = vrot.lane.b32.xlu0 %v2411, 56
      %v3153 = vpop.permute.xlu0 %3152
      %3154 = vrot.lane.b32.xlu0 %v2413, 56
      %v3155 = vpop.permute.xlu0 %3154
      %3156 = vrot.lane.b32.xlu0 %v2416, 56
      %v3157 = vpop.permute.xlu0 %3156
      %3158 = vrot.lane.b32.xlu0 %v2418, 56
      %v3159 = vpop.permute.xlu0 %3158
      %3160 = vrot.lane.b32.xlu0 %v2421, 56
      %v3161 = vpop.permute.xlu0 %3160
      %3162 = vrot.lane.b32.xlu0 %v2423, 56
      %v3163 = vpop.permute.xlu0 %3162
      %3164 = vrot.lane.b32.xlu0 %v2426, 56
      %v3165 = vpop.permute.xlu0 %3164
      %3166 = vrot.lane.b32.xlu0 %v2428, 56
      %v3167 = vpop.permute.xlu0 %3166
      %3168 = vrot.lane.b32.xlu0 %v2431, 56
      %v3169 = vpop.permute.xlu0 %3168
      %3170 = vrot.lane.b32.xlu0 %v2433, 56
      %v3171 = vpop.permute.xlu0 %3170
      %3172 = vrot.lane.b32.xlu0 %v2519, 56
      %v3173 = vpop.permute.xlu0 %3172
      %3174 = vrot.lane.b32.xlu0 %v2521, 56
      %v3175 = vpop.permute.xlu0 %3174
      %3176 = vrot.lane.b32.xlu0 %v2532, 56
      %v3177 = vpop.permute.xlu0 %3176
      %3178 = vrot.lane.b32.xlu0 %v2534, 56
      %v3179 = vpop.permute.xlu0 %3178
      %3212 = vrot.lane.b32.xlu0 %v2446, 64
      %v3213 = vpop.permute.xlu0 %3212
      %3214 = vrot.lane.b32.xlu0 %v2448, 64
      %v3215 = vpop.permute.xlu0 %3214
      %3216 = vrot.lane.b32.xlu0 %v2451, 64
      %v3217 = vpop.permute.xlu0 %3216
      %3218 = vrot.lane.b32.xlu0 %v2453, 64
      %v3219 = vpop.permute.xlu0 %3218
      %3220 = vrot.lane.b32.xlu0 %v2456, 64
      %v3221 = vpop.permute.xlu0 %3220
      %3222 = vrot.lane.b32.xlu0 %v2458, 64
      %v3223 = vpop.permute.xlu0 %3222
      %3224 = vrot.lane.b32.xlu0 %v2461, 64
      %v3225 = vpop.permute.xlu0 %3224
      %3226 = vrot.lane.b32.xlu0 %v2463, 64
      %v3227 = vpop.permute.xlu0 %3226
      %3228 = vrot.lane.b32.xlu0 %v2466, 64
      %v3229 = vpop.permute.xlu0 %3228
      %3230 = vrot.lane.b32.xlu0 %v2468, 64
      %v3231 = vpop.permute.xlu0 %3230
      %3232 = vrot.lane.b32.xlu0 %v2471, 64
      %v3233 = vpop.permute.xlu0 %3232
      %3234 = vrot.lane.b32.xlu0 %v2473, 64
      %v3235 = vpop.permute.xlu0 %3234
      %3236 = vrot.lane.b32.xlu0 %v2476, 64
      %v3237 = vpop.permute.xlu0 %3236
      %3238 = vrot.lane.b32.xlu0 %v2478, 64
      %v3239 = vpop.permute.xlu0 %3238
      %3240 = vrot.lane.b32.xlu0 %v2481, 64
      %v3241 = vpop.permute.xlu0 %3240
      %3242 = vrot.lane.b32.xlu0 %v2483, 64
      %v3243 = vpop.permute.xlu0 %3242
      %3244 = vrot.lane.b32.xlu0 %v2486, 64
      %v3245 = vpop.permute.xlu0 %3244
      %3246 = vrot.lane.b32.xlu0 %v2488, 64
      %v3247 = vpop.permute.xlu0 %3246
      %3248 = vrot.lane.b32.xlu0 %v2491, 64
      %v3249 = vpop.permute.xlu0 %3248
      %3250 = vrot.lane.b32.xlu0 %v2493, 64
      %v3251 = vpop.permute.xlu0 %3250
      %3252 = vrot.lane.b32.xlu0 %v2496, 64
      %v3253 = vpop.permute.xlu0 %3252
      %3254 = vrot.lane.b32.xlu0 %v2498, 64
      %v3255 = vpop.permute.xlu0 %3254
      %3256 = vrot.lane.b32.xlu0 %v2501, 64
      %v3257 = vpop.permute.xlu0 %3256
      %3258 = vrot.lane.b32.xlu0 %v2503, 64
      %v3259 = vpop.permute.xlu0 %3258
      %3260 = vrot.lane.b32.xlu0 %v2506, 64
      %v3261 = vpop.permute.xlu0 %3260
      %3262 = vrot.lane.b32.xlu0 %v2508, 64
      %v3263 = vpop.permute.xlu0 %3262
      %3264 = vrot.lane.b32.xlu0 %v2511, 64
      %v3265 = vpop.permute.xlu0 %3264
      %3266 = vrot.lane.b32.xlu0 %v2513, 64
      %v3267 = vpop.permute.xlu0 %3266
      %3268 = vrot.lane.b32.xlu0 %v2524, 64
      %v3269 = vpop.permute.xlu0 %3268
      %3270 = vrot.lane.b32.xlu0 %v2526, 64
      %v3271 = vpop.permute.xlu0 %3270
      %3272 = vrot.lane.b32.xlu0 %v2537, 64
      %v3273 = vpop.permute.xlu0 %3272
      %3274 = vrot.lane.b32.xlu0 %v2539, 64
      %v3275 = vpop.permute.xlu0 %3274
      %v3308 = vsel %vm436, %v2252, %v2541
      %v3309 = vsel %vm436, %v2253, %v2543
      %v3310 = vsel %vm436, %v2255, %v2545
      %v3311 = vsel %vm436, %v2256, %v2547
      %v3312 = vsel %vm436, %v2258, %v2549
      %v3313 = vsel %vm436, %v2259, %v2551
      %v3314 = vsel %vm436, %v2261, %v2553
      %v3315 = vsel %vm436, %v2262, %v2555
      %v3316 = vsel %vm436, %v2264, %v2557
      %v3317 = vsel %vm436, %v2265, %v2559
      %v3318 = vsel %vm436, %v2267, %v2561
      %v3319 = vsel %vm436, %v2268, %v2563
      %v3320 = vsel %vm436, %v2270, %v2565
      %v3321 = vsel %vm436, %v2271, %v2567
      %v3322 = vsel %vm436, %v2273, %v2569
      %v3323 = vsel %vm436, %v2274, %v2571
      %v3324 = vsel %vm436, %v2276, %v2573
      %v3325 = vsel %vm436, %v2277, %v2575
      %v3326 = vsel %vm436, %v2279, %v2577
      %v3327 = vsel %vm436, %v2280, %v2579
      %v3328 = vsel %vm436, %v2282, %v2581
      %v3329 = vsel %vm436, %v2283, %v2583
      %v3330 = vsel %vm436, %v2285, %v2585
      %v3331 = vsel %vm436, %v2286, %v2587
      %v3332 = vsel %vm436, %v2288, %v2589
      %v3333 = vsel %vm436, %v2289, %v2591
      %v3334 = vsel %vm436, %v2291, %v2593
      %v3335 = vsel %vm436, %v2292, %v2595
      %v3336 = vsel %vm436, %v2294, %v2597
      %v3337 = vsel %vm436, %v2295, %v2599
      %v3338 = vsel %vm436, %v2297, %v2601
      %v3339 = vsel %vm436, %v2298, %v2603
      %v3340 = vsel %vm492, %v3308, %v2637
      %v3341 = vsel %vm492, %v3309, %v2639
      %v3342 = vsel %vm492, %v3310, %v2641
      %v3343 = vsel %vm492, %v3311, %v2643
      %v3344 = vsel %vm492, %v3312, %v2645
      %v3345 = vsel %vm492, %v3313, %v2647
      %v3346 = vsel %vm492, %v3314, %v2649
      %v3347 = vsel %vm492, %v3315, %v2651
      %v3348 = vsel %vm492, %v3316, %v2653
      %v3349 = vsel %vm492, %v3317, %v2655
      %v3350 = vsel %vm492, %v3318, %v2657
      %v3351 = vsel %vm492, %v3319, %v2659
      %v3352 = vsel %vm492, %v3320, %v2661
      %v3353 = vsel %vm492, %v3321, %v2663
      %v3354 = vsel %vm492, %v3322, %v2665
      %v3355 = vsel %vm492, %v3323, %v2667
      %v3356 = vsel %vm492, %v3324, %v2669
      %v3357 = vsel %vm492, %v3325, %v2671
      %v3358 = vsel %vm492, %v3326, %v2673
      %v3359 = vsel %vm492, %v3327, %v2675
      %v3360 = vsel %vm492, %v3328, %v2677
      %v3361 = vsel %vm492, %v3329, %v2679
      %v3362 = vsel %vm492, %v3330, %v2681
      %v3363 = vsel %vm492, %v3331, %v2683
      %v3364 = vsel %vm492, %v3332, %v2685
      %v3365 = vsel %vm492, %v3333, %v2687
      %v3366 = vsel %vm492, %v3334, %v2689
      %v3367 = vsel %vm492, %v3335, %v2691
      %v3368 = vsel %vm492, %v3336, %v2693
      %v3369 = vsel %vm492, %v3337, %v2695
      %v3370 = vsel %vm492, %v3338, %v2697
      %v3371 = vsel %vm492, %v3339, %v2699
      %v3372 = vsel %vm1833, %v3340, %v2733
      %v3373 = vsel %vm1833, %v3341, %v2735
      %v3374 = vsel %vm1833, %v3342, %v2737
      %v3375 = vsel %vm1833, %v3343, %v2739
      %v3376 = vsel %vm1833, %v3344, %v2741
      %v3377 = vsel %vm1833, %v3345, %v2743
      %v3378 = vsel %vm1833, %v3346, %v2745
      %v3379 = vsel %vm1833, %v3347, %v2747
      %v3380 = vsel %vm1833, %v3348, %v2749
      %v3381 = vsel %vm1833, %v3349, %v2751
      %v3382 = vsel %vm1833, %v3350, %v2753
      %v3383 = vsel %vm1833, %v3351, %v2755
      %v3384 = vsel %vm1833, %v3352, %v2757
      %v3385 = vsel %vm1833, %v3353, %v2759
      %v3386 = vsel %vm1833, %v3354, %v2761
      %v3387 = vsel %vm1833, %v3355, %v2763
      %v3388 = vsel %vm1833, %v3356, %v2765
      %v3389 = vsel %vm1833, %v3357, %v2767
      %v3390 = vsel %vm1833, %v3358, %v2769
      %v3391 = vsel %vm1833, %v3359, %v2771
      %v3392 = vsel %vm1833, %v3360, %v2773
      %v3393 = vsel %vm1833, %v3361, %v2775
      %v3394 = vsel %vm1833, %v3362, %v2777
      %v3395 = vsel %vm1833, %v3363, %v2779
      %v3396 = vsel %vm1833, %v3364, %v2781
      %v3397 = vsel %vm1833, %v3365, %v2783
      %v3398 = vsel %vm1833, %v3366, %v2785
      %v3399 = vsel %vm1833, %v3367, %v2787
      %v3400 = vsel %vm1833, %v3368, %v2789
      %v3401 = vsel %vm1833, %v3369, %v2791
      %v3402 = vsel %vm1833, %v3370, %v2793
      %v3403 = vsel %vm1833, %v3371, %v2795
      %v3404 = vsel %vm1899, %v3372, %v2829
      %v3405 = vsel %vm1899, %v3373, %v2831
      %v3406 = vsel %vm1899, %v3374, %v2833
      %v3407 = vsel %vm1899, %v3375, %v2835
      %v3408 = vsel %vm1899, %v3376, %v2837
      %v3409 = vsel %vm1899, %v3377, %v2839
      %v3410 = vsel %vm1899, %v3378, %v2841
      %v3411 = vsel %vm1899, %v3379, %v2843
      %v3412 = vsel %vm1899, %v3380, %v2845
      %v3413 = vsel %vm1899, %v3381, %v2847
      %v3414 = vsel %vm1899, %v3382, %v2849
      %v3415 = vsel %vm1899, %v3383, %v2851
      %v3416 = vsel %vm1899, %v3384, %v2853
      %v3417 = vsel %vm1899, %v3385, %v2855
      %v3418 = vsel %vm1899, %v3386, %v2857
      %v3419 = vsel %vm1899, %v3387, %v2859
      %v3420 = vsel %vm1899, %v3388, %v2861
      %v3421 = vsel %vm1899, %v3389, %v2863
      %v3422 = vsel %vm1899, %v3390, %v2865
      %v3423 = vsel %vm1899, %v3391, %v2867
      %v3424 = vsel %vm1899, %v3392, %v2869
      %v3425 = vsel %vm1899, %v3393, %v2871
      %v3426 = vsel %vm1899, %v3394, %v2873
      %v3427 = vsel %vm1899, %v3395, %v2875
      %v3428 = vsel %vm1899, %v3396, %v2877
      %v3429 = vsel %vm1899, %v3397, %v2879
      %v3430 = vsel %vm1899, %v3398, %v2881
      %v3431 = vsel %vm1899, %v3399, %v2883
      %v3432 = vsel %vm1899, %v3400, %v2885
      %v3433 = vsel %vm1899, %v3401, %v2887
      %v3434 = vsel %vm1899, %v3402, %v2889
      %v3435 = vsel %vm1899, %v3403, %v2891
      %vm3436 = vcmask 326656
      %v3437 = vsel %vm3436, %v3404, %v2925
      %v3438 = vsel %vm3436, %v3405, %v2927
      %v3439 = vsel %vm3436, %v3406, %v2929
      %v3440 = vsel %vm3436, %v3407, %v2931
      %v3441 = vsel %vm3436, %v3408, %v2933
      %v3442 = vsel %vm3436, %v3409, %v2935
      %v3443 = vsel %vm3436, %v3410, %v2937
      %v3444 = vsel %vm3436, %v3411, %v2939
      %v3445 = vsel %vm3436, %v3412, %v2941
      %v3446 = vsel %vm3436, %v3413, %v2943
      %v3447 = vsel %vm3436, %v3414, %v2945
      %v3448 = vsel %vm3436, %v3415, %v2947
      %v3449 = vsel %vm3436, %v3416, %v2949
      %v3450 = vsel %vm3436, %v3417, %v2951
      %v3451 = vsel %vm3436, %v3418, %v2953
      %v3452 = vsel %vm3436, %v3419, %v2955
      %v3453 = vsel %vm3436, %v3420, %v2957
      %v3454 = vsel %vm3436, %v3421, %v2959
      %v3455 = vsel %vm3436, %v3422, %v2961
      %v3456 = vsel %vm3436, %v3423, %v2963
      %v3457 = vsel %vm3436, %v3424, %v2965
      %v3458 = vsel %vm3436, %v3425, %v2967
      %v3459 = vsel %vm3436, %v3426, %v2969
      %v3460 = vsel %vm3436, %v3427, %v2971
      %v3461 = vsel %vm3436, %v3428, %v2973
      %v3462 = vsel %vm3436, %v3429, %v2975
      %v3463 = vsel %vm3436, %v3430, %v2977
      %v3464 = vsel %vm3436, %v3431, %v2979
      %v3465 = vsel %vm3436, %v3432, %v2981
      %v3466 = vsel %vm3436, %v3433, %v2983
      %v3467 = vsel %vm3436, %v3434, %v2985
      %v3468 = vsel %vm3436, %v3435, %v2987
      %vm3469 = vcmask 392192
      %v3470 = vsel %vm3469, %v3437, %v3021
      %v3471 = vsel %vm3469, %v3438, %v3023
      %v3472 = vsel %vm3469, %v3439, %v3025
      %v3473 = vsel %vm3469, %v3440, %v3027
      %v3474 = vsel %vm3469, %v3441, %v3029
      %v3475 = vsel %vm3469, %v3442, %v3031
      %v3476 = vsel %vm3469, %v3443, %v3033
      %v3477 = vsel %vm3469, %v3444, %v3035
      %v3478 = vsel %vm3469, %v3445, %v3037
      %v3479 = vsel %vm3469, %v3446, %v3039
      %v3480 = vsel %vm3469, %v3447, %v3041
      %v3481 = vsel %vm3469, %v3448, %v3043
      %v3482 = vsel %vm3469, %v3449, %v3045
      %v3483 = vsel %vm3469, %v3450, %v3047
      %v3484 = vsel %vm3469, %v3451, %v3049
      %v3485 = vsel %vm3469, %v3452, %v3051
      %v3486 = vsel %vm3469, %v3453, %v3053
      %v3487 = vsel %vm3469, %v3454, %v3055
      %v3488 = vsel %vm3469, %v3455, %v3057
      %v3489 = vsel %vm3469, %v3456, %v3059
      %v3490 = vsel %vm3469, %v3457, %v3061
      %v3491 = vsel %vm3469, %v3458, %v3063
      %v3492 = vsel %vm3469, %v3459, %v3065
      %v3493 = vsel %vm3469, %v3460, %v3067
      %v3494 = vsel %vm3469, %v3461, %v3069
      %v3495 = vsel %vm3469, %v3462, %v3071
      %v3496 = vsel %vm3469, %v3463, %v3073
      %v3497 = vsel %vm3469, %v3464, %v3075
      %v3498 = vsel %vm3469, %v3465, %v3077
      %v3499 = vsel %vm3469, %v3466, %v3079
      %v3500 = vsel %vm3469, %v3467, %v3081
      %v3501 = vsel %vm3469, %v3468, %v3083
      %vm3502 = vcmask 457728
      %v3503 = vsel %vm3502, %v3470, %v3117
      %v3504 = vsel %vm3502, %v3471, %v3119
      %v3505 = vsel %vm3502, %v3472, %v3121
      %v3506 = vsel %vm3502, %v3473, %v3123
      %v3507 = vsel %vm3502, %v3474, %v3125
      %v3508 = vsel %vm3502, %v3475, %v3127
      %v3509 = vsel %vm3502, %v3476, %v3129
      %v3510 = vsel %vm3502, %v3477, %v3131
      %v3511 = vsel %vm3502, %v3478, %v3133
      %v3512 = vsel %vm3502, %v3479, %v3135
      %v3513 = vsel %vm3502, %v3480, %v3137
      %v3514 = vsel %vm3502, %v3481, %v3139
      %v3515 = vsel %vm3502, %v3482, %v3141
      %v3516 = vsel %vm3502, %v3483, %v3143
      %v3517 = vsel %vm3502, %v3484, %v3145
      %v3518 = vsel %vm3502, %v3485, %v3147
      %v3519 = vsel %vm3502, %v3486, %v3149
      %v3520 = vsel %vm3502, %v3487, %v3151
      %v3521 = vsel %vm3502, %v3488, %v3153
      %v3522 = vsel %vm3502, %v3489, %v3155
      %v3523 = vsel %vm3502, %v3490, %v3157
      %v3524 = vsel %vm3502, %v3491, %v3159
      %v3525 = vsel %vm3502, %v3492, %v3161
      %v3526 = vsel %vm3502, %v3493, %v3163
      %v3527 = vsel %vm3502, %v3494, %v3165
      %v3528 = vsel %vm3502, %v3495, %v3167
      %v3529 = vsel %vm3502, %v3496, %v3169
      %v3530 = vsel %vm3502, %v3497, %v3171
      %v3531 = vsel %vm3502, %v3498, %v3173
      %v3532 = vsel %vm3502, %v3499, %v3175
      %v3533 = vsel %vm3502, %v3500, %v3177
      %v3534 = vsel %vm3502, %v3501, %v3179
      %vm3535 = vcmask 523264
      %v3536 = vsel %vm3535, %v3503, %v3213
      %v3537 = vsel %vm3535, %v3504, %v3215
      %v3538 = vsel %vm3535, %v3505, %v3217
      %v3539 = vsel %vm3535, %v3506, %v3219
      %v3540 = vsel %vm3535, %v3507, %v3221
      %v3541 = vsel %vm3535, %v3508, %v3223
      %v3542 = vsel %vm3535, %v3509, %v3225
      %v3543 = vsel %vm3535, %v3510, %v3227
      %v3544 = vsel %vm3535, %v3511, %v3229
      %v3545 = vsel %vm3535, %v3512, %v3231
      %v3546 = vsel %vm3535, %v3513, %v3233
      %v3547 = vsel %vm3535, %v3514, %v3235
      %v3548 = vsel %vm3535, %v3515, %v3237
      %v3549 = vsel %vm3535, %v3516, %v3239
      %v3550 = vsel %vm3535, %v3517, %v3241
      %v3551 = vsel %vm3535, %v3518, %v3243
      %v3552 = vsel %vm3535, %v3519, %v3245
      %v3553 = vsel %vm3535, %v3520, %v3247
      %v3554 = vsel %vm3535, %v3521, %v3249
      %v3555 = vsel %vm3535, %v3522, %v3251
      %v3556 = vsel %vm3535, %v3523, %v3253
      %v3557 = vsel %vm3535, %v3524, %v3255
      %v3558 = vsel %vm3535, %v3525, %v3257
      %v3559 = vsel %vm3535, %v3526, %v3259
      %v3560 = vsel %vm3535, %v3527, %v3261
      %v3561 = vsel %vm3535, %v3528, %v3263
      %v3562 = vsel %vm3535, %v3529, %v3265
      %v3563 = vsel %vm3535, %v3530, %v3267
      %v3564 = vsel %vm3535, %v3531, %v3269
      %v3565 = vsel %vm3535, %v3532, %v3271
      %v3566 = vsel %vm3535, %v3533, %v3273
      %v3567 = vsel %vm3535, %v3534, %v3275
      %v3568 = vld [vmem:[%s8] sm:$0xff]
      %v3569 = vld [vmem:[%s8 + $0x8] sm:$0xff]
      %v3570 = vld [vmem:[%s8 + $0x10] sm:$0xff]
      %v3571 = vld [vmem:[%s8 + $0x18] sm:$0xff]
      %v3572 = vld [vmem:[%s8 + $0x20] sm:$0xff]
      %v3573 = vld [vmem:[%s8 + $0x28] sm:$0xff]
      %v3574 = vld [vmem:[%s8 + $0x30] sm:$0xff]
      %v3575 = vld [vmem:[%s8 + $0x38] sm:$0xff]
      %v3576 = vld [vmem:[%s8 + $0x40] sm:$0xff]
      %v3577 = vld [vmem:[%s9] sm:$0x1]
      %v3579 = vperm.slane %v3577, 0
      %vm3581 = vcmask 588800
      %v3583 = vsel %vm3581, %v3536, 0
      %v3586 = vsel %vm3581, %v3537, 0
      %v3589 = vsel %vm3581, %v3538, 0
      %v3592 = vsel %vm3581, %v3539, 0
      %v3595 = vsel %vm3581, %v3540, 0
      %v3598 = vsel %vm3581, %v3541, 0
      %v3601 = vsel %vm3581, %v3542, 0
      %v3604 = vsel %vm3581, %v3543, 0
      %v3607 = vsel %vm3581, %v3544, 0
      %v3610 = vsel %vm3581, %v3545, 0
      %v3613 = vsel %vm3581, %v3546, 0
      %v3616 = vsel %vm3581, %v3547, 0
      %v3619 = vsel %vm3581, %v3548, 0
      %v3622 = vsel %vm3581, %v3549, 0
      %v3625 = vsel %vm3581, %v3550, 0
      %v3628 = vsel %vm3581, %v3551, 0
      %v3631 = vsel %vm3581, %v3552, 0
      %v3634 = vsel %vm3581, %v3553, 0
      %v3637 = vsel %vm3581, %v3554, 0
      %v3640 = vsel %vm3581, %v3555, 0
      %v3643 = vsel %vm3581, %v3556, 0
      %v3646 = vsel %vm3581, %v3557, 0
      %v3649 = vsel %vm3581, %v3558, 0
      %v3652 = vsel %vm3581, %v3559, 0
      %v3655 = vsel %vm3581, %v3560, 0
      %v3658 = vsel %vm3581, %v3561, 0
      %v3661 = vsel %vm3581, %v3562, 0
      %v3664 = vsel %vm3581, %v3563, 0
      %v3667 = vsel %vm3581, %v3564, 0
      %v3670 = vsel %vm3581, %v3565, 0
      %v3673 = vsel %vm3581, %v3566, 0
      %v3676 = vsel %vm3581, %v3567, 0
      %3678 = vmatpush.msra.mxu0 0.0
      %3679 = vmatpush.msra.mxu0 0.0
      %3680 = vmatpush.msra.mxu0 0.0
      %3681 = vmatpush.msra.mxu0 0.0
      %3682 = vmatpush.msra.mxu0 0.0
      %3683 = vmatpush.msra.mxu0 0.0
      %3684 = vmatpush.msra.mxu0 0.0
      %3685 = vmatpush.msra.mxu0 %v3576
      %3686 = vmatpush.msra.mxu0 %v3575
      %3687 = vmatpush.msra.mxu0 %v3574
      %3688 = vmatpush.msra.mxu0 %v3573
      %3689 = vmatpush.msra.mxu0 %v3572
      %3690 = vmatpush.msra.mxu0 %v3571
      %3691 = vmatpush.msra.mxu0 %v3570
      %3692 = vmatpush.msra.mxu0 %v3569
      %3693 = vmatpush.msra.mxu0 %v3568
      %3694 = vmatmul.f32.gmra.mxu0 %v3583
      %v3695 = vpop.f32.mrf.mxu0
      %v3696 = vadd.f32 %v3579, %v3695
      %3697 = vmatmul.f32.gmra.mxu0 %v3586
      %v3698 = vpop.f32.mrf.mxu0
      %v3699 = vadd.f32 %v3579, %v3698
      %3700 = vmatmul.f32.gmra.mxu0 %v3589
      %v3701 = vpop.f32.mrf.mxu0
      %v3702 = vadd.f32 %v3579, %v3701
      %3703 = vmatmul.f32.gmra.mxu0 %v3592
      %v3704 = vpop.f32.mrf.mxu0
      %v3705 = vadd.f32 %v3579, %v3704
      %3706 = vmatmul.f32.gmra.mxu0 %v3595
      %v3707 = vpop.f32.mrf.mxu0
      %v3708 = vadd.f32 %v3579, %v3707
      %3709 = vmatmul.f32.gmra.mxu0 %v3598
      %v3710 = vpop.f32.mrf.mxu0
      %v3711 = vadd.f32 %v3579, %v3710
      %3712 = vmatmul.f32.gmra.mxu0 %v3601
      %v3713 = vpop.f32.mrf.mxu0
      %v3714 = vadd.f32 %v3579, %v3713
      %3715 = vmatmul.f32.gmra.mxu0 %v3604
      %v3716 = vpop.f32.mrf.mxu0
      %v3717 = vadd.f32 %v3579, %v3716
      %3718 = vmatmul.f32.gmra.mxu0 %v3607
      %v3719 = vpop.f32.mrf.mxu0
      %v3720 = vadd.f32 %v3579, %v3719
      %3721 = vmatmul.f32.gmra.mxu0 %v3610
      %v3722 = vpop.f32.mrf.mxu0
      %v3723 = vadd.f32 %v3579, %v3722
      %3724 = vmatmul.f32.gmra.mxu0 %v3613
      %v3725 = vpop.f32.mrf.mxu0
      %v3726 = vadd.f32 %v3579, %v3725
      %3727 = vmatmul.f32.gmra.mxu0 %v3616
      %v3728 = vpop.f32.mrf.mxu0
      %v3729 = vadd.f32 %v3579, %v3728
      %3730 = vmatmul.f32.gmra.mxu0 %v3619
      %v3731 = vpop.f32.mrf.mxu0
      %v3732 = vadd.f32 %v3579, %v3731
      %3733 = vmatmul.f32.gmra.mxu0 %v3622
      %v3734 = vpop.f32.mrf.mxu0
      %v3735 = vadd.f32 %v3579, %v3734
      %3736 = vmatmul.f32.gmra.mxu0 %v3625
      %v3737 = vpop.f32.mrf.mxu0
      %v3738 = vadd.f32 %v3579, %v3737
      %3739 = vmatmul.f32.gmra.mxu0 %v3628
      %v3740 = vpop.f32.mrf.mxu0
      %v3741 = vadd.f32 %v3579, %v3740
      %3742 = vmatmul.f32.gmra.mxu0 %v3631
      %v3743 = vpop.f32.mrf.mxu0
      %v3744 = vadd.f32 %v3579, %v3743
      %3745 = vmatmul.f32.gmra.mxu0 %v3634
      %v3746 = vpop.f32.mrf.mxu0
      %v3747 = vadd.f32 %v3579, %v3746
      %3748 = vmatmul.f32.gmra.mxu0 %v3637
      %v3749 = vpop.f32.mrf.mxu0
      %v3750 = vadd.f32 %v3579, %v3749
      %3751 = vmatmul.f32.gmra.mxu0 %v3640
      %v3752 = vpop.f32.mrf.mxu0
      %v3753 = vadd.f32 %v3579, %v3752
      %3754 = vmatmul.f32.gmra.mxu0 %v3643
      %v3755 = vpop.f32.mrf.mxu0
      %v3756 = vadd.f32 %v3579, %v3755
      %3757 = vmatmul.f32.gmra.mxu0 %v3646
      %v3758 = vpop.f32.mrf.mxu0
      %v3759 = vadd.f32 %v3579, %v3758
      %3760 = vmatmul.f32.gmra.mxu0 %v3649
      %v3761 = vpop.f32.mrf.mxu0
      %v3762 = vadd.f32 %v3579, %v3761
      %3763 = vmatmul.f32.gmra.mxu0 %v3652
      %v3764 = vpop.f32.mrf.mxu0
      %v3765 = vadd.f32 %v3579, %v3764
      %3766 = vmatmul.f32.gmra.mxu0 %v3655
      %v3767 = vpop.f32.mrf.mxu0
      %v3768 = vadd.f32 %v3579, %v3767
      %3769 = vmatmul.f32.gmra.mxu0 %v3658
      %v3770 = vpop.f32.mrf.mxu0
      %v3771 = vadd.f32 %v3579, %v3770
      %3772 = vmatmul.f32.gmra.mxu0 %v3661
      %v3773 = vpop.f32.mrf.mxu0
      %v3774 = vadd.f32 %v3579, %v3773
      %3775 = vmatmul.f32.gmra.mxu0 %v3664
      %v3776 = vpop.f32.mrf.mxu0
      %v3777 = vadd.f32 %v3579, %v3776
      %3778 = vmatmul.f32.gmra.mxu0 %v3667
      %v3779 = vpop.f32.mrf.mxu0
      %v3780 = vadd.f32 %v3579, %v3779
      %3781 = vmatmul.f32.gmra.mxu0 %v3670
      %v3782 = vpop.f32.mrf.mxu0
      %v3783 = vadd.f32 %v3579, %v3782
      %3784 = vmatmul.f32.gmra.mxu0 %v3673
      %v3785 = vpop.f32.mrf.mxu0
      %v3786 = vadd.f32 %v3579, %v3785
      %3787 = vmatmul.f32.gmra.mxu0 %v3676
      %v3788 = vpop.f32.mrf.mxu0
      %v3789 = vadd.f32 %v3579, %v3788
      %3790 = vdwg.mxu0
      %v3791 = vmax.f32 %v2187, 0.0
      %v3792 = vmax.f32 %v2188, 0.0
      %v3793 = vmax.f32 %v2189, 0.0
      %v3794 = vmax.f32 %v2190, 0.0
      %v3795 = vmax.f32 %v2191, 0.0
      %v3796 = vmax.f32 %v2192, 0.0
      %v3797 = vmax.f32 %v2193, 0.0
      %v3798 = vmax.f32 %v2194, 0.0
      %v3799 = vmax.f32 %v2195, 0.0
      %v3800 = vmax.f32 %v2196, 0.0
      %v3801 = vmax.f32 %v2197, 0.0
      %v3802 = vmax.f32 %v2198, 0.0
      %v3803 = vmax.f32 %v2199, 0.0
      %v3804 = vmax.f32 %v2200, 0.0
      %v3805 = vmax.f32 %v2201, 0.0
      %v3806 = vmax.f32 %v2202, 0.0
      %v3807 = vmax.f32 %v2203, 0.0
      %v3808 = vmax.f32 %v2204, 0.0
      %v3809 = vmax.f32 %v2205, 0.0
      %v3810 = vmax.f32 %v2206, 0.0
      %v3811 = vmax.f32 %v2207, 0.0
      %v3812 = vmax.f32 %v2208, 0.0
      %v3813 = vmax.f32 %v2209, 0.0
      %v3814 = vmax.f32 %v2210, 0.0
      %v3815 = vmax.f32 %v2211, 0.0
      %v3816 = vmax.f32 %v2212, 0.0
      %v3817 = vmax.f32 %v2213, 0.0
      %v3818 = vmax.f32 %v2214, 0.0
      %v3819 = vmax.f32 %v2215, 0.0
      %v3820 = vmax.f32 %v2216, 0.0
      %v3821 = vmax.f32 %v2217, 0.0
      %v3822 = vmax.f32 %v2218, 0.0
      %3823 = vst.msk [vmem:[%s2219 + $0x1] sm:$0xff] %vm436, %v3791
      %3824 = vst.msk [vmem:[%s2219 + $0x9] sm:$0xff] %vm436, %v3792
      %3825 = vst.msk [vmem:[%s2219 + $0x19] sm:$0xff] %vm436, %v3793
      %3826 = vst.msk [vmem:[%s2219 + $0x21] sm:$0xff] %vm436, %v3794
      %3827 = vst.msk [vmem:[%s2219 + $0x31] sm:$0xff] %vm436, %v3795
      %3828 = vst.msk [vmem:[%s2219 + $0x39] sm:$0xff] %vm436, %v3796
      %3829 = vst.msk [vmem:[%s2219 + $0x49] sm:$0xff] %vm436, %v3797
      %3830 = vst.msk [vmem:[%s2219 + $0x51] sm:$0xff] %vm436, %v3798
      %3831 = vst.msk [vmem:[%s2219 + $0x61] sm:$0xff] %vm436, %v3799
      %3832 = vst.msk [vmem:[%s2219 + $0x69] sm:$0xff] %vm436, %v3800
      %3833 = vst.msk [vmem:[%s2219 + $0x79] sm:$0xff] %vm436, %v3801
      %3834 = vst.msk [vmem:[%s2219 + $0x81] sm:$0xff] %vm436, %v3802
      %3835 = vst.msk [vmem:[%s2219 + $0x91] sm:$0xff] %vm436, %v3803
      %3836 = vst.msk [vmem:[%s2219 + $0x99] sm:$0xff] %vm436, %v3804
      %3837 = vst.msk [vmem:[%s2219 + $0xa9] sm:$0xff] %vm436, %v3805
      %3838 = vst.msk [vmem:[%s2219 + $0xb1] sm:$0xff] %vm436, %v3806
      %3839 = vst.msk [vmem:[%s2219 + $0xc1] sm:$0xff] %vm436, %v3807
      %3840 = vst.msk [vmem:[%s2219 + $0xc9] sm:$0xff] %vm436, %v3808
      %3841 = vst.msk [vmem:[%s2219 + $0xd9] sm:$0xff] %vm436, %v3809
      %3842 = vst.msk [vmem:[%s2219 + $0xe1] sm:$0xff] %vm436, %v3810
      %3843 = vst.msk [vmem:[%s2219 + $0xf1] sm:$0xff] %vm436, %v3811
      %3844 = vst.msk [vmem:[%s2219 + $0xf9] sm:$0xff] %vm436, %v3812
      %3845 = vst.msk [vmem:[%s2219 + $0x109] sm:$0xff] %vm436, %v3813
      %3846 = vst.msk [vmem:[%s2219 + $0x111] sm:$0xff] %vm436, %v3814
      %3847 = vst.msk [vmem:[%s2219 + $0x121] sm:$0xff] %vm436, %v3815
      %3848 = vst.msk [vmem:[%s2219 + $0x129] sm:$0xff] %vm436, %v3816
      %3849 = vst.msk [vmem:[%s2219 + $0x139] sm:$0xff] %vm436, %v3817
      %3850 = vst.msk [vmem:[%s2219 + $0x141] sm:$0xff] %vm436, %v3818
      %3851 = vst.msk [vmem:[%s2219 + $0x151] sm:$0xff] %vm436, %v3819
      %3852 = vst.msk [vmem:[%s2219 + $0x159] sm:$0xff] %vm436, %v3820
      %3853 = vst.msk [vmem:[%s2219 + $0x169] sm:$0xff] %vm436, %v3821
      %3854 = vst.msk [vmem:[%s2219 + $0x171] sm:$0xff] %vm436, %v3822
      %v3855 = vld [vmem:[#allocation3] sm:$0xff]
      %v3856 = vld [vmem:[#allocation3 + $0x8] sm:$0xff]
      %v3857 = vld [vmem:[#allocation3 + $0x10] sm:$0x3]
      %v3858 = vld [vmem:[#allocation3 + $0x18] sm:$0xff]
      %v3859 = vld [vmem:[#allocation3 + $0x20] sm:$0xff]
      %v3860 = vld [vmem:[#allocation3 + $0x28] sm:$0x3]
      %v3861 = vld [vmem:[#allocation3 + $0x30] sm:$0xff]
      %v3862 = vld [vmem:[#allocation3 + $0x38] sm:$0xff]
      %v3863 = vld [vmem:[#allocation3 + $0x40] sm:$0x3]
      %v3864 = vld [vmem:[#allocation3 + $0x48] sm:$0xff]
      %v3865 = vld [vmem:[#allocation3 + $0x50] sm:$0xff]
      %v3866 = vld [vmem:[#allocation3 + $0x58] sm:$0x3]
      %v3867 = vld [vmem:[#allocation3 + $0x60] sm:$0xff]
      %v3868 = vld [vmem:[#allocation3 + $0x68] sm:$0xff]
      %v3869 = vld [vmem:[#allocation3 + $0x70] sm:$0x3]
      %v3870 = vld [vmem:[#allocation3 + $0x78] sm:$0xff]
      %v3871 = vld [vmem:[#allocation3 + $0x80] sm:$0xff]
      %v3872 = vld [vmem:[#allocation3 + $0x88] sm:$0x3]
      %v3873 = vld [vmem:[#allocation3 + $0x90] sm:$0xff]
      %v3874 = vld [vmem:[#allocation3 + $0x98] sm:$0xff]
      %v3875 = vld [vmem:[#allocation3 + $0xa0] sm:$0x3]
      %v3876 = vld [vmem:[#allocation3 + $0xa8] sm:$0xff]
      %v3877 = vld [vmem:[#allocation3 + $0xb0] sm:$0xff]
      %v3878 = vld [vmem:[#allocation3 + $0xb8] sm:$0x3]
      %v3879 = vld [vmem:[#allocation3 + $0xc0] sm:$0xff]
      %v3880 = vld [vmem:[#allocation3 + $0xc8] sm:$0xff]
      %v3881 = vld [vmem:[#allocation3 + $0xd0] sm:$0x3]
      %v3882 = vld [vmem:[#allocation3 + $0xd8] sm:$0xff]
      %v3883 = vld [vmem:[#allocation3 + $0xe0] sm:$0xff]
      %v3884 = vld [vmem:[#allocation3 + $0xe8] sm:$0x3]
      %v3885 = vld [vmem:[#allocation3 + $0xf0] sm:$0xff]
      %v3886 = vld [vmem:[#allocation3 + $0xf8] sm:$0xff]
      %v3887 = vld [vmem:[#allocation3 + $0x100] sm:$0x3]
      %v3888 = vld [vmem:[#allocation3 + $0x108] sm:$0xff]
      %v3889 = vld [vmem:[#allocation3 + $0x110] sm:$0xff]
      %v3890 = vld [vmem:[#allocation3 + $0x118] sm:$0x3]
      %v3891 = vld [vmem:[#allocation3 + $0x120] sm:$0xff]
      %v3892 = vld [vmem:[#allocation3 + $0x128] sm:$0xff]
      %v3893 = vld [vmem:[#allocation3 + $0x130] sm:$0x3]
      %v3894 = vld [vmem:[#allocation3 + $0x138] sm:$0xff]
      %v3895 = vld [vmem:[#allocation3 + $0x140] sm:$0xff]
      %v3896 = vld [vmem:[#allocation3 + $0x148] sm:$0x3]
      %v3897 = vld [vmem:[#allocation3 + $0x150] sm:$0xff]
      %v3898 = vld [vmem:[#allocation3 + $0x158] sm:$0xff]
      %v3899 = vld [vmem:[#allocation3 + $0x160] sm:$0x3]
      %v3900 = vld [vmem:[#allocation3 + $0x168] sm:$0xff]
      %v3901 = vld [vmem:[#allocation3 + $0x170] sm:$0xff]
      %v3902 = vld [vmem:[#allocation3 + $0x178] sm:$0x3]
      %v3903 = vld [vmem:[#allocation3 + $0x180] sm:$0xff]
      %v3904 = vld [vmem:[#allocation3 + $0x188] sm:$0xff]
      %v3905 = vld [vmem:[#allocation3 + $0x190] sm:$0x3]
      %v3906 = vld [vmem:[#allocation3 + $0x198] sm:$0xff]
      %v3907 = vld [vmem:[#allocation3 + $0x1a0] sm:$0xff]
      %v3908 = vld [vmem:[#allocation3 + $0x1a8] sm:$0x3]
      %v3957 = vrot.slane %v3855, 1
      %v3958 = vrot.slane %v3856, 1
      %v3959 = vsel %vm715, %v3957, %v3958
      %v3960 = vrot.slane %v3857, 1
      %v3961 = vsel %vm715, %v3958, %v3960
      %v3962 = vrot.slane %v3858, 1
      %v3963 = vrot.slane %v3859, 1
      %v3964 = vsel %vm715, %v3962, %v3963
      %v3965 = vrot.slane %v3860, 1
      %v3966 = vsel %vm715, %v3963, %v3965
      %v3967 = vrot.slane %v3861, 1
      %v3968 = vrot.slane %v3862, 1
      %v3969 = vsel %vm715, %v3967, %v3968
      %v3970 = vrot.slane %v3863, 1
      %v3971 = vsel %vm715, %v3968, %v3970
      %v3972 = vrot.slane %v3864, 1
      %v3973 = vrot.slane %v3865, 1
      %v3974 = vsel %vm715, %v3972, %v3973
      %v3975 = vrot.slane %v3866, 1
      %v3976 = vsel %vm715, %v3973, %v3975
      %v3977 = vrot.slane %v3867, 1
      %v3978 = vrot.slane %v3868, 1
      %v3979 = vsel %vm715, %v3977, %v3978
      %v3980 = vrot.slane %v3869, 1
      %v3981 = vsel %vm715, %v3978, %v3980
      %v3982 = vrot.slane %v3870, 1
      %v3983 = vrot.slane %v3871, 1
      %v3984 = vsel %vm715, %v3982, %v3983
      %v3985 = vrot.slane %v3872, 1
      %v3986 = vsel %vm715, %v3983, %v3985
      %v3987 = vrot.slane %v3873, 1
      %v3988 = vrot.slane %v3874, 1
      %v3989 = vsel %vm715, %v3987, %v3988
      %v3990 = vrot.slane %v3875, 1
      %v3991 = vsel %vm715, %v3988, %v3990
      %v3992 = vrot.slane %v3876, 1
      %v3993 = vrot.slane %v3877, 1
      %v3994 = vsel %vm715, %v3992, %v3993
      %v3995 = vrot.slane %v3878, 1
      %v3996 = vsel %vm715, %v3993, %v3995
      %v3997 = vrot.slane %v3879, 1
      %v3998 = vrot.slane %v3880, 1
      %v3999 = vsel %vm715, %v3997, %v3998
      %v4000 = vrot.slane %v3881, 1
      %v4001 = vsel %vm715, %v3998, %v4000
      %v4002 = vrot.slane %v3882, 1
      %v4003 = vrot.slane %v3883, 1
      %v4004 = vsel %vm715, %v4002, %v4003
      %v4005 = vrot.slane %v3884, 1
      %v4006 = vsel %vm715, %v4003, %v4005
      %v4007 = vrot.slane %v3885, 1
      %v4008 = vrot.slane %v3886, 1
      %v4009 = vsel %vm715, %v4007, %v4008
      %v4010 = vrot.slane %v3887, 1
      %v4011 = vsel %vm715, %v4008, %v4010
      %v4012 = vrot.slane %v3888, 1
      %v4013 = vrot.slane %v3889, 1
      %v4014 = vsel %vm715, %v4012, %v4013
      %v4015 = vrot.slane %v3890, 1
      %v4016 = vsel %vm715, %v4013, %v4015
      %v4017 = vrot.slane %v3891, 1
      %v4018 = vrot.slane %v3892, 1
      %v4019 = vsel %vm715, %v4017, %v4018
      %v4020 = vrot.slane %v3893, 1
      %v4021 = vsel %vm715, %v4018, %v4020
      %v4022 = vrot.slane %v3894, 1
      %v4023 = vrot.slane %v3895, 1
      %v4024 = vsel %vm715, %v4022, %v4023
      %v4025 = vrot.slane %v3896, 1
      %v4026 = vsel %vm715, %v4023, %v4025
      %v4027 = vrot.slane %v3897, 1
      %v4028 = vrot.slane %v3898, 1
      %v4029 = vsel %vm715, %v4027, %v4028
      %v4030 = vrot.slane %v3899, 1
      %v4031 = vsel %vm715, %v4028, %v4030
      %v4032 = vrot.slane %v3900, 1
      %v4033 = vrot.slane %v3901, 1
      %v4034 = vsel %vm715, %v4032, %v4033
      %v4035 = vrot.slane %v3902, 1
      %v4036 = vsel %vm715, %v4033, %v4035
      %v4037 = vrot.slane %v3855, 2
      %v4038 = vrot.slane %v3856, 2
      %v4039 = vsel %vm796, %v4037, %v4038
      %v4040 = vrot.slane %v3857, 2
      %v4041 = vsel %vm796, %v4038, %v4040
      %v4042 = vrot.slane %v3858, 2
      %v4043 = vrot.slane %v3859, 2
      %v4044 = vsel %vm796, %v4042, %v4043
      %v4045 = vrot.slane %v3860, 2
      %v4046 = vsel %vm796, %v4043, %v4045
      %v4047 = vrot.slane %v3861, 2
      %v4048 = vrot.slane %v3862, 2
      %v4049 = vsel %vm796, %v4047, %v4048
      %v4050 = vrot.slane %v3863, 2
      %v4051 = vsel %vm796, %v4048, %v4050
      %v4052 = vrot.slane %v3864, 2
      %v4053 = vrot.slane %v3865, 2
      %v4054 = vsel %vm796, %v4052, %v4053
      %v4055 = vrot.slane %v3866, 2
      %v4056 = vsel %vm796, %v4053, %v4055
      %v4057 = vrot.slane %v3867, 2
      %v4058 = vrot.slane %v3868, 2
      %v4059 = vsel %vm796, %v4057, %v4058
      %v4060 = vrot.slane %v3869, 2
      %v4061 = vsel %vm796, %v4058, %v4060
      %v4062 = vrot.slane %v3870, 2
      %v4063 = vrot.slane %v3871, 2
      %v4064 = vsel %vm796, %v4062, %v4063
      %v4065 = vrot.slane %v3872, 2
      %v4066 = vsel %vm796, %v4063, %v4065
      %v4067 = vrot.slane %v3873, 2
      %v4068 = vrot.slane %v3874, 2
      %v4069 = vsel %vm796, %v4067, %v4068
      %v4070 = vrot.slane %v3875, 2
      %v4071 = vsel %vm796, %v4068, %v4070
      %v4072 = vrot.slane %v3876, 2
      %v4073 = vrot.slane %v3877, 2
      %v4074 = vsel %vm796, %v4072, %v4073
      %v4075 = vrot.slane %v3878, 2
      %v4076 = vsel %vm796, %v4073, %v4075
      %v4077 = vrot.slane %v3879, 2
      %v4078 = vrot.slane %v3880, 2
      %v4079 = vsel %vm796, %v4077, %v4078
      %v4080 = vrot.slane %v3881, 2
      %v4081 = vsel %vm796, %v4078, %v4080
      %v4082 = vrot.slane %v3882, 2
      %v4083 = vrot.slane %v3883, 2
      %v4084 = vsel %vm796, %v4082, %v4083
      %v4085 = vrot.slane %v3884, 2
      %v4086 = vsel %vm796, %v4083, %v4085
      %v4087 = vrot.slane %v3885, 2
      %v4088 = vrot.slane %v3886, 2
      %v4089 = vsel %vm796, %v4087, %v4088
      %v4090 = vrot.slane %v3887, 2
      %v4091 = vsel %vm796, %v4088, %v4090
      %v4092 = vrot.slane %v3888, 2
      %v4093 = vrot.slane %v3889, 2
      %v4094 = vsel %vm796, %v4092, %v4093
      %v4095 = vrot.slane %v3890, 2
      %v4096 = vsel %vm796, %v4093, %v4095
      %v4097 = vrot.slane %v3891, 2
      %v4098 = vrot.slane %v3892, 2
      %v4099 = vsel %vm796, %v4097, %v4098
      %v4100 = vrot.slane %v3893, 2
      %v4101 = vsel %vm796, %v4098, %v4100
      %v4102 = vrot.slane %v3894, 2
      %v4103 = vrot.slane %v3895, 2
      %v4104 = vsel %vm796, %v4102, %v4103
      %v4105 = vrot.slane %v3896, 2
      %v4106 = vsel %vm796, %v4103, %v4105
      %v4107 = vrot.slane %v3897, 2
      %v4108 = vrot.slane %v3898, 2
      %v4109 = vsel %vm796, %v4107, %v4108
      %v4110 = vrot.slane %v3899, 2
      %v4111 = vsel %vm796, %v4108, %v4110
      %v4112 = vrot.slane %v3900, 2
      %v4113 = vrot.slane %v3901, 2
      %v4114 = vsel %vm796, %v4112, %v4113
      %v4115 = vrot.slane %v3902, 2
      %v4116 = vsel %vm796, %v4113, %v4115
      %v4120 = vrot.slane %v3903, 1
      %v4121 = vrot.slane %v3904, 1
      %v4122 = vsel %vm715, %v4120, %v4121
      %v4123 = vrot.slane %v3905, 1
      %v4124 = vsel %vm715, %v4121, %v4123
      %v4125 = vrot.slane %v3903, 2
      %v4126 = vrot.slane %v3904, 2
      %v4127 = vsel %vm796, %v4125, %v4126
      %v4128 = vrot.slane %v3905, 2
      %v4129 = vsel %vm796, %v4126, %v4128
      %v4133 = vrot.slane %v3906, 1
      %v4134 = vrot.slane %v3907, 1
      %v4135 = vsel %vm715, %v4133, %v4134
      %v4136 = vrot.slane %v3908, 1
      %v4137 = vsel %vm715, %v4134, %v4136
      %v4138 = vrot.slane %v3906, 2
      %v4139 = vrot.slane %v3907, 2
      %v4140 = vsel %vm796, %v4138, %v4139
      %v4141 = vrot.slane %v3908, 2
      %v4142 = vsel %vm796, %v4139, %v4141
      %4143 = vrot.lane.b32.xlu0 %v3959, 8
      %v4144 = vpop.permute.xlu0 %4143
      %4145 = vrot.lane.b32.xlu0 %v3961, 8
      %v4146 = vpop.permute.xlu0 %4145
      %4147 = vrot.lane.b32.xlu0 %v3964, 8
      %v4148 = vpop.permute.xlu0 %4147
      %4149 = vrot.lane.b32.xlu0 %v3966, 8
      %v4150 = vpop.permute.xlu0 %4149
      %4151 = vrot.lane.b32.xlu0 %v3969, 8
      %v4152 = vpop.permute.xlu0 %4151
      %4153 = vrot.lane.b32.xlu0 %v3971, 8
      %v4154 = vpop.permute.xlu0 %4153
      %4155 = vrot.lane.b32.xlu0 %v3974, 8
      %v4156 = vpop.permute.xlu0 %4155
      %4157 = vrot.lane.b32.xlu0 %v3976, 8
      %v4158 = vpop.permute.xlu0 %4157
      %4159 = vrot.lane.b32.xlu0 %v3979, 8
      %v4160 = vpop.permute.xlu0 %4159
      %4161 = vrot.lane.b32.xlu0 %v3981, 8
      %v4162 = vpop.permute.xlu0 %4161
      %4163 = vrot.lane.b32.xlu0 %v3984, 8
      %v4164 = vpop.permute.xlu0 %4163
      %4165 = vrot.lane.b32.xlu0 %v3986, 8
      %v4166 = vpop.permute.xlu0 %4165
      %4167 = vrot.lane.b32.xlu0 %v3989, 8
      %v4168 = vpop.permute.xlu0 %4167
      %4169 = vrot.lane.b32.xlu0 %v3991, 8
      %v4170 = vpop.permute.xlu0 %4169
      %4171 = vrot.lane.b32.xlu0 %v3994, 8
      %v4172 = vpop.permute.xlu0 %4171
      %4173 = vrot.lane.b32.xlu0 %v3996, 8
      %v4174 = vpop.permute.xlu0 %4173
      %4175 = vrot.lane.b32.xlu0 %v3999, 8
      %v4176 = vpop.permute.xlu0 %4175
      %4177 = vrot.lane.b32.xlu0 %v4001, 8
      %v4178 = vpop.permute.xlu0 %4177
      %4179 = vrot.lane.b32.xlu0 %v4004, 8
      %v4180 = vpop.permute.xlu0 %4179
      %4181 = vrot.lane.b32.xlu0 %v4006, 8
      %v4182 = vpop.permute.xlu0 %4181
      %4183 = vrot.lane.b32.xlu0 %v4009, 8
      %v4184 = vpop.permute.xlu0 %4183
      %4185 = vrot.lane.b32.xlu0 %v4011, 8
      %v4186 = vpop.permute.xlu0 %4185
      %4187 = vrot.lane.b32.xlu0 %v4014, 8
      %v4188 = vpop.permute.xlu0 %4187
      %4189 = vrot.lane.b32.xlu0 %v4016, 8
      %v4190 = vpop.permute.xlu0 %4189
      %4191 = vrot.lane.b32.xlu0 %v4019, 8
      %v4192 = vpop.permute.xlu0 %4191
      %4193 = vrot.lane.b32.xlu0 %v4021, 8
      %v4194 = vpop.permute.xlu0 %4193
      %4195 = vrot.lane.b32.xlu0 %v4024, 8
      %v4196 = vpop.permute.xlu0 %4195
      %4197 = vrot.lane.b32.xlu0 %v4026, 8
      %v4198 = vpop.permute.xlu0 %4197
      %4199 = vrot.lane.b32.xlu0 %v4029, 8
      %v4200 = vpop.permute.xlu0 %4199
      %4201 = vrot.lane.b32.xlu0 %v4031, 8
      %v4202 = vpop.permute.xlu0 %4201
      %4203 = vrot.lane.b32.xlu0 %v4034, 8
      %v4204 = vpop.permute.xlu0 %4203
      %4205 = vrot.lane.b32.xlu0 %v4036, 8
      %v4206 = vpop.permute.xlu0 %4205
      %4239 = vrot.lane.b32.xlu0 %v4039, 16
      %v4240 = vpop.permute.xlu0 %4239
      %4241 = vrot.lane.b32.xlu0 %v4041, 16
      %v4242 = vpop.permute.xlu0 %4241
      %4243 = vrot.lane.b32.xlu0 %v4044, 16
      %v4244 = vpop.permute.xlu0 %4243
      %4245 = vrot.lane.b32.xlu0 %v4046, 16
      %v4246 = vpop.permute.xlu0 %4245
      %4247 = vrot.lane.b32.xlu0 %v4049, 16
      %v4248 = vpop.permute.xlu0 %4247
      %4249 = vrot.lane.b32.xlu0 %v4051, 16
      %v4250 = vpop.permute.xlu0 %4249
      %4251 = vrot.lane.b32.xlu0 %v4054, 16
      %v4252 = vpop.permute.xlu0 %4251
      %4253 = vrot.lane.b32.xlu0 %v4056, 16
      %v4254 = vpop.permute.xlu0 %4253
      %4255 = vrot.lane.b32.xlu0 %v4059, 16
      %v4256 = vpop.permute.xlu0 %4255
      %4257 = vrot.lane.b32.xlu0 %v4061, 16
      %v4258 = vpop.permute.xlu0 %4257
      %4259 = vrot.lane.b32.xlu0 %v4064, 16
      %v4260 = vpop.permute.xlu0 %4259
      %4261 = vrot.lane.b32.xlu0 %v4066, 16
      %v4262 = vpop.permute.xlu0 %4261
      %4263 = vrot.lane.b32.xlu0 %v4069, 16
      %v4264 = vpop.permute.xlu0 %4263
      %4265 = vrot.lane.b32.xlu0 %v4071, 16
      %v4266 = vpop.permute.xlu0 %4265
      %4267 = vrot.lane.b32.xlu0 %v4074, 16
      %v4268 = vpop.permute.xlu0 %4267
      %4269 = vrot.lane.b32.xlu0 %v4076, 16
      %v4270 = vpop.permute.xlu0 %4269
      %4271 = vrot.lane.b32.xlu0 %v4079, 16
      %v4272 = vpop.permute.xlu0 %4271
      %4273 = vrot.lane.b32.xlu0 %v4081, 16
      %v4274 = vpop.permute.xlu0 %4273
      %4275 = vrot.lane.b32.xlu0 %v4084, 16
      %v4276 = vpop.permute.xlu0 %4275
      %4277 = vrot.lane.b32.xlu0 %v4086, 16
      %v4278 = vpop.permute.xlu0 %4277
      %4279 = vrot.lane.b32.xlu0 %v4089, 16
      %v4280 = vpop.permute.xlu0 %4279
      %4281 = vrot.lane.b32.xlu0 %v4091, 16
      %v4282 = vpop.permute.xlu0 %4281
      %4283 = vrot.lane.b32.xlu0 %v4094, 16
      %v4284 = vpop.permute.xlu0 %4283
      %4285 = vrot.lane.b32.xlu0 %v4096, 16
      %v4286 = vpop.permute.xlu0 %4285
      %4287 = vrot.lane.b32.xlu0 %v4099, 16
      %v4288 = vpop.permute.xlu0 %4287
      %4289 = vrot.lane.b32.xlu0 %v4101, 16
      %v4290 = vpop.permute.xlu0 %4289
      %4291 = vrot.lane.b32.xlu0 %v4104, 16
      %v4292 = vpop.permute.xlu0 %4291
      %4293 = vrot.lane.b32.xlu0 %v4106, 16
      %v4294 = vpop.permute.xlu0 %4293
      %4295 = vrot.lane.b32.xlu0 %v4109, 16
      %v4296 = vpop.permute.xlu0 %4295
      %4297 = vrot.lane.b32.xlu0 %v4111, 16
      %v4298 = vpop.permute.xlu0 %4297
      %4299 = vrot.lane.b32.xlu0 %v4114, 16
      %v4300 = vpop.permute.xlu0 %4299
      %4301 = vrot.lane.b32.xlu0 %v4116, 16
      %v4302 = vpop.permute.xlu0 %4301
      %4335 = vrot.lane.b32.xlu0 %v3858, 24
      %v4336 = vpop.permute.xlu0 %4335
      %4337 = vrot.lane.b32.xlu0 %v3859, 24
      %v4338 = vpop.permute.xlu0 %4337
      %4339 = vrot.lane.b32.xlu0 %v3861, 24
      %v4340 = vpop.permute.xlu0 %4339
      %4341 = vrot.lane.b32.xlu0 %v3862, 24
      %v4342 = vpop.permute.xlu0 %4341
      %4343 = vrot.lane.b32.xlu0 %v3864, 24
      %v4344 = vpop.permute.xlu0 %4343
      %4345 = vrot.lane.b32.xlu0 %v3865, 24
      %v4346 = vpop.permute.xlu0 %4345
      %4347 = vrot.lane.b32.xlu0 %v3867, 24
      %v4348 = vpop.permute.xlu0 %4347
      %4349 = vrot.lane.b32.xlu0 %v3868, 24
      %v4350 = vpop.permute.xlu0 %4349
      %4351 = vrot.lane.b32.xlu0 %v3870, 24
      %v4352 = vpop.permute.xlu0 %4351
      %4353 = vrot.lane.b32.xlu0 %v3871, 24
      %v4354 = vpop.permute.xlu0 %4353
      %4355 = vrot.lane.b32.xlu0 %v3873, 24
      %v4356 = vpop.permute.xlu0 %4355
      %4357 = vrot.lane.b32.xlu0 %v3874, 24
      %v4358 = vpop.permute.xlu0 %4357
      %4359 = vrot.lane.b32.xlu0 %v3876, 24
      %v4360 = vpop.permute.xlu0 %4359
      %4361 = vrot.lane.b32.xlu0 %v3877, 24
      %v4362 = vpop.permute.xlu0 %4361
      %4363 = vrot.lane.b32.xlu0 %v3879, 24
      %v4364 = vpop.permute.xlu0 %4363
      %4365 = vrot.lane.b32.xlu0 %v3880, 24
      %v4366 = vpop.permute.xlu0 %4365
      %4367 = vrot.lane.b32.xlu0 %v3882, 24
      %v4368 = vpop.permute.xlu0 %4367
      %4369 = vrot.lane.b32.xlu0 %v3883, 24
      %v4370 = vpop.permute.xlu0 %4369
      %4371 = vrot.lane.b32.xlu0 %v3885, 24
      %v4372 = vpop.permute.xlu0 %4371
      %4373 = vrot.lane.b32.xlu0 %v3886, 24
      %v4374 = vpop.permute.xlu0 %4373
      %4375 = vrot.lane.b32.xlu0 %v3888, 24
      %v4376 = vpop.permute.xlu0 %4375
      %4377 = vrot.lane.b32.xlu0 %v3889, 24
      %v4378 = vpop.permute.xlu0 %4377
      %4379 = vrot.lane.b32.xlu0 %v3891, 24
      %v4380 = vpop.permute.xlu0 %4379
      %4381 = vrot.lane.b32.xlu0 %v3892, 24
      %v4382 = vpop.permute.xlu0 %4381
      %4383 = vrot.lane.b32.xlu0 %v3894, 24
      %v4384 = vpop.permute.xlu0 %4383
      %4385 = vrot.lane.b32.xlu0 %v3895, 24
      %v4386 = vpop.permute.xlu0 %4385
      %4387 = vrot.lane.b32.xlu0 %v3897, 24
      %v4388 = vpop.permute.xlu0 %4387
      %4389 = vrot.lane.b32.xlu0 %v3898, 24
      %v4390 = vpop.permute.xlu0 %4389
      %4391 = vrot.lane.b32.xlu0 %v3900, 24
      %v4392 = vpop.permute.xlu0 %4391
      %4393 = vrot.lane.b32.xlu0 %v3901, 24
      %v4394 = vpop.permute.xlu0 %4393
      %4395 = vrot.lane.b32.xlu0 %v3903, 24
      %v4396 = vpop.permute.xlu0 %4395
      %4397 = vrot.lane.b32.xlu0 %v3904, 24
      %v4398 = vpop.permute.xlu0 %4397
      %4431 = vrot.lane.b32.xlu0 %v3964, 32
      %v4432 = vpop.permute.xlu0 %4431
      %4433 = vrot.lane.b32.xlu0 %v3966, 32
      %v4434 = vpop.permute.xlu0 %4433
      %4435 = vrot.lane.b32.xlu0 %v3969, 32
      %v4436 = vpop.permute.xlu0 %4435
      %4437 = vrot.lane.b32.xlu0 %v3971, 32
      %v4438 = vpop.permute.xlu0 %4437
      %4439 = vrot.lane.b32.xlu0 %v3974, 32
      %v4440 = vpop.permute.xlu0 %4439
      %4441 = vrot.lane.b32.xlu0 %v3976, 32
      %v4442 = vpop.permute.xlu0 %4441
      %4443 = vrot.lane.b32.xlu0 %v3979, 32
      %v4444 = vpop.permute.xlu0 %4443
      %4445 = vrot.lane.b32.xlu0 %v3981, 32
      %v4446 = vpop.permute.xlu0 %4445
      %4447 = vrot.lane.b32.xlu0 %v3984, 32
      %v4448 = vpop.permute.xlu0 %4447
      %4449 = vrot.lane.b32.xlu0 %v3986, 32
      %v4450 = vpop.permute.xlu0 %4449
      %4451 = vrot.lane.b32.xlu0 %v3989, 32
      %v4452 = vpop.permute.xlu0 %4451
      %4453 = vrot.lane.b32.xlu0 %v3991, 32
      %v4454 = vpop.permute.xlu0 %4453
      %4455 = vrot.lane.b32.xlu0 %v3994, 32
      %v4456 = vpop.permute.xlu0 %4455
      %4457 = vrot.lane.b32.xlu0 %v3996, 32
      %v4458 = vpop.permute.xlu0 %4457
      %4459 = vrot.lane.b32.xlu0 %v3999, 32
      %v4460 = vpop.permute.xlu0 %4459
      %4461 = vrot.lane.b32.xlu0 %v4001, 32
      %v4462 = vpop.permute.xlu0 %4461
      %4463 = vrot.lane.b32.xlu0 %v4004, 32
      %v4464 = vpop.permute.xlu0 %4463
      %4465 = vrot.lane.b32.xlu0 %v4006, 32
      %v4466 = vpop.permute.xlu0 %4465
      %4467 = vrot.lane.b32.xlu0 %v4009, 32
      %v4468 = vpop.permute.xlu0 %4467
      %4469 = vrot.lane.b32.xlu0 %v4011, 32
      %v4470 = vpop.permute.xlu0 %4469
      %4471 = vrot.lane.b32.xlu0 %v4014, 32
      %v4472 = vpop.permute.xlu0 %4471
      %4473 = vrot.lane.b32.xlu0 %v4016, 32
      %v4474 = vpop.permute.xlu0 %4473
      %4475 = vrot.lane.b32.xlu0 %v4019, 32
      %v4476 = vpop.permute.xlu0 %4475
      %4477 = vrot.lane.b32.xlu0 %v4021, 32
      %v4478 = vpop.permute.xlu0 %4477
      %4479 = vrot.lane.b32.xlu0 %v4024, 32
      %v4480 = vpop.permute.xlu0 %4479
      %4481 = vrot.lane.b32.xlu0 %v4026, 32
      %v4482 = vpop.permute.xlu0 %4481
      %4483 = vrot.lane.b32.xlu0 %v4029, 32
      %v4484 = vpop.permute.xlu0 %4483
      %4485 = vrot.lane.b32.xlu0 %v4031, 32
      %v4486 = vpop.permute.xlu0 %4485
      %4487 = vrot.lane.b32.xlu0 %v4034, 32
      %v4488 = vpop.permute.xlu0 %4487
      %4489 = vrot.lane.b32.xlu0 %v4036, 32
      %v4490 = vpop.permute.xlu0 %4489
      %4491 = vrot.lane.b32.xlu0 %v4122, 32
      %v4492 = vpop.permute.xlu0 %4491
      %4493 = vrot.lane.b32.xlu0 %v4124, 32
      %v4494 = vpop.permute.xlu0 %4493
      %4527 = vrot.lane.b32.xlu0 %v4044, 40
      %v4528 = vpop.permute.xlu0 %4527
      %4529 = vrot.lane.b32.xlu0 %v4046, 40
      %v4530 = vpop.permute.xlu0 %4529
      %4531 = vrot.lane.b32.xlu0 %v4049, 40
      %v4532 = vpop.permute.xlu0 %4531
      %4533 = vrot.lane.b32.xlu0 %v4051, 40
      %v4534 = vpop.permute.xlu0 %4533
      %4535 = vrot.lane.b32.xlu0 %v4054, 40
      %v4536 = vpop.permute.xlu0 %4535
      %4537 = vrot.lane.b32.xlu0 %v4056, 40
      %v4538 = vpop.permute.xlu0 %4537
      %4539 = vrot.lane.b32.xlu0 %v4059, 40
      %v4540 = vpop.permute.xlu0 %4539
      %4541 = vrot.lane.b32.xlu0 %v4061, 40
      %v4542 = vpop.permute.xlu0 %4541
      %4543 = vrot.lane.b32.xlu0 %v4064, 40
      %v4544 = vpop.permute.xlu0 %4543
      %4545 = vrot.lane.b32.xlu0 %v4066, 40
      %v4546 = vpop.permute.xlu0 %4545
      %4547 = vrot.lane.b32.xlu0 %v4069, 40
      %v4548 = vpop.permute.xlu0 %4547
      %4549 = vrot.lane.b32.xlu0 %v4071, 40
      %v4550 = vpop.permute.xlu0 %4549
      %4551 = vrot.lane.b32.xlu0 %v4074, 40
      %v4552 = vpop.permute.xlu0 %4551
      %4553 = vrot.lane.b32.xlu0 %v4076, 40
      %v4554 = vpop.permute.xlu0 %4553
      %4555 = vrot.lane.b32.xlu0 %v4079, 40
      %v4556 = vpop.permute.xlu0 %4555
      %4557 = vrot.lane.b32.xlu0 %v4081, 40
      %v4558 = vpop.permute.xlu0 %4557
      %4559 = vrot.lane.b32.xlu0 %v4084, 40
      %v4560 = vpop.permute.xlu0 %4559
      %4561 = vrot.lane.b32.xlu0 %v4086, 40
      %v4562 = vpop.permute.xlu0 %4561
      %4563 = vrot.lane.b32.xlu0 %v4089, 40
      %v4564 = vpop.permute.xlu0 %4563
      %4565 = vrot.lane.b32.xlu0 %v4091, 40
      %v4566 = vpop.permute.xlu0 %4565
      %4567 = vrot.lane.b32.xlu0 %v4094, 40
      %v4568 = vpop.permute.xlu0 %4567
      %4569 = vrot.lane.b32.xlu0 %v4096, 40
      %v4570 = vpop.permute.xlu0 %4569
      %4571 = vrot.lane.b32.xlu0 %v4099, 40
      %v4572 = vpop.permute.xlu0 %4571
      %4573 = vrot.lane.b32.xlu0 %v4101, 40
      %v4574 = vpop.permute.xlu0 %4573
      %4575 = vrot.lane.b32.xlu0 %v4104, 40
      %v4576 = vpop.permute.xlu0 %4575
      %4577 = vrot.lane.b32.xlu0 %v4106, 40
      %v4578 = vpop.permute.xlu0 %4577
      %4579 = vrot.lane.b32.xlu0 %v4109, 40
      %v4580 = vpop.permute.xlu0 %4579
      %4581 = vrot.lane.b32.xlu0 %v4111, 40
      %v4582 = vpop.permute.xlu0 %4581
      %4583 = vrot.lane.b32.xlu0 %v4114, 40
      %v4584 = vpop.permute.xlu0 %4583
      %4585 = vrot.lane.b32.xlu0 %v4116, 40
      %v4586 = vpop.permute.xlu0 %4585
      %4587 = vrot.lane.b32.xlu0 %v4127, 40
      %v4588 = vpop.permute.xlu0 %4587
      %4589 = vrot.lane.b32.xlu0 %v4129, 40
      %v4590 = vpop.permute.xlu0 %4589
      %4623 = vrot.lane.b32.xlu0 %v3861, 48
      %v4624 = vpop.permute.xlu0 %4623
      %4625 = vrot.lane.b32.xlu0 %v3862, 48
      %v4626 = vpop.permute.xlu0 %4625
      %4627 = vrot.lane.b32.xlu0 %v3864, 48
      %v4628 = vpop.permute.xlu0 %4627
      %4629 = vrot.lane.b32.xlu0 %v3865, 48
      %v4630 = vpop.permute.xlu0 %4629
      %4631 = vrot.lane.b32.xlu0 %v3867, 48
      %v4632 = vpop.permute.xlu0 %4631
      %4633 = vrot.lane.b32.xlu0 %v3868, 48
      %v4634 = vpop.permute.xlu0 %4633
      %4635 = vrot.lane.b32.xlu0 %v3870, 48
      %v4636 = vpop.permute.xlu0 %4635
      %4637 = vrot.lane.b32.xlu0 %v3871, 48
      %v4638 = vpop.permute.xlu0 %4637
      %4639 = vrot.lane.b32.xlu0 %v3873, 48
      %v4640 = vpop.permute.xlu0 %4639
      %4641 = vrot.lane.b32.xlu0 %v3874, 48
      %v4642 = vpop.permute.xlu0 %4641
      %4643 = vrot.lane.b32.xlu0 %v3876, 48
      %v4644 = vpop.permute.xlu0 %4643
      %4645 = vrot.lane.b32.xlu0 %v3877, 48
      %v4646 = vpop.permute.xlu0 %4645
      %4647 = vrot.lane.b32.xlu0 %v3879, 48
      %v4648 = vpop.permute.xlu0 %4647
      %4649 = vrot.lane.b32.xlu0 %v3880, 48
      %v4650 = vpop.permute.xlu0 %4649
      %4651 = vrot.lane.b32.xlu0 %v3882, 48
      %v4652 = vpop.permute.xlu0 %4651
      %4653 = vrot.lane.b32.xlu0 %v3883, 48
      %v4654 = vpop.permute.xlu0 %4653
      %4655 = vrot.lane.b32.xlu0 %v3885, 48
      %v4656 = vpop.permute.xlu0 %4655
      %4657 = vrot.lane.b32.xlu0 %v3886, 48
      %v4658 = vpop.permute.xlu0 %4657
      %4659 = vrot.lane.b32.xlu0 %v3888, 48
      %v4660 = vpop.permute.xlu0 %4659
      %4661 = vrot.lane.b32.xlu0 %v3889, 48
      %v4662 = vpop.permute.xlu0 %4661
      %4663 = vrot.lane.b32.xlu0 %v3891, 48
      %v4664 = vpop.permute.xlu0 %4663
      %4665 = vrot.lane.b32.xlu0 %v3892, 48
      %v4666 = vpop.permute.xlu0 %4665
      %4667 = vrot.lane.b32.xlu0 %v3894, 48
      %v4668 = vpop.permute.xlu0 %4667
      %4669 = vrot.lane.b32.xlu0 %v3895, 48
      %v4670 = vpop.permute.xlu0 %4669
      %4671 = vrot.lane.b32.xlu0 %v3897, 48
      %v4672 = vpop.permute.xlu0 %4671
      %4673 = vrot.lane.b32.xlu0 %v3898, 48
      %v4674 = vpop.permute.xlu0 %4673
      %4675 = vrot.lane.b32.xlu0 %v3900, 48
      %v4676 = vpop.permute.xlu0 %4675
      %4677 = vrot.lane.b32.xlu0 %v3901, 48
      %v4678 = vpop.permute.xlu0 %4677
      %4679 = vrot.lane.b32.xlu0 %v3903, 48
      %v4680 = vpop.permute.xlu0 %4679
      %4681 = vrot.lane.b32.xlu0 %v3904, 48
      %v4682 = vpop.permute.xlu0 %4681
      %4683 = vrot.lane.b32.xlu0 %v3906, 48
      %v4684 = vpop.permute.xlu0 %4683
      %4685 = vrot.lane.b32.xlu0 %v3907, 48
      %v4686 = vpop.permute.xlu0 %4685
      %4719 = vrot.lane.b32.xlu0 %v3969, 56
      %v4720 = vpop.permute.xlu0 %4719
      %4721 = vrot.lane.b32.xlu0 %v3971, 56
      %v4722 = vpop.permute.xlu0 %4721
      %4723 = vrot.lane.b32.xlu0 %v3974, 56
      %v4724 = vpop.permute.xlu0 %4723
      %4725 = vrot.lane.b32.xlu0 %v3976, 56
      %v4726 = vpop.permute.xlu0 %4725
      %4727 = vrot.lane.b32.xlu0 %v3979, 56
      %v4728 = vpop.permute.xlu0 %4727
      %4729 = vrot.lane.b32.xlu0 %v3981, 56
      %v4730 = vpop.permute.xlu0 %4729
      %4731 = vrot.lane.b32.xlu0 %v3984, 56
      %v4732 = vpop.permute.xlu0 %4731
      %4733 = vrot.lane.b32.xlu0 %v3986, 56
      %v4734 = vpop.permute.xlu0 %4733
      %4735 = vrot.lane.b32.xlu0 %v3989, 56
      %v4736 = vpop.permute.xlu0 %4735
      %4737 = vrot.lane.b32.xlu0 %v3991, 56
      %v4738 = vpop.permute.xlu0 %4737
      %4739 = vrot.lane.b32.xlu0 %v3994, 56
      %v4740 = vpop.permute.xlu0 %4739
      %4741 = vrot.lane.b32.xlu0 %v3996, 56
      %v4742 = vpop.permute.xlu0 %4741
      %4743 = vrot.lane.b32.xlu0 %v3999, 56
      %v4744 = vpop.permute.xlu0 %4743
      %4745 = vrot.lane.b32.xlu0 %v4001, 56
      %v4746 = vpop.permute.xlu0 %4745
      %4747 = vrot.lane.b32.xlu0 %v4004, 56
      %v4748 = vpop.permute.xlu0 %4747
      %4749 = vrot.lane.b32.xlu0 %v4006, 56
      %v4750 = vpop.permute.xlu0 %4749
      %4751 = vrot.lane.b32.xlu0 %v4009, 56
      %v4752 = vpop.permute.xlu0 %4751
      %4753 = vrot.lane.b32.xlu0 %v4011, 56
      %v4754 = vpop.permute.xlu0 %4753
      %4755 = vrot.lane.b32.xlu0 %v4014, 56
      %v4756 = vpop.permute.xlu0 %4755
      %4757 = vrot.lane.b32.xlu0 %v4016, 56
      %v4758 = vpop.permute.xlu0 %4757
      %4759 = vrot.lane.b32.xlu0 %v4019, 56
      %v4760 = vpop.permute.xlu0 %4759
      %4761 = vrot.lane.b32.xlu0 %v4021, 56
      %v4762 = vpop.permute.xlu0 %4761
      %4763 = vrot.lane.b32.xlu0 %v4024, 56
      %v4764 = vpop.permute.xlu0 %4763
      %4765 = vrot.lane.b32.xlu0 %v4026, 56
      %v4766 = vpop.permute.xlu0 %4765
      %4767 = vrot.lane.b32.xlu0 %v4029, 56
      %v4768 = vpop.permute.xlu0 %4767
      %4769 = vrot.lane.b32.xlu0 %v4031, 56
      %v4770 = vpop.permute.xlu0 %4769
      %4771 = vrot.lane.b32.xlu0 %v4034, 56
      %v4772 = vpop.permute.xlu0 %4771
      %4773 = vrot.lane.b32.xlu0 %v4036, 56
      %v4774 = vpop.permute.xlu0 %4773
      %4775 = vrot.lane.b32.xlu0 %v4122, 56
      %v4776 = vpop.permute.xlu0 %4775
      %4777 = vrot.lane.b32.xlu0 %v4124, 56
      %v4778 = vpop.permute.xlu0 %4777
      %4779 = vrot.lane.b32.xlu0 %v4135, 56
      %v4780 = vpop.permute.xlu0 %4779
      %4781 = vrot.lane.b32.xlu0 %v4137, 56
      %v4782 = vpop.permute.xlu0 %4781
      %4815 = vrot.lane.b32.xlu0 %v4049, 64
      %v4816 = vpop.permute.xlu0 %4815
      %4817 = vrot.lane.b32.xlu0 %v4051, 64
      %v4818 = vpop.permute.xlu0 %4817
      %4819 = vrot.lane.b32.xlu0 %v4054, 64
      %v4820 = vpop.permute.xlu0 %4819
      %4821 = vrot.lane.b32.xlu0 %v4056, 64
      %v4822 = vpop.permute.xlu0 %4821
      %4823 = vrot.lane.b32.xlu0 %v4059, 64
      %v4824 = vpop.permute.xlu0 %4823
      %4825 = vrot.lane.b32.xlu0 %v4061, 64
      %v4826 = vpop.permute.xlu0 %4825
      %4827 = vrot.lane.b32.xlu0 %v4064, 64
      %v4828 = vpop.permute.xlu0 %4827
      %4829 = vrot.lane.b32.xlu0 %v4066, 64
      %v4830 = vpop.permute.xlu0 %4829
      %4831 = vrot.lane.b32.xlu0 %v4069, 64
      %v4832 = vpop.permute.xlu0 %4831
      %4833 = vrot.lane.b32.xlu0 %v4071, 64
      %v4834 = vpop.permute.xlu0 %4833
      %4835 = vrot.lane.b32.xlu0 %v4074, 64
      %v4836 = vpop.permute.xlu0 %4835
      %4837 = vrot.lane.b32.xlu0 %v4076, 64
      %v4838 = vpop.permute.xlu0 %4837
      %4839 = vrot.lane.b32.xlu0 %v4079, 64
      %v4840 = vpop.permute.xlu0 %4839
      %4841 = vrot.lane.b32.xlu0 %v4081, 64
      %v4842 = vpop.permute.xlu0 %4841
      %4843 = vrot.lane.b32.xlu0 %v4084, 64
      %v4844 = vpop.permute.xlu0 %4843
      %4845 = vrot.lane.b32.xlu0 %v4086, 64
      %v4846 = vpop.permute.xlu0 %4845
      %4847 = vrot.lane.b32.xlu0 %v4089, 64
      %v4848 = vpop.permute.xlu0 %4847
      %4849 = vrot.lane.b32.xlu0 %v4091, 64
      %v4850 = vpop.permute.xlu0 %4849
      %4851 = vrot.lane.b32.xlu0 %v4094, 64
      %v4852 = vpop.permute.xlu0 %4851
      %4853 = vrot.lane.b32.xlu0 %v4096, 64
      %v4854 = vpop.permute.xlu0 %4853
      %4855 = vrot.lane.b32.xlu0 %v4099, 64
      %v4856 = vpop.permute.xlu0 %4855
      %4857 = vrot.lane.b32.xlu0 %v4101, 64
      %v4858 = vpop.permute.xlu0 %4857
      %4859 = vrot.lane.b32.xlu0 %v4104, 64
      %v4860 = vpop.permute.xlu0 %4859
      %4861 = vrot.lane.b32.xlu0 %v4106, 64
      %v4862 = vpop.permute.xlu0 %4861
      %4863 = vrot.lane.b32.xlu0 %v4109, 64
      %v4864 = vpop.permute.xlu0 %4863
      %4865 = vrot.lane.b32.xlu0 %v4111, 64
      %v4866 = vpop.permute.xlu0 %4865
      %4867 = vrot.lane.b32.xlu0 %v4114, 64
      %v4868 = vpop.permute.xlu0 %4867
      %4869 = vrot.lane.b32.xlu0 %v4116, 64
      %v4870 = vpop.permute.xlu0 %4869
      %4871 = vrot.lane.b32.xlu0 %v4127, 64
      %v4872 = vpop.permute.xlu0 %4871
      %4873 = vrot.lane.b32.xlu0 %v4129, 64
      %v4874 = vpop.permute.xlu0 %4873
      %4875 = vrot.lane.b32.xlu0 %v4140, 64
      %v4876 = vpop.permute.xlu0 %4875
      %4877 = vrot.lane.b32.xlu0 %v4142, 64
      %v4878 = vpop.permute.xlu0 %4877
      %v4911 = vsel %vm436, %v3855, %v4144
      %v4912 = vsel %vm436, %v3856, %v4146
      %v4913 = vsel %vm436, %v3858, %v4148
      %v4914 = vsel %vm436, %v3859, %v4150
      %v4915 = vsel %vm436, %v3861, %v4152
      %v4916 = vsel %vm436, %v3862, %v4154
      %v4917 = vsel %vm436, %v3864, %v4156
      %v4918 = vsel %vm436, %v3865, %v4158
      %v4919 = vsel %vm436, %v3867, %v4160
      %v4920 = vsel %vm436, %v3868, %v4162
      %v4921 = vsel %vm436, %v3870, %v4164
      %v4922 = vsel %vm436, %v3871, %v4166
      %v4923 = vsel %vm436, %v3873, %v4168
      %v4924 = vsel %vm436, %v3874, %v4170
      %v4925 = vsel %vm436, %v3876, %v4172
      %v4926 = vsel %vm436, %v3877, %v4174
      %v4927 = vsel %vm436, %v3879, %v4176
      %v4928 = vsel %vm436, %v3880, %v4178
      %v4929 = vsel %vm436, %v3882, %v4180
      %v4930 = vsel %vm436, %v3883, %v4182
      %v4931 = vsel %vm436, %v3885, %v4184
      %v4932 = vsel %vm436, %v3886, %v4186
      %v4933 = vsel %vm436, %v3888, %v4188
      %v4934 = vsel %vm436, %v3889, %v4190
      %v4935 = vsel %vm436, %v3891, %v4192
      %v4936 = vsel %vm436, %v3892, %v4194
      %v4937 = vsel %vm436, %v3894, %v4196
      %v4938 = vsel %vm436, %v3895, %v4198
      %v4939 = vsel %vm436, %v3897, %v4200
      %v4940 = vsel %vm436, %v3898, %v4202
      %v4941 = vsel %vm436, %v3900, %v4204
      %v4942 = vsel %vm436, %v3901, %v4206
      %v4943 = vsel %vm492, %v4911, %v4240
      %v4944 = vsel %vm492, %v4912, %v4242
      %v4945 = vsel %vm492, %v4913, %v4244
      %v4946 = vsel %vm492, %v4914, %v4246
      %v4947 = vsel %vm492, %v4915, %v4248
      %v4948 = vsel %vm492, %v4916, %v4250
      %v4949 = vsel %vm492, %v4917, %v4252
      %v4950 = vsel %vm492, %v4918, %v4254
      %v4951 = vsel %vm492, %v4919, %v4256
      %v4952 = vsel %vm492, %v4920, %v4258
      %v4953 = vsel %vm492, %v4921, %v4260
      %v4954 = vsel %vm492, %v4922, %v4262
      %v4955 = vsel %vm492, %v4923, %v4264
      %v4956 = vsel %vm492, %v4924, %v4266
      %v4957 = vsel %vm492, %v4925, %v4268
      %v4958 = vsel %vm492, %v4926, %v4270
      %v4959 = vsel %vm492, %v4927, %v4272
      %v4960 = vsel %vm492, %v4928, %v4274
      %v4961 = vsel %vm492, %v4929, %v4276
      %v4962 = vsel %vm492, %v4930, %v4278
      %v4963 = vsel %vm492, %v4931, %v4280
      %v4964 = vsel %vm492, %v4932, %v4282
      %v4965 = vsel %vm492, %v4933, %v4284
      %v4966 = vsel %vm492, %v4934, %v4286
      %v4967 = vsel %vm492, %v4935, %v4288
      %v4968 = vsel %vm492, %v4936, %v4290
      %v4969 = vsel %vm492, %v4937, %v4292
      %v4970 = vsel %vm492, %v4938, %v4294
      %v4971 = vsel %vm492, %v4939, %v4296
      %v4972 = vsel %vm492, %v4940, %v4298
      %v4973 = vsel %vm492, %v4941, %v4300
      %v4974 = vsel %vm492, %v4942, %v4302
      %v4975 = vsel %vm1833, %v4943, %v4336
      %v4976 = vsel %vm1833, %v4944, %v4338
      %v4977 = vsel %vm1833, %v4945, %v4340
      %v4978 = vsel %vm1833, %v4946, %v4342
      %v4979 = vsel %vm1833, %v4947, %v4344
      %v4980 = vsel %vm1833, %v4948, %v4346
      %v4981 = vsel %vm1833, %v4949, %v4348
      %v4982 = vsel %vm1833, %v4950, %v4350
      %v4983 = vsel %vm1833, %v4951, %v4352
      %v4984 = vsel %vm1833, %v4952, %v4354
      %v4985 = vsel %vm1833, %v4953, %v4356
      %v4986 = vsel %vm1833, %v4954, %v4358
      %v4987 = vsel %vm1833, %v4955, %v4360
      %v4988 = vsel %vm1833, %v4956, %v4362
      %v4989 = vsel %vm1833, %v4957, %v4364
      %v4990 = vsel %vm1833, %v4958, %v4366
      %v4991 = vsel %vm1833, %v4959, %v4368
      %v4992 = vsel %vm1833, %v4960, %v4370
      %v4993 = vsel %vm1833, %v4961, %v4372
      %v4994 = vsel %vm1833, %v4962, %v4374
      %v4995 = vsel %vm1833, %v4963, %v4376
      %v4996 = vsel %vm1833, %v4964, %v4378
      %v4997 = vsel %vm1833, %v4965, %v4380
      %v4998 = vsel %vm1833, %v4966, %v4382
      %v4999 = vsel %vm1833, %v4967, %v4384
      %v5000 = vsel %vm1833, %v4968, %v4386
      %v5001 = vsel %vm1833, %v4969, %v4388
      %v5002 = vsel %vm1833, %v4970, %v4390
      %v5003 = vsel %vm1833, %v4971, %v4392
      %v5004 = vsel %vm1833, %v4972, %v4394
      %v5005 = vsel %vm1833, %v4973, %v4396
      %v5006 = vsel %vm1833, %v4974, %v4398
      %v5007 = vsel %vm1899, %v4975, %v4432
      %v5008 = vsel %vm1899, %v4976, %v4434
      %v5009 = vsel %vm1899, %v4977, %v4436
      %v5010 = vsel %vm1899, %v4978, %v4438
      %v5011 = vsel %vm1899, %v4979, %v4440
      %v5012 = vsel %vm1899, %v4980, %v4442
      %v5013 = vsel %vm1899, %v4981, %v4444
      %v5014 = vsel %vm1899, %v4982, %v4446
      %v5015 = vsel %vm1899, %v4983, %v4448
      %v5016 = vsel %vm1899, %v4984, %v4450
      %v5017 = vsel %vm1899, %v4985, %v4452
      %v5018 = vsel %vm1899, %v4986, %v4454
      %v5019 = vsel %vm1899, %v4987, %v4456
      %v5020 = vsel %vm1899, %v4988, %v4458
      %v5021 = vsel %vm1899, %v4989, %v4460
      %v5022 = vsel %vm1899, %v4990, %v4462
      %v5023 = vsel %vm1899, %v4991, %v4464
      %v5024 = vsel %vm1899, %v4992, %v4466
      %v5025 = vsel %vm1899, %v4993, %v4468
      %v5026 = vsel %vm1899, %v4994, %v4470
      %v5027 = vsel %vm1899, %v4995, %v4472
      %v5028 = vsel %vm1899, %v4996, %v4474
      %v5029 = vsel %vm1899, %v4997, %v4476
      %v5030 = vsel %vm1899, %v4998, %v4478
      %v5031 = vsel %vm1899, %v4999, %v4480
      %v5032 = vsel %vm1899, %v5000, %v4482
      %v5033 = vsel %vm1899, %v5001, %v4484
      %v5034 = vsel %vm1899, %v5002, %v4486
      %v5035 = vsel %vm1899, %v5003, %v4488
      %v5036 = vsel %vm1899, %v5004, %v4490
      %v5037 = vsel %vm1899, %v5005, %v4492
      %v5038 = vsel %vm1899, %v5006, %v4494
      %v5039 = vsel %vm3436, %v5007, %v4528
      %v5040 = vsel %vm3436, %v5008, %v4530
      %v5041 = vsel %vm3436, %v5009, %v4532
      %v5042 = vsel %vm3436, %v5010, %v4534
      %v5043 = vsel %vm3436, %v5011, %v4536
      %v5044 = vsel %vm3436, %v5012, %v4538
      %v5045 = vsel %vm3436, %v5013, %v4540
      %v5046 = vsel %vm3436, %v5014, %v4542
      %v5047 = vsel %vm3436, %v5015, %v4544
      %v5048 = vsel %vm3436, %v5016, %v4546
      %v5049 = vsel %vm3436, %v5017, %v4548
      %v5050 = vsel %vm3436, %v5018, %v4550
      %v5051 = vsel %vm3436, %v5019, %v4552
      %v5052 = vsel %vm3436, %v5020, %v4554
      %v5053 = vsel %vm3436, %v5021, %v4556
      %v5054 = vsel %vm3436, %v5022, %v4558
      %v5055 = vsel %vm3436, %v5023, %v4560
      %v5056 = vsel %vm3436, %v5024, %v4562
      %v5057 = vsel %vm3436, %v5025, %v4564
      %v5058 = vsel %vm3436, %v5026, %v4566
      %v5059 = vsel %vm3436, %v5027, %v4568
      %v5060 = vsel %vm3436, %v5028, %v4570
      %v5061 = vsel %vm3436, %v5029, %v4572
      %v5062 = vsel %vm3436, %v5030, %v4574
      %v5063 = vsel %vm3436, %v5031, %v4576
      %v5064 = vsel %vm3436, %v5032, %v4578
      %v5065 = vsel %vm3436, %v5033, %v4580
      %v5066 = vsel %vm3436, %v5034, %v4582
      %v5067 = vsel %vm3436, %v5035, %v4584
      %v5068 = vsel %vm3436, %v5036, %v4586
      %v5069 = vsel %vm3436, %v5037, %v4588
      %v5070 = vsel %vm3436, %v5038, %v4590
      %v5071 = vsel %vm3469, %v5039, %v4624
      %v5072 = vsel %vm3469, %v5040, %v4626
      %v5073 = vsel %vm3469, %v5041, %v4628
      %v5074 = vsel %vm3469, %v5042, %v4630
      %v5075 = vsel %vm3469, %v5043, %v4632
      %v5076 = vsel %vm3469, %v5044, %v4634
      %v5077 = vsel %vm3469, %v5045, %v4636
      %v5078 = vsel %vm3469, %v5046, %v4638
      %v5079 = vsel %vm3469, %v5047, %v4640
      %v5080 = vsel %vm3469, %v5048, %v4642
      %v5081 = vsel %vm3469, %v5049, %v4644
      %v5082 = vsel %vm3469, %v5050, %v4646
      %v5083 = vsel %vm3469, %v5051, %v4648
      %v5084 = vsel %vm3469, %v5052, %v4650
      %v5085 = vsel %vm3469, %v5053, %v4652
      %v5086 = vsel %vm3469, %v5054, %v4654
      %v5087 = vsel %vm3469, %v5055, %v4656
      %v5088 = vsel %vm3469, %v5056, %v4658
      %v5089 = vsel %vm3469, %v5057, %v4660
      %v5090 = vsel %vm3469, %v5058, %v4662
      %v5091 = vsel %vm3469, %v5059, %v4664
      %v5092 = vsel %vm3469, %v5060, %v4666
      %v5093 = vsel %vm3469, %v5061, %v4668
      %v5094 = vsel %vm3469, %v5062, %v4670
      %v5095 = vsel %vm3469, %v5063, %v4672
      %v5096 = vsel %vm3469, %v5064, %v4674
      %v5097 = vsel %vm3469, %v5065, %v4676
      %v5098 = vsel %vm3469, %v5066, %v4678
      %v5099 = vsel %vm3469, %v5067, %v4680
      %v5100 = vsel %vm3469, %v5068, %v4682
      %v5101 = vsel %vm3469, %v5069, %v4684
      %v5102 = vsel %vm3469, %v5070, %v4686
      %v5103 = vsel %vm3502, %v5071, %v4720
      %v5104 = vsel %vm3502, %v5072, %v4722
      %v5105 = vsel %vm3502, %v5073, %v4724
      %v5106 = vsel %vm3502, %v5074, %v4726
      %v5107 = vsel %vm3502, %v5075, %v4728
      %v5108 = vsel %vm3502, %v5076, %v4730
      %v5109 = vsel %vm3502, %v5077, %v4732
      %v5110 = vsel %vm3502, %v5078, %v4734
      %v5111 = vsel %vm3502, %v5079, %v4736
      %v5112 = vsel %vm3502, %v5080, %v4738
      %v5113 = vsel %vm3502, %v5081, %v4740
      %v5114 = vsel %vm3502, %v5082, %v4742
      %v5115 = vsel %vm3502, %v5083, %v4744
      %v5116 = vsel %vm3502, %v5084, %v4746
      %v5117 = vsel %vm3502, %v5085, %v4748
      %v5118 = vsel %vm3502, %v5086, %v4750
      %v5119 = vsel %vm3502, %v5087, %v4752
      %v5120 = vsel %vm3502, %v5088, %v4754
      %v5121 = vsel %vm3502, %v5089, %v4756
      %v5122 = vsel %vm3502, %v5090, %v4758
      %v5123 = vsel %vm3502, %v5091, %v4760
      %v5124 = vsel %vm3502, %v5092, %v4762
      %v5125 = vsel %vm3502, %v5093, %v4764
      %v5126 = vsel %vm3502, %v5094, %v4766
      %v5127 = vsel %vm3502, %v5095, %v4768
      %v5128 = vsel %vm3502, %v5096, %v4770
      %v5129 = vsel %vm3502, %v5097, %v4772
      %v5130 = vsel %vm3502, %v5098, %v4774
      %v5131 = vsel %vm3502, %v5099, %v4776
      %v5132 = vsel %vm3502, %v5100, %v4778
      %v5133 = vsel %vm3502, %v5101, %v4780
      %v5134 = vsel %vm3502, %v5102, %v4782
      %v5135 = vsel %vm3535, %v5103, %v4816
      %v5136 = vsel %vm3535, %v5104, %v4818
      %v5137 = vsel %vm3535, %v5105, %v4820
      %v5138 = vsel %vm3535, %v5106, %v4822
      %v5139 = vsel %vm3535, %v5107, %v4824
      %v5140 = vsel %vm3535, %v5108, %v4826
      %v5141 = vsel %vm3535, %v5109, %v4828
      %v5142 = vsel %vm3535, %v5110, %v4830
      %v5143 = vsel %vm3535, %v5111, %v4832
      %v5144 = vsel %vm3535, %v5112, %v4834
      %v5145 = vsel %vm3535, %v5113, %v4836
      %v5146 = vsel %vm3535, %v5114, %v4838
      %v5147 = vsel %vm3535, %v5115, %v4840
      %v5148 = vsel %vm3535, %v5116, %v4842
      %v5149 = vsel %vm3535, %v5117, %v4844
      %v5150 = vsel %vm3535, %v5118, %v4846
      %v5151 = vsel %vm3535, %v5119, %v4848
      %v5152 = vsel %vm3535, %v5120, %v4850
      %v5153 = vsel %vm3535, %v5121, %v4852
      %v5154 = vsel %vm3535, %v5122, %v4854
      %v5155 = vsel %vm3535, %v5123, %v4856
      %v5156 = vsel %vm3535, %v5124, %v4858
      %v5157 = vsel %vm3535, %v5125, %v4860
      %v5158 = vsel %vm3535, %v5126, %v4862
      %v5159 = vsel %vm3535, %v5127, %v4864
      %v5160 = vsel %vm3535, %v5128, %v4866
      %v5161 = vsel %vm3535, %v5129, %v4868
      %v5162 = vsel %vm3535, %v5130, %v4870
      %v5163 = vsel %vm3535, %v5131, %v4872
      %v5164 = vsel %vm3535, %v5132, %v4874
      %v5165 = vsel %vm3535, %v5133, %v4876
      %v5166 = vsel %vm3535, %v5134, %v4878
      %v5167 = vld [vmem:[%s4] sm:$0xff]
      %v5168 = vld [vmem:[%s4 + $0x8] sm:$0xff]
      %v5169 = vld [vmem:[%s4 + $0x10] sm:$0xff]
      %v5170 = vld [vmem:[%s4 + $0x18] sm:$0xff]
      %v5171 = vld [vmem:[%s4 + $0x20] sm:$0xff]
      %v5172 = vld [vmem:[%s4 + $0x28] sm:$0xff]
      %v5173 = vld [vmem:[%s4 + $0x30] sm:$0xff]
      %v5174 = vld [vmem:[%s4 + $0x38] sm:$0xff]
      %v5175 = vld [vmem:[%s4 + $0x40] sm:$0xff]
      %v5176 = vld [vmem:[%s5] sm:$0x1]
      %v5178 = vperm.slane %v5176, 0
      %v5181 = vsel %vm3581, %v5135, 0
      %v5184 = vsel %vm3581, %v5136, 0
      %v5187 = vsel %vm3581, %v5137, 0
      %v5190 = vsel %vm3581, %v5138, 0
      %v5193 = vsel %vm3581, %v5139, 0
      %v5196 = vsel %vm3581, %v5140, 0
      %v5199 = vsel %vm3581, %v5141, 0
      %v5202 = vsel %vm3581, %v5142, 0
      %v5205 = vsel %vm3581, %v5143, 0
      %v5208 = vsel %vm3581, %v5144, 0
      %v5211 = vsel %vm3581, %v5145, 0
      %v5214 = vsel %vm3581, %v5146, 0
      %v5217 = vsel %vm3581, %v5147, 0
      %v5220 = vsel %vm3581, %v5148, 0
      %v5223 = vsel %vm3581, %v5149, 0
      %v5226 = vsel %vm3581, %v5150, 0
      %v5229 = vsel %vm3581, %v5151, 0
      %v5232 = vsel %vm3581, %v5152, 0
      %v5235 = vsel %vm3581, %v5153, 0
      %v5238 = vsel %vm3581, %v5154, 0
      %v5241 = vsel %vm3581, %v5155, 0
      %v5244 = vsel %vm3581, %v5156, 0
      %v5247 = vsel %vm3581, %v5157, 0
      %v5250 = vsel %vm3581, %v5158, 0
      %v5253 = vsel %vm3581, %v5159, 0
      %v5256 = vsel %vm3581, %v5160, 0
      %v5259 = vsel %vm3581, %v5161, 0
      %v5262 = vsel %vm3581, %v5162, 0
      %v5265 = vsel %vm3581, %v5163, 0
      %v5268 = vsel %vm3581, %v5164, 0
      %v5271 = vsel %vm3581, %v5165, 0
      %v5274 = vsel %vm3581, %v5166, 0
      %5276 = vmatpush.msra.mxu0 0.0
      %5277 = vmatpush.msra.mxu0 0.0
      %5278 = vmatpush.msra.mxu0 0.0
      %5279 = vmatpush.msra.mxu0 0.0
      %5280 = vmatpush.msra.mxu0 0.0
      %5281 = vmatpush.msra.mxu0 0.0
      %5282 = vmatpush.msra.mxu0 0.0
      %5283 = vmatpush.msra.mxu0 %v5175
      %5284 = vmatpush.msra.mxu0 %v5174
      %5285 = vmatpush.msra.mxu0 %v5173
      %5286 = vmatpush.msra.mxu0 %v5172
      %5287 = vmatpush.msra.mxu0 %v5171
      %5288 = vmatpush.msra.mxu0 %v5170
      %5289 = vmatpush.msra.mxu0 %v5169
      %5290 = vmatpush.msra.mxu0 %v5168
      %5291 = vmatpush.msra.mxu0 %v5167
      %5292 = vmatmul.f32.gmra.mxu0 %v5181
      %v5293 = vpop.f32.mrf.mxu0
      %v5294 = vadd.f32 %v5178, %v5293
      %5295 = vmatmul.f32.gmra.mxu0 %v5184
      %v5296 = vpop.f32.mrf.mxu0
      %v5297 = vadd.f32 %v5178, %v5296
      %5298 = vmatmul.f32.gmra.mxu0 %v5187
      %v5299 = vpop.f32.mrf.mxu0
      %v5300 = vadd.f32 %v5178, %v5299
      %5301 = vmatmul.f32.gmra.mxu0 %v5190
      %v5302 = vpop.f32.mrf.mxu0
      %v5303 = vadd.f32 %v5178, %v5302
      %5304 = vmatmul.f32.gmra.mxu0 %v5193
      %v5305 = vpop.f32.mrf.mxu0
      %v5306 = vadd.f32 %v5178, %v5305
      %5307 = vmatmul.f32.gmra.mxu0 %v5196
      %v5308 = vpop.f32.mrf.mxu0
      %v5309 = vadd.f32 %v5178, %v5308
      %5310 = vmatmul.f32.gmra.mxu0 %v5199
      %v5311 = vpop.f32.mrf.mxu0
      %v5312 = vadd.f32 %v5178, %v5311
      %5313 = vmatmul.f32.gmra.mxu0 %v5202
      %v5314 = vpop.f32.mrf.mxu0
      %v5315 = vadd.f32 %v5178, %v5314
      %5316 = vmatmul.f32.gmra.mxu0 %v5205
      %v5317 = vpop.f32.mrf.mxu0
      %v5318 = vadd.f32 %v5178, %v5317
      %5319 = vmatmul.f32.gmra.mxu0 %v5208
      %v5320 = vpop.f32.mrf.mxu0
      %v5321 = vadd.f32 %v5178, %v5320
      %5322 = vmatmul.f32.gmra.mxu0 %v5211
      %v5323 = vpop.f32.mrf.mxu0
      %v5324 = vadd.f32 %v5178, %v5323
      %5325 = vmatmul.f32.gmra.mxu0 %v5214
      %v5326 = vpop.f32.mrf.mxu0
      %v5327 = vadd.f32 %v5178, %v5326
      %5328 = vmatmul.f32.gmra.mxu0 %v5217
      %v5329 = vpop.f32.mrf.mxu0
      %v5330 = vadd.f32 %v5178, %v5329
      %5331 = vmatmul.f32.gmra.mxu0 %v5220
      %v5332 = vpop.f32.mrf.mxu0
      %v5333 = vadd.f32 %v5178, %v5332
      %5334 = vmatmul.f32.gmra.mxu0 %v5223
      %v5335 = vpop.f32.mrf.mxu0
      %v5336 = vadd.f32 %v5178, %v5335
      %5337 = vmatmul.f32.gmra.mxu0 %v5226
      %v5338 = vpop.f32.mrf.mxu0
      %v5339 = vadd.f32 %v5178, %v5338
      %5340 = vmatmul.f32.gmra.mxu0 %v5229
      %v5341 = vpop.f32.mrf.mxu0
      %v5342 = vadd.f32 %v5178, %v5341
      %5343 = vmatmul.f32.gmra.mxu0 %v5232
      %v5344 = vpop.f32.mrf.mxu0
      %v5345 = vadd.f32 %v5178, %v5344
      %5346 = vmatmul.f32.gmra.mxu0 %v5235
      %v5347 = vpop.f32.mrf.mxu0
      %v5348 = vadd.f32 %v5178, %v5347
      %5349 = vmatmul.f32.gmra.mxu0 %v5238
      %v5350 = vpop.f32.mrf.mxu0
      %v5351 = vadd.f32 %v5178, %v5350
      %5352 = vmatmul.f32.gmra.mxu0 %v5241
      %v5353 = vpop.f32.mrf.mxu0
      %v5354 = vadd.f32 %v5178, %v5353
      %5355 = vmatmul.f32.gmra.mxu0 %v5244
      %v5356 = vpop.f32.mrf.mxu0
      %v5357 = vadd.f32 %v5178, %v5356
      %5358 = vmatmul.f32.gmra.mxu0 %v5247
      %v5359 = vpop.f32.mrf.mxu0
      %v5360 = vadd.f32 %v5178, %v5359
      %5361 = vmatmul.f32.gmra.mxu0 %v5250
      %v5362 = vpop.f32.mrf.mxu0
      %v5363 = vadd.f32 %v5178, %v5362
      %5364 = vmatmul.f32.gmra.mxu0 %v5253
      %v5365 = vpop.f32.mrf.mxu0
      %v5366 = vadd.f32 %v5178, %v5365
      %5367 = vmatmul.f32.gmra.mxu0 %v5256
      %v5368 = vpop.f32.mrf.mxu0
      %v5369 = vadd.f32 %v5178, %v5368
      %5370 = vmatmul.f32.gmra.mxu0 %v5259
      %v5371 = vpop.f32.mrf.mxu0
      %v5372 = vadd.f32 %v5178, %v5371
      %5373 = vmatmul.f32.gmra.mxu0 %v5262
      %v5374 = vpop.f32.mrf.mxu0
      %v5375 = vadd.f32 %v5178, %v5374
      %5376 = vmatmul.f32.gmra.mxu0 %v5265
      %v5377 = vpop.f32.mrf.mxu0
      %v5378 = vadd.f32 %v5178, %v5377
      %5379 = vmatmul.f32.gmra.mxu0 %v5268
      %v5380 = vpop.f32.mrf.mxu0
      %v5381 = vadd.f32 %v5178, %v5380
      %5382 = vmatmul.f32.gmra.mxu0 %v5271
      %v5383 = vpop.f32.mrf.mxu0
      %v5384 = vadd.f32 %v5178, %v5383
      %5385 = vmatmul.f32.gmra.mxu0 %v5274
      %v5386 = vpop.f32.mrf.mxu0
      %v5387 = vadd.f32 %v5178, %v5386
      %5388 = vdwg.mxu0
      %v5389 = vmax.f32 %v5294, 0.0
      %v5390 = vmax.f32 %v5297, 0.0
      %v5391 = vmax.f32 %v5300, 0.0
      %v5392 = vmax.f32 %v5303, 0.0
      %v5393 = vmax.f32 %v5306, 0.0
      %v5394 = vmax.f32 %v5309, 0.0
      %v5395 = vmax.f32 %v5312, 0.0
      %v5396 = vmax.f32 %v5315, 0.0
      %v5397 = vmax.f32 %v5318, 0.0
      %v5398 = vmax.f32 %v5321, 0.0
      %v5399 = vmax.f32 %v5324, 0.0
      %v5400 = vmax.f32 %v5327, 0.0
      %v5401 = vmax.f32 %v5330, 0.0
      %v5402 = vmax.f32 %v5333, 0.0
      %v5403 = vmax.f32 %v5336, 0.0
      %v5404 = vmax.f32 %v5339, 0.0
      %v5405 = vmax.f32 %v5342, 0.0
      %v5406 = vmax.f32 %v5345, 0.0
      %v5407 = vmax.f32 %v5348, 0.0
      %v5408 = vmax.f32 %v5351, 0.0
      %v5409 = vmax.f32 %v5354, 0.0
      %v5410 = vmax.f32 %v5357, 0.0
      %v5411 = vmax.f32 %v5360, 0.0
      %v5412 = vmax.f32 %v5363, 0.0
      %v5413 = vmax.f32 %v5366, 0.0
      %v5414 = vmax.f32 %v5369, 0.0
      %v5415 = vmax.f32 %v5372, 0.0
      %v5416 = vmax.f32 %v5375, 0.0
      %v5417 = vmax.f32 %v5378, 0.0
      %v5418 = vmax.f32 %v5381, 0.0
      %v5419 = vmax.f32 %v5384, 0.0
      %v5420 = vmax.f32 %v5387, 0.0
      %s5421 = scalar_lea.vmem [#allocation4], 24
      %5422 = vst.msk [vmem:[%s5421 + $0x1] sm:$0xff] %vm492, %v5389
      %5423 = vst.msk [vmem:[%s5421 + $0x9] sm:$0xff] %vm492, %v5390
      %5424 = vst.msk [vmem:[%s5421 + $0x19] sm:$0xff] %vm492, %v5391
      %5425 = vst.msk [vmem:[%s5421 + $0x21] sm:$0xff] %vm492, %v5392
      %5426 = vst.msk [vmem:[%s5421 + $0x31] sm:$0xff] %vm492, %v5393
      %5427 = vst.msk [vmem:[%s5421 + $0x39] sm:$0xff] %vm492, %v5394
      %5428 = vst.msk [vmem:[%s5421 + $0x49] sm:$0xff] %vm492, %v5395
      %5429 = vst.msk [vmem:[%s5421 + $0x51] sm:$0xff] %vm492, %v5396
      %5430 = vst.msk [vmem:[%s5421 + $0x61] sm:$0xff] %vm492, %v5397
      %5431 = vst.msk [vmem:[%s5421 + $0x69] sm:$0xff] %vm492, %v5398
      %5432 = vst.msk [vmem:[%s5421 + $0x79] sm:$0xff] %vm492, %v5399
      %5433 = vst.msk [vmem:[%s5421 + $0x81] sm:$0xff] %vm492, %v5400
      %5434 = vst.msk [vmem:[%s5421 + $0x91] sm:$0xff] %vm492, %v5401
      %5435 = vst.msk [vmem:[%s5421 + $0x99] sm:$0xff] %vm492, %v5402
      %5436 = vst.msk [vmem:[%s5421 + $0xa9] sm:$0xff] %vm492, %v5403
      %5437 = vst.msk [vmem:[%s5421 + $0xb1] sm:$0xff] %vm492, %v5404
      %5438 = vst.msk [vmem:[%s5421 + $0xc1] sm:$0xff] %vm492, %v5405
      %5439 = vst.msk [vmem:[%s5421 + $0xc9] sm:$0xff] %vm492, %v5406
      %5440 = vst.msk [vmem:[%s5421 + $0xd9] sm:$0xff] %vm492, %v5407
      %5441 = vst.msk [vmem:[%s5421 + $0xe1] sm:$0xff] %vm492, %v5408
      %5442 = vst.msk [vmem:[%s5421 + $0xf1] sm:$0xff] %vm492, %v5409
      %5443 = vst.msk [vmem:[%s5421 + $0xf9] sm:$0xff] %vm492, %v5410
      %5444 = vst.msk [vmem:[%s5421 + $0x109] sm:$0xff] %vm492, %v5411
      %5445 = vst.msk [vmem:[%s5421 + $0x111] sm:$0xff] %vm492, %v5412
      %5446 = vst.msk [vmem:[%s5421 + $0x121] sm:$0xff] %vm492, %v5413
      %5447 = vst.msk [vmem:[%s5421 + $0x129] sm:$0xff] %vm492, %v5414
      %5448 = vst.msk [vmem:[%s5421 + $0x139] sm:$0xff] %vm492, %v5415
      %5449 = vst.msk [vmem:[%s5421 + $0x141] sm:$0xff] %vm492, %v5416
      %5450 = vst.msk [vmem:[%s5421 + $0x151] sm:$0xff] %vm492, %v5417
      %5451 = vst.msk [vmem:[%s5421 + $0x159] sm:$0xff] %vm492, %v5418
      %5452 = vst.msk [vmem:[%s5421 + $0x169] sm:$0xff] %vm492, %v5419
      %5453 = vst.msk [vmem:[%s5421 + $0x171] sm:$0xff] %vm492, %v5420
      %v5454 = vld [vmem:[#allocation4] sm:$0xff]
      %v5455 = vld [vmem:[#allocation4 + $0x8] sm:$0xff]
      %v5456 = vld [vmem:[#allocation4 + $0x10] sm:$0x3]
      %v5457 = vld [vmem:[#allocation4 + $0x18] sm:$0xff]
      %v5458 = vld [vmem:[#allocation4 + $0x20] sm:$0xff]
      %v5459 = vld [vmem:[#allocation4 + $0x28] sm:$0x3]
      %v5460 = vld [vmem:[#allocation4 + $0x30] sm:$0xff]
      %v5461 = vld [vmem:[#allocation4 + $0x38] sm:$0xff]
      %v5462 = vld [vmem:[#allocation4 + $0x40] sm:$0x3]
      %v5463 = vld [vmem:[#allocation4 + $0x48] sm:$0xff]
      %v5464 = vld [vmem:[#allocation4 + $0x50] sm:$0xff]
      %v5465 = vld [vmem:[#allocation4 + $0x58] sm:$0x3]
      %v5466 = vld [vmem:[#allocation4 + $0x60] sm:$0xff]
      %v5467 = vld [vmem:[#allocation4 + $0x68] sm:$0xff]
      %v5468 = vld [vmem:[#allocation4 + $0x70] sm:$0x3]
      %v5469 = vld [vmem:[#allocation4 + $0x78] sm:$0xff]
      %v5470 = vld [vmem:[#allocation4 + $0x80] sm:$0xff]
      %v5471 = vld [vmem:[#allocation4 + $0x88] sm:$0x3]
      %v5472 = vld [vmem:[#allocation4 + $0x90] sm:$0xff]
      %v5473 = vld [vmem:[#allocation4 + $0x98] sm:$0xff]
      %v5474 = vld [vmem:[#allocation4 + $0xa0] sm:$0x3]
      %v5475 = vld [vmem:[#allocation4 + $0xa8] sm:$0xff]
      %v5476 = vld [vmem:[#allocation4 + $0xb0] sm:$0xff]
      %v5477 = vld [vmem:[#allocation4 + $0xb8] sm:$0x3]
      %v5478 = vld [vmem:[#allocation4 + $0xc0] sm:$0xff]
      %v5479 = vld [vmem:[#allocation4 + $0xc8] sm:$0xff]
      %v5480 = vld [vmem:[#allocation4 + $0xd0] sm:$0x3]
      %v5481 = vld [vmem:[#allocation4 + $0xd8] sm:$0xff]
      %v5482 = vld [vmem:[#allocation4 + $0xe0] sm:$0xff]
      %v5483 = vld [vmem:[#allocation4 + $0xe8] sm:$0x3]
      %v5484 = vld [vmem:[#allocation4 + $0xf0] sm:$0xff]
      %v5485 = vld [vmem:[#allocation4 + $0xf8] sm:$0xff]
      %v5486 = vld [vmem:[#allocation4 + $0x100] sm:$0x3]
      %v5487 = vld [vmem:[#allocation4 + $0x108] sm:$0xff]
      %v5488 = vld [vmem:[#allocation4 + $0x110] sm:$0xff]
      %v5489 = vld [vmem:[#allocation4 + $0x118] sm:$0x3]
      %v5490 = vld [vmem:[#allocation4 + $0x120] sm:$0xff]
      %v5491 = vld [vmem:[#allocation4 + $0x128] sm:$0xff]
      %v5492 = vld [vmem:[#allocation4 + $0x130] sm:$0x3]
      %v5493 = vld [vmem:[#allocation4 + $0x138] sm:$0xff]
      %v5494 = vld [vmem:[#allocation4 + $0x140] sm:$0xff]
      %v5495 = vld [vmem:[#allocation4 + $0x148] sm:$0x3]
      %v5496 = vld [vmem:[#allocation4 + $0x150] sm:$0xff]
      %v5497 = vld [vmem:[#allocation4 + $0x158] sm:$0xff]
      %v5498 = vld [vmem:[#allocation4 + $0x160] sm:$0x3]
      %v5499 = vld [vmem:[#allocation4 + $0x168] sm:$0xff]
      %v5500 = vld [vmem:[#allocation4 + $0x170] sm:$0xff]
      %v5501 = vld [vmem:[#allocation4 + $0x178] sm:$0x3]
      %v5502 = vld [vmem:[#allocation4 + $0x180] sm:$0xff]
      %v5503 = vld [vmem:[#allocation4 + $0x188] sm:$0xff]
      %v5504 = vld [vmem:[#allocation4 + $0x190] sm:$0x3]
      %v5505 = vld [vmem:[#allocation4 + $0x198] sm:$0xff]
      %v5506 = vld [vmem:[#allocation4 + $0x1a0] sm:$0xff]
      %v5507 = vld [vmem:[#allocation4 + $0x1a8] sm:$0x3]
      %v5556 = vrot.slane %v5454, 1
      %v5557 = vrot.slane %v5455, 1
      %v5558 = vsel %vm715, %v5556, %v5557
      %v5559 = vrot.slane %v5456, 1
      %v5560 = vsel %vm715, %v5557, %v5559
      %v5561 = vrot.slane %v5457, 1
      %v5562 = vrot.slane %v5458, 1
      %v5563 = vsel %vm715, %v5561, %v5562
      %v5564 = vrot.slane %v5459, 1
      %v5565 = vsel %vm715, %v5562, %v5564
      %v5566 = vrot.slane %v5460, 1
      %v5567 = vrot.slane %v5461, 1
      %v5568 = vsel %vm715, %v5566, %v5567
      %v5569 = vrot.slane %v5462, 1
      %v5570 = vsel %vm715, %v5567, %v5569
      %v5571 = vrot.slane %v5463, 1
      %v5572 = vrot.slane %v5464, 1
      %v5573 = vsel %vm715, %v5571, %v5572
      %v5574 = vrot.slane %v5465, 1
      %v5575 = vsel %vm715, %v5572, %v5574
      %v5576 = vrot.slane %v5466, 1
      %v5577 = vrot.slane %v5467, 1
      %v5578 = vsel %vm715, %v5576, %v5577
      %v5579 = vrot.slane %v5468, 1
      %v5580 = vsel %vm715, %v5577, %v5579
      %v5581 = vrot.slane %v5469, 1
      %v5582 = vrot.slane %v5470, 1
      %v5583 = vsel %vm715, %v5581, %v5582
      %v5584 = vrot.slane %v5471, 1
      %v5585 = vsel %vm715, %v5582, %v5584
      %v5586 = vrot.slane %v5472, 1
      %v5587 = vrot.slane %v5473, 1
      %v5588 = vsel %vm715, %v5586, %v5587
      %v5589 = vrot.slane %v5474, 1
      %v5590 = vsel %vm715, %v5587, %v5589
      %v5591 = vrot.slane %v5475, 1
      %v5592 = vrot.slane %v5476, 1
      %v5593 = vsel %vm715, %v5591, %v5592
      %v5594 = vrot.slane %v5477, 1
      %v5595 = vsel %vm715, %v5592, %v5594
      %v5596 = vrot.slane %v5478, 1
      %v5597 = vrot.slane %v5479, 1
      %v5598 = vsel %vm715, %v5596, %v5597
      %v5599 = vrot.slane %v5480, 1
      %v5600 = vsel %vm715, %v5597, %v5599
      %v5601 = vrot.slane %v5481, 1
      %v5602 = vrot.slane %v5482, 1
      %v5603 = vsel %vm715, %v5601, %v5602
      %v5604 = vrot.slane %v5483, 1
      %v5605 = vsel %vm715, %v5602, %v5604
      %v5606 = vrot.slane %v5484, 1
      %v5607 = vrot.slane %v5485, 1
      %v5608 = vsel %vm715, %v5606, %v5607
      %v5609 = vrot.slane %v5486, 1
      %v5610 = vsel %vm715, %v5607, %v5609
      %v5611 = vrot.slane %v5487, 1
      %v5612 = vrot.slane %v5488, 1
      %v5613 = vsel %vm715, %v5611, %v5612
      %v5614 = vrot.slane %v5489, 1
      %v5615 = vsel %vm715, %v5612, %v5614
      %v5616 = vrot.slane %v5490, 1
      %v5617 = vrot.slane %v5491, 1
      %v5618 = vsel %vm715, %v5616, %v5617
      %v5619 = vrot.slane %v5492, 1
      %v5620 = vsel %vm715, %v5617, %v5619
      %v5621 = vrot.slane %v5493, 1
      %v5622 = vrot.slane %v5494, 1
      %v5623 = vsel %vm715, %v5621, %v5622
      %v5624 = vrot.slane %v5495, 1
      %v5625 = vsel %vm715, %v5622, %v5624
      %v5626 = vrot.slane %v5496, 1
      %v5627 = vrot.slane %v5497, 1
      %v5628 = vsel %vm715, %v5626, %v5627
      %v5629 = vrot.slane %v5498, 1
      %v5630 = vsel %vm715, %v5627, %v5629
      %v5631 = vrot.slane %v5499, 1
      %v5632 = vrot.slane %v5500, 1
      %v5633 = vsel %vm715, %v5631, %v5632
      %v5634 = vrot.slane %v5501, 1
      %v5635 = vsel %vm715, %v5632, %v5634
      %v5636 = vrot.slane %v5454, 2
      %v5637 = vrot.slane %v5455, 2
      %v5638 = vsel %vm796, %v5636, %v5637
      %v5639 = vrot.slane %v5456, 2
      %v5640 = vsel %vm796, %v5637, %v5639
      %v5641 = vrot.slane %v5457, 2
      %v5642 = vrot.slane %v5458, 2
      %v5643 = vsel %vm796, %v5641, %v5642
      %v5644 = vrot.slane %v5459, 2
      %v5645 = vsel %vm796, %v5642, %v5644
      %v5646 = vrot.slane %v5460, 2
      %v5647 = vrot.slane %v5461, 2
      %v5648 = vsel %vm796, %v5646, %v5647
      %v5649 = vrot.slane %v5462, 2
      %v5650 = vsel %vm796, %v5647, %v5649
      %v5651 = vrot.slane %v5463, 2
      %v5652 = vrot.slane %v5464, 2
      %v5653 = vsel %vm796, %v5651, %v5652
      %v5654 = vrot.slane %v5465, 2
      %v5655 = vsel %vm796, %v5652, %v5654
      %v5656 = vrot.slane %v5466, 2
      %v5657 = vrot.slane %v5467, 2
      %v5658 = vsel %vm796, %v5656, %v5657
      %v5659 = vrot.slane %v5468, 2
      %v5660 = vsel %vm796, %v5657, %v5659
      %v5661 = vrot.slane %v5469, 2
      %v5662 = vrot.slane %v5470, 2
      %v5663 = vsel %vm796, %v5661, %v5662
      %v5664 = vrot.slane %v5471, 2
      %v5665 = vsel %vm796, %v5662, %v5664
      %v5666 = vrot.slane %v5472, 2
      %v5667 = vrot.slane %v5473, 2
      %v5668 = vsel %vm796, %v5666, %v5667
      %v5669 = vrot.slane %v5474, 2
      %v5670 = vsel %vm796, %v5667, %v5669
      %v5671 = vrot.slane %v5475, 2
      %v5672 = vrot.slane %v5476, 2
      %v5673 = vsel %vm796, %v5671, %v5672
      %v5674 = vrot.slane %v5477, 2
      %v5675 = vsel %vm796, %v5672, %v5674
      %v5676 = vrot.slane %v5478, 2
      %v5677 = vrot.slane %v5479, 2
      %v5678 = vsel %vm796, %v5676, %v5677
      %v5679 = vrot.slane %v5480, 2
      %v5680 = vsel %vm796, %v5677, %v5679
      %v5681 = vrot.slane %v5481, 2
      %v5682 = vrot.slane %v5482, 2
      %v5683 = vsel %vm796, %v5681, %v5682
      %v5684 = vrot.slane %v5483, 2
      %v5685 = vsel %vm796, %v5682, %v5684
      %v5686 = vrot.slane %v5484, 2
      %v5687 = vrot.slane %v5485, 2
      %v5688 = vsel %vm796, %v5686, %v5687
      %v5689 = vrot.slane %v5486, 2
      %v5690 = vsel %vm796, %v5687, %v5689
      %v5691 = vrot.slane %v5487, 2
      %v5692 = vrot.slane %v5488, 2
      %v5693 = vsel %vm796, %v5691, %v5692
      %v5694 = vrot.slane %v5489, 2
      %v5695 = vsel %vm796, %v5692, %v5694
      %v5696 = vrot.slane %v5490, 2
      %v5697 = vrot.slane %v5491, 2
      %v5698 = vsel %vm796, %v5696, %v5697
      %v5699 = vrot.slane %v5492, 2
      %v5700 = vsel %vm796, %v5697, %v5699
      %v5701 = vrot.slane %v5493, 2
      %v5702 = vrot.slane %v5494, 2
      %v5703 = vsel %vm796, %v5701, %v5702
      %v5704 = vrot.slane %v5495, 2
      %v5705 = vsel %vm796, %v5702, %v5704
      %v5706 = vrot.slane %v5496, 2
      %v5707 = vrot.slane %v5497, 2
      %v5708 = vsel %vm796, %v5706, %v5707
      %v5709 = vrot.slane %v5498, 2
      %v5710 = vsel %vm796, %v5707, %v5709
      %v5711 = vrot.slane %v5499, 2
      %v5712 = vrot.slane %v5500, 2
      %v5713 = vsel %vm796, %v5711, %v5712
      %v5714 = vrot.slane %v5501, 2
      %v5715 = vsel %vm796, %v5712, %v5714
      %v5719 = vrot.slane %v5502, 1
      %v5720 = vrot.slane %v5503, 1
      %v5721 = vsel %vm715, %v5719, %v5720
      %v5722 = vrot.slane %v5504, 1
      %v5723 = vsel %vm715, %v5720, %v5722
      %v5724 = vrot.slane %v5502, 2
      %v5725 = vrot.slane %v5503, 2
      %v5726 = vsel %vm796, %v5724, %v5725
      %v5727 = vrot.slane %v5504, 2
      %v5728 = vsel %vm796, %v5725, %v5727
      %v5732 = vrot.slane %v5505, 1
      %v5733 = vrot.slane %v5506, 1
      %v5734 = vsel %vm715, %v5732, %v5733
      %v5735 = vrot.slane %v5507, 1
      %v5736 = vsel %vm715, %v5733, %v5735
      %v5737 = vrot.slane %v5505, 2
      %v5738 = vrot.slane %v5506, 2
      %v5739 = vsel %vm796, %v5737, %v5738
      %v5740 = vrot.slane %v5507, 2
      %v5741 = vsel %vm796, %v5738, %v5740
      %5742 = vrot.lane.b32.xlu0 %v5558, 16
      %v5743 = vpop.permute.xlu0 %5742
      %5744 = vrot.lane.b32.xlu0 %v5560, 16
      %v5745 = vpop.permute.xlu0 %5744
      %5746 = vrot.lane.b32.xlu0 %v5563, 16
      %v5747 = vpop.permute.xlu0 %5746
      %5748 = vrot.lane.b32.xlu0 %v5565, 16
      %v5749 = vpop.permute.xlu0 %5748
      %5750 = vrot.lane.b32.xlu0 %v5568, 16
      %v5751 = vpop.permute.xlu0 %5750
      %5752 = vrot.lane.b32.xlu0 %v5570, 16
      %v5753 = vpop.permute.xlu0 %5752
      %5754 = vrot.lane.b32.xlu0 %v5573, 16
      %v5755 = vpop.permute.xlu0 %5754
      %5756 = vrot.lane.b32.xlu0 %v5575, 16
      %v5757 = vpop.permute.xlu0 %5756
      %5758 = vrot.lane.b32.xlu0 %v5578, 16
      %v5759 = vpop.permute.xlu0 %5758
      %5760 = vrot.lane.b32.xlu0 %v5580, 16
      %v5761 = vpop.permute.xlu0 %5760
      %5762 = vrot.lane.b32.xlu0 %v5583, 16
      %v5763 = vpop.permute.xlu0 %5762
      %5764 = vrot.lane.b32.xlu0 %v5585, 16
      %v5765 = vpop.permute.xlu0 %5764
      %5766 = vrot.lane.b32.xlu0 %v5588, 16
      %v5767 = vpop.permute.xlu0 %5766
      %5768 = vrot.lane.b32.xlu0 %v5590, 16
      %v5769 = vpop.permute.xlu0 %5768
      %5770 = vrot.lane.b32.xlu0 %v5593, 16
      %v5771 = vpop.permute.xlu0 %5770
      %5772 = vrot.lane.b32.xlu0 %v5595, 16
      %v5773 = vpop.permute.xlu0 %5772
      %5774 = vrot.lane.b32.xlu0 %v5598, 16
      %v5775 = vpop.permute.xlu0 %5774
      %5776 = vrot.lane.b32.xlu0 %v5600, 16
      %v5777 = vpop.permute.xlu0 %5776
      %5778 = vrot.lane.b32.xlu0 %v5603, 16
      %v5779 = vpop.permute.xlu0 %5778
      %5780 = vrot.lane.b32.xlu0 %v5605, 16
      %v5781 = vpop.permute.xlu0 %5780
      %5782 = vrot.lane.b32.xlu0 %v5608, 16
      %v5783 = vpop.permute.xlu0 %5782
      %5784 = vrot.lane.b32.xlu0 %v5610, 16
      %v5785 = vpop.permute.xlu0 %5784
      %5786 = vrot.lane.b32.xlu0 %v5613, 16
      %v5787 = vpop.permute.xlu0 %5786
      %5788 = vrot.lane.b32.xlu0 %v5615, 16
      %v5789 = vpop.permute.xlu0 %5788
      %5790 = vrot.lane.b32.xlu0 %v5618, 16
      %v5791 = vpop.permute.xlu0 %5790
      %5792 = vrot.lane.b32.xlu0 %v5620, 16
      %v5793 = vpop.permute.xlu0 %5792
      %5794 = vrot.lane.b32.xlu0 %v5623, 16
      %v5795 = vpop.permute.xlu0 %5794
      %5796 = vrot.lane.b32.xlu0 %v5625, 16
      %v5797 = vpop.permute.xlu0 %5796
      %5798 = vrot.lane.b32.xlu0 %v5628, 16
      %v5799 = vpop.permute.xlu0 %5798
      %5800 = vrot.lane.b32.xlu0 %v5630, 16
      %v5801 = vpop.permute.xlu0 %5800
      %5802 = vrot.lane.b32.xlu0 %v5633, 16
      %v5803 = vpop.permute.xlu0 %5802
      %5804 = vrot.lane.b32.xlu0 %v5635, 16
      %v5805 = vpop.permute.xlu0 %5804
      %5838 = vrot.lane.b32.xlu0 %v5638, 32
      %v5839 = vpop.permute.xlu0 %5838
      %5840 = vrot.lane.b32.xlu0 %v5640, 32
      %v5841 = vpop.permute.xlu0 %5840
      %5842 = vrot.lane.b32.xlu0 %v5643, 32
      %v5843 = vpop.permute.xlu0 %5842
      %5844 = vrot.lane.b32.xlu0 %v5645, 32
      %v5845 = vpop.permute.xlu0 %5844
      %5846 = vrot.lane.b32.xlu0 %v5648, 32
      %v5847 = vpop.permute.xlu0 %5846
      %5848 = vrot.lane.b32.xlu0 %v5650, 32
      %v5849 = vpop.permute.xlu0 %5848
      %5850 = vrot.lane.b32.xlu0 %v5653, 32
      %v5851 = vpop.permute.xlu0 %5850
      %5852 = vrot.lane.b32.xlu0 %v5655, 32
      %v5853 = vpop.permute.xlu0 %5852
      %5854 = vrot.lane.b32.xlu0 %v5658, 32
      %v5855 = vpop.permute.xlu0 %5854
      %5856 = vrot.lane.b32.xlu0 %v5660, 32
      %v5857 = vpop.permute.xlu0 %5856
      %5858 = vrot.lane.b32.xlu0 %v5663, 32
      %v5859 = vpop.permute.xlu0 %5858
      %5860 = vrot.lane.b32.xlu0 %v5665, 32
      %v5861 = vpop.permute.xlu0 %5860
      %5862 = vrot.lane.b32.xlu0 %v5668, 32
      %v5863 = vpop.permute.xlu0 %5862
      %5864 = vrot.lane.b32.xlu0 %v5670, 32
      %v5865 = vpop.permute.xlu0 %5864
      %5866 = vrot.lane.b32.xlu0 %v5673, 32
      %v5867 = vpop.permute.xlu0 %5866
      %5868 = vrot.lane.b32.xlu0 %v5675, 32
      %v5869 = vpop.permute.xlu0 %5868
      %5870 = vrot.lane.b32.xlu0 %v5678, 32
      %v5871 = vpop.permute.xlu0 %5870
      %5872 = vrot.lane.b32.xlu0 %v5680, 32
      %v5873 = vpop.permute.xlu0 %5872
      %5874 = vrot.lane.b32.xlu0 %v5683, 32
      %v5875 = vpop.permute.xlu0 %5874
      %5876 = vrot.lane.b32.xlu0 %v5685, 32
      %v5877 = vpop.permute.xlu0 %5876
      %5878 = vrot.lane.b32.xlu0 %v5688, 32
      %v5879 = vpop.permute.xlu0 %5878
      %5880 = vrot.lane.b32.xlu0 %v5690, 32
      %v5881 = vpop.permute.xlu0 %5880
      %5882 = vrot.lane.b32.xlu0 %v5693, 32
      %v5883 = vpop.permute.xlu0 %5882
      %5884 = vrot.lane.b32.xlu0 %v5695, 32
      %v5885 = vpop.permute.xlu0 %5884
      %5886 = vrot.lane.b32.xlu0 %v5698, 32
      %v5887 = vpop.permute.xlu0 %5886
      %5888 = vrot.lane.b32.xlu0 %v5700, 32
      %v5889 = vpop.permute.xlu0 %5888
      %5890 = vrot.lane.b32.xlu0 %v5703, 32
      %v5891 = vpop.permute.xlu0 %5890
      %5892 = vrot.lane.b32.xlu0 %v5705, 32
      %v5893 = vpop.permute.xlu0 %5892
      %5894 = vrot.lane.b32.xlu0 %v5708, 32
      %v5895 = vpop.permute.xlu0 %5894
      %5896 = vrot.lane.b32.xlu0 %v5710, 32
      %v5897 = vpop.permute.xlu0 %5896
      %5898 = vrot.lane.b32.xlu0 %v5713, 32
      %v5899 = vpop.permute.xlu0 %5898
      %5900 = vrot.lane.b32.xlu0 %v5715, 32
      %v5901 = vpop.permute.xlu0 %5900
      %5934 = vrot.lane.b32.xlu0 %v5457, 48
      %v5935 = vpop.permute.xlu0 %5934
      %5936 = vrot.lane.b32.xlu0 %v5458, 48
      %v5937 = vpop.permute.xlu0 %5936
      %5938 = vrot.lane.b32.xlu0 %v5460, 48
      %v5939 = vpop.permute.xlu0 %5938
      %5940 = vrot.lane.b32.xlu0 %v5461, 48
      %v5941 = vpop.permute.xlu0 %5940
      %5942 = vrot.lane.b32.xlu0 %v5463, 48
      %v5943 = vpop.permute.xlu0 %5942
      %5944 = vrot.lane.b32.xlu0 %v5464, 48
      %v5945 = vpop.permute.xlu0 %5944
      %5946 = vrot.lane.b32.xlu0 %v5466, 48
      %v5947 = vpop.permute.xlu0 %5946
      %5948 = vrot.lane.b32.xlu0 %v5467, 48
      %v5949 = vpop.permute.xlu0 %5948
      %5950 = vrot.lane.b32.xlu0 %v5469, 48
      %v5951 = vpop.permute.xlu0 %5950
      %5952 = vrot.lane.b32.xlu0 %v5470, 48
      %v5953 = vpop.permute.xlu0 %5952
      %5954 = vrot.lane.b32.xlu0 %v5472, 48
      %v5955 = vpop.permute.xlu0 %5954
      %5956 = vrot.lane.b32.xlu0 %v5473, 48
      %v5957 = vpop.permute.xlu0 %5956
      %5958 = vrot.lane.b32.xlu0 %v5475, 48
      %v5959 = vpop.permute.xlu0 %5958
      %5960 = vrot.lane.b32.xlu0 %v5476, 48
      %v5961 = vpop.permute.xlu0 %5960
      %5962 = vrot.lane.b32.xlu0 %v5478, 48
      %v5963 = vpop.permute.xlu0 %5962
      %5964 = vrot.lane.b32.xlu0 %v5479, 48
      %v5965 = vpop.permute.xlu0 %5964
      %5966 = vrot.lane.b32.xlu0 %v5481, 48
      %v5967 = vpop.permute.xlu0 %5966
      %5968 = vrot.lane.b32.xlu0 %v5482, 48
      %v5969 = vpop.permute.xlu0 %5968
      %5970 = vrot.lane.b32.xlu0 %v5484, 48
      %v5971 = vpop.permute.xlu0 %5970
      %5972 = vrot.lane.b32.xlu0 %v5485, 48
      %v5973 = vpop.permute.xlu0 %5972
      %5974 = vrot.lane.b32.xlu0 %v5487, 48
      %v5975 = vpop.permute.xlu0 %5974
      %5976 = vrot.lane.b32.xlu0 %v5488, 48
      %v5977 = vpop.permute.xlu0 %5976
      %5978 = vrot.lane.b32.xlu0 %v5490, 48
      %v5979 = vpop.permute.xlu0 %5978
      %5980 = vrot.lane.b32.xlu0 %v5491, 48
      %v5981 = vpop.permute.xlu0 %5980
      %5982 = vrot.lane.b32.xlu0 %v5493, 48
      %v5983 = vpop.permute.xlu0 %5982
      %5984 = vrot.lane.b32.xlu0 %v5494, 48
      %v5985 = vpop.permute.xlu0 %5984
      %5986 = vrot.lane.b32.xlu0 %v5496, 48
      %v5987 = vpop.permute.xlu0 %5986
      %5988 = vrot.lane.b32.xlu0 %v5497, 48
      %v5989 = vpop.permute.xlu0 %5988
      %5990 = vrot.lane.b32.xlu0 %v5499, 48
      %v5991 = vpop.permute.xlu0 %5990
      %5992 = vrot.lane.b32.xlu0 %v5500, 48
      %v5993 = vpop.permute.xlu0 %5992
      %5994 = vrot.lane.b32.xlu0 %v5502, 48
      %v5995 = vpop.permute.xlu0 %5994
      %5996 = vrot.lane.b32.xlu0 %v5503, 48
      %v5997 = vpop.permute.xlu0 %5996
      %6030 = vrot.lane.b32.xlu0 %v5563, 64
      %v6031 = vpop.permute.xlu0 %6030
      %6032 = vrot.lane.b32.xlu0 %v5565, 64
      %v6033 = vpop.permute.xlu0 %6032
      %6034 = vrot.lane.b32.xlu0 %v5568, 64
      %v6035 = vpop.permute.xlu0 %6034
      %6036 = vrot.lane.b32.xlu0 %v5570, 64
      %v6037 = vpop.permute.xlu0 %6036
      %6038 = vrot.lane.b32.xlu0 %v5573, 64
      %v6039 = vpop.permute.xlu0 %6038
      %6040 = vrot.lane.b32.xlu0 %v5575, 64
      %v6041 = vpop.permute.xlu0 %6040
      %6042 = vrot.lane.b32.xlu0 %v5578, 64
      %v6043 = vpop.permute.xlu0 %6042
      %6044 = vrot.lane.b32.xlu0 %v5580, 64
      %v6045 = vpop.permute.xlu0 %6044
      %6046 = vrot.lane.b32.xlu0 %v5583, 64
      %v6047 = vpop.permute.xlu0 %6046
      %6048 = vrot.lane.b32.xlu0 %v5585, 64
      %v6049 = vpop.permute.xlu0 %6048
      %6050 = vrot.lane.b32.xlu0 %v5588, 64
      %v6051 = vpop.permute.xlu0 %6050
      %6052 = vrot.lane.b32.xlu0 %v5590, 64
      %v6053 = vpop.permute.xlu0 %6052
      %6054 = vrot.lane.b32.xlu0 %v5593, 64
      %v6055 = vpop.permute.xlu0 %6054
      %6056 = vrot.lane.b32.xlu0 %v5595, 64
      %v6057 = vpop.permute.xlu0 %6056
      %6058 = vrot.lane.b32.xlu0 %v5598, 64
      %v6059 = vpop.permute.xlu0 %6058
      %6060 = vrot.lane.b32.xlu0 %v5600, 64
      %v6061 = vpop.permute.xlu0 %6060
      %6062 = vrot.lane.b32.xlu0 %v5603, 64
      %v6063 = vpop.permute.xlu0 %6062
      %6064 = vrot.lane.b32.xlu0 %v5605, 64
      %v6065 = vpop.permute.xlu0 %6064
      %6066 = vrot.lane.b32.xlu0 %v5608, 64
      %v6067 = vpop.permute.xlu0 %6066
      %6068 = vrot.lane.b32.xlu0 %v5610, 64
      %v6069 = vpop.permute.xlu0 %6068
      %6070 = vrot.lane.b32.xlu0 %v5613, 64
      %v6071 = vpop.permute.xlu0 %6070
      %6072 = vrot.lane.b32.xlu0 %v5615, 64
      %v6073 = vpop.permute.xlu0 %6072
      %6074 = vrot.lane.b32.xlu0 %v5618, 64
      %v6075 = vpop.permute.xlu0 %6074
      %6076 = vrot.lane.b32.xlu0 %v5620, 64
      %v6077 = vpop.permute.xlu0 %6076
      %6078 = vrot.lane.b32.xlu0 %v5623, 64
      %v6079 = vpop.permute.xlu0 %6078
      %6080 = vrot.lane.b32.xlu0 %v5625, 64
      %v6081 = vpop.permute.xlu0 %6080
      %6082 = vrot.lane.b32.xlu0 %v5628, 64
      %v6083 = vpop.permute.xlu0 %6082
      %6084 = vrot.lane.b32.xlu0 %v5630, 64
      %v6085 = vpop.permute.xlu0 %6084
      %6086 = vrot.lane.b32.xlu0 %v5633, 64
      %v6087 = vpop.permute.xlu0 %6086
      %6088 = vrot.lane.b32.xlu0 %v5635, 64
      %v6089 = vpop.permute.xlu0 %6088
      %6090 = vrot.lane.b32.xlu0 %v5721, 64
      %v6091 = vpop.permute.xlu0 %6090
      %6092 = vrot.lane.b32.xlu0 %v5723, 64
      %v6093 = vpop.permute.xlu0 %6092
      %6126 = vrot.lane.b32.xlu0 %v5643, 80
      %v6127 = vpop.permute.xlu0 %6126
      %6128 = vrot.lane.b32.xlu0 %v5645, 80
      %v6129 = vpop.permute.xlu0 %6128
      %6130 = vrot.lane.b32.xlu0 %v5648, 80
      %v6131 = vpop.permute.xlu0 %6130
      %6132 = vrot.lane.b32.xlu0 %v5650, 80
      %v6133 = vpop.permute.xlu0 %6132
      %6134 = vrot.lane.b32.xlu0 %v5653, 80
      %v6135 = vpop.permute.xlu0 %6134
      %6136 = vrot.lane.b32.xlu0 %v5655, 80
      %v6137 = vpop.permute.xlu0 %6136
      %6138 = vrot.lane.b32.xlu0 %v5658, 80
      %v6139 = vpop.permute.xlu0 %6138
      %6140 = vrot.lane.b32.xlu0 %v5660, 80
      %v6141 = vpop.permute.xlu0 %6140
      %6142 = vrot.lane.b32.xlu0 %v5663, 80
      %v6143 = vpop.permute.xlu0 %6142
      %6144 = vrot.lane.b32.xlu0 %v5665, 80
      %v6145 = vpop.permute.xlu0 %6144
      %6146 = vrot.lane.b32.xlu0 %v5668, 80
      %v6147 = vpop.permute.xlu0 %6146
      %6148 = vrot.lane.b32.xlu0 %v5670, 80
      %v6149 = vpop.permute.xlu0 %6148
      %6150 = vrot.lane.b32.xlu0 %v5673, 80
      %v6151 = vpop.permute.xlu0 %6150
      %6152 = vrot.lane.b32.xlu0 %v5675, 80
      %v6153 = vpop.permute.xlu0 %6152
      %6154 = vrot.lane.b32.xlu0 %v5678, 80
      %v6155 = vpop.permute.xlu0 %6154
      %6156 = vrot.lane.b32.xlu0 %v5680, 80
      %v6157 = vpop.permute.xlu0 %6156
      %6158 = vrot.lane.b32.xlu0 %v5683, 80
      %v6159 = vpop.permute.xlu0 %6158
      %6160 = vrot.lane.b32.xlu0 %v5685, 80
      %v6161 = vpop.permute.xlu0 %6160
      %6162 = vrot.lane.b32.xlu0 %v5688, 80
      %v6163 = vpop.permute.xlu0 %6162
      %6164 = vrot.lane.b32.xlu0 %v5690, 80
      %v6165 = vpop.permute.xlu0 %6164
      %6166 = vrot.lane.b32.xlu0 %v5693, 80
      %v6167 = vpop.permute.xlu0 %6166
      %6168 = vrot.lane.b32.xlu0 %v5695, 80
      %v6169 = vpop.permute.xlu0 %6168
      %6170 = vrot.lane.b32.xlu0 %v5698, 80
      %v6171 = vpop.permute.xlu0 %6170
      %6172 = vrot.lane.b32.xlu0 %v5700, 80
      %v6173 = vpop.permute.xlu0 %6172
      %6174 = vrot.lane.b32.xlu0 %v5703, 80
      %v6175 = vpop.permute.xlu0 %6174
      %6176 = vrot.lane.b32.xlu0 %v5705, 80
      %v6177 = vpop.permute.xlu0 %6176
      %6178 = vrot.lane.b32.xlu0 %v5708, 80
      %v6179 = vpop.permute.xlu0 %6178
      %6180 = vrot.lane.b32.xlu0 %v5710, 80
      %v6181 = vpop.permute.xlu0 %6180
      %6182 = vrot.lane.b32.xlu0 %v5713, 80
      %v6183 = vpop.permute.xlu0 %6182
      %6184 = vrot.lane.b32.xlu0 %v5715, 80
      %v6185 = vpop.permute.xlu0 %6184
      %6186 = vrot.lane.b32.xlu0 %v5726, 80
      %v6187 = vpop.permute.xlu0 %6186
      %6188 = vrot.lane.b32.xlu0 %v5728, 80
      %v6189 = vpop.permute.xlu0 %6188
      %6222 = vrot.lane.b32.xlu0 %v5460, 96
      %v6223 = vpop.permute.xlu0 %6222
      %6224 = vrot.lane.b32.xlu0 %v5461, 96
      %v6225 = vpop.permute.xlu0 %6224
      %6226 = vrot.lane.b32.xlu0 %v5463, 96
      %v6227 = vpop.permute.xlu0 %6226
      %6228 = vrot.lane.b32.xlu0 %v5464, 96
      %v6229 = vpop.permute.xlu0 %6228
      %6230 = vrot.lane.b32.xlu0 %v5466, 96
      %v6231 = vpop.permute.xlu0 %6230
      %6232 = vrot.lane.b32.xlu0 %v5467, 96
      %v6233 = vpop.permute.xlu0 %6232
      %6234 = vrot.lane.b32.xlu0 %v5469, 96
      %v6235 = vpop.permute.xlu0 %6234
      %6236 = vrot.lane.b32.xlu0 %v5470, 96
      %v6237 = vpop.permute.xlu0 %6236
      %6238 = vrot.lane.b32.xlu0 %v5472, 96
      %v6239 = vpop.permute.xlu0 %6238
      %6240 = vrot.lane.b32.xlu0 %v5473, 96
      %v6241 = vpop.permute.xlu0 %6240
      %6242 = vrot.lane.b32.xlu0 %v5475, 96
      %v6243 = vpop.permute.xlu0 %6242
      %6244 = vrot.lane.b32.xlu0 %v5476, 96
      %v6245 = vpop.permute.xlu0 %6244
      %6246 = vrot.lane.b32.xlu0 %v5478, 96
      %v6247 = vpop.permute.xlu0 %6246
      %6248 = vrot.lane.b32.xlu0 %v5479, 96
      %v6249 = vpop.permute.xlu0 %6248
      %6250 = vrot.lane.b32.xlu0 %v5481, 96
      %v6251 = vpop.permute.xlu0 %6250
      %6252 = vrot.lane.b32.xlu0 %v5482, 96
      %v6253 = vpop.permute.xlu0 %6252
      %6254 = vrot.lane.b32.xlu0 %v5484, 96
      %v6255 = vpop.permute.xlu0 %6254
      %6256 = vrot.lane.b32.xlu0 %v5485, 96
      %v6257 = vpop.permute.xlu0 %6256
      %6258 = vrot.lane.b32.xlu0 %v5487, 96
      %v6259 = vpop.permute.xlu0 %6258
      %6260 = vrot.lane.b32.xlu0 %v5488, 96
      %v6261 = vpop.permute.xlu0 %6260
      %6262 = vrot.lane.b32.xlu0 %v5490, 96
      %v6263 = vpop.permute.xlu0 %6262
      %6264 = vrot.lane.b32.xlu0 %v5491, 96
      %v6265 = vpop.permute.xlu0 %6264
      %6266 = vrot.lane.b32.xlu0 %v5493, 96
      %v6267 = vpop.permute.xlu0 %6266
      %6268 = vrot.lane.b32.xlu0 %v5494, 96
      %v6269 = vpop.permute.xlu0 %6268
      %6270 = vrot.lane.b32.xlu0 %v5496, 96
      %v6271 = vpop.permute.xlu0 %6270
      %6272 = vrot.lane.b32.xlu0 %v5497, 96
      %v6273 = vpop.permute.xlu0 %6272
      %6274 = vrot.lane.b32.xlu0 %v5499, 96
      %v6275 = vpop.permute.xlu0 %6274
      %6276 = vrot.lane.b32.xlu0 %v5500, 96
      %v6277 = vpop.permute.xlu0 %6276
      %6278 = vrot.lane.b32.xlu0 %v5502, 96
      %v6279 = vpop.permute.xlu0 %6278
      %6280 = vrot.lane.b32.xlu0 %v5503, 96
      %v6281 = vpop.permute.xlu0 %6280
      %6282 = vrot.lane.b32.xlu0 %v5505, 96
      %v6283 = vpop.permute.xlu0 %6282
      %6284 = vrot.lane.b32.xlu0 %v5506, 96
      %v6285 = vpop.permute.xlu0 %6284
      %6318 = vrot.lane.b32.xlu0 %v5568, 112
      %v6319 = vpop.permute.xlu0 %6318
      %6320 = vrot.lane.b32.xlu0 %v5570, 112
      %v6321 = vpop.permute.xlu0 %6320
      %6322 = vrot.lane.b32.xlu0 %v5573, 112
      %v6323 = vpop.permute.xlu0 %6322
      %6324 = vrot.lane.b32.xlu0 %v5575, 112
      %v6325 = vpop.permute.xlu0 %6324
      %6326 = vrot.lane.b32.xlu0 %v5578, 112
      %v6327 = vpop.permute.xlu0 %6326
      %6328 = vrot.lane.b32.xlu0 %v5580, 112
      %v6329 = vpop.permute.xlu0 %6328
      %6330 = vrot.lane.b32.xlu0 %v5583, 112
      %v6331 = vpop.permute.xlu0 %6330
      %6332 = vrot.lane.b32.xlu0 %v5585, 112
      %v6333 = vpop.permute.xlu0 %6332
      %6334 = vrot.lane.b32.xlu0 %v5588, 112
      %v6335 = vpop.permute.xlu0 %6334
      %6336 = vrot.lane.b32.xlu0 %v5590, 112
      %v6337 = vpop.permute.xlu0 %6336
      %6338 = vrot.lane.b32.xlu0 %v5593, 112
      %v6339 = vpop.permute.xlu0 %6338
      %6340 = vrot.lane.b32.xlu0 %v5595, 112
      %v6341 = vpop.permute.xlu0 %6340
      %6342 = vrot.lane.b32.xlu0 %v5598, 112
      %v6343 = vpop.permute.xlu0 %6342
      %6344 = vrot.lane.b32.xlu0 %v5600, 112
      %v6345 = vpop.permute.xlu0 %6344
      %6346 = vrot.lane.b32.xlu0 %v5603, 112
      %v6347 = vpop.permute.xlu0 %6346
      %6348 = vrot.lane.b32.xlu0 %v5605, 112
      %v6349 = vpop.permute.xlu0 %6348
      %6350 = vrot.lane.b32.xlu0 %v5608, 112
      %v6351 = vpop.permute.xlu0 %6350
      %6352 = vrot.lane.b32.xlu0 %v5610, 112
      %v6353 = vpop.permute.xlu0 %6352
      %6354 = vrot.lane.b32.xlu0 %v5613, 112
      %v6355 = vpop.permute.xlu0 %6354
      %6356 = vrot.lane.b32.xlu0 %v5615, 112
      %v6357 = vpop.permute.xlu0 %6356
      %6358 = vrot.lane.b32.xlu0 %v5618, 112
      %v6359 = vpop.permute.xlu0 %6358
      %6360 = vrot.lane.b32.xlu0 %v5620, 112
      %v6361 = vpop.permute.xlu0 %6360
      %6362 = vrot.lane.b32.xlu0 %v5623, 112
      %v6363 = vpop.permute.xlu0 %6362
      %6364 = vrot.lane.b32.xlu0 %v5625, 112
      %v6365 = vpop.permute.xlu0 %6364
      %6366 = vrot.lane.b32.xlu0 %v5628, 112
      %v6367 = vpop.permute.xlu0 %6366
      %6368 = vrot.lane.b32.xlu0 %v5630, 112
      %v6369 = vpop.permute.xlu0 %6368
      %6370 = vrot.lane.b32.xlu0 %v5633, 112
      %v6371 = vpop.permute.xlu0 %6370
      %6372 = vrot.lane.b32.xlu0 %v5635, 112
      %v6373 = vpop.permute.xlu0 %6372
      %6374 = vrot.lane.b32.xlu0 %v5721, 112
      %v6375 = vpop.permute.xlu0 %6374
      %6376 = vrot.lane.b32.xlu0 %v5723, 112
      %v6377 = vpop.permute.xlu0 %6376
      %6378 = vrot.lane.b32.xlu0 %v5734, 112
      %v6379 = vpop.permute.xlu0 %6378
      %6380 = vrot.lane.b32.xlu0 %v5736, 112
      %v6381 = vpop.permute.xlu0 %6380
      %v6414 = vsel %vm492, %v5454, %v5743
      %v6415 = vsel %vm492, %v5455, %v5745
      %v6416 = vsel %vm492, %v5457, %v5747
      %v6417 = vsel %vm492, %v5458, %v5749
      %v6418 = vsel %vm492, %v5460, %v5751
      %v6419 = vsel %vm492, %v5461, %v5753
      %v6420 = vsel %vm492, %v5463, %v5755
      %v6421 = vsel %vm492, %v5464, %v5757
      %v6422 = vsel %vm492, %v5466, %v5759
      %v6423 = vsel %vm492, %v5467, %v5761
      %v6424 = vsel %vm492, %v5469, %v5763
      %v6425 = vsel %vm492, %v5470, %v5765
      %v6426 = vsel %vm492, %v5472, %v5767
      %v6427 = vsel %vm492, %v5473, %v5769
      %v6428 = vsel %vm492, %v5475, %v5771
      %v6429 = vsel %vm492, %v5476, %v5773
      %v6430 = vsel %vm492, %v5478, %v5775
      %v6431 = vsel %vm492, %v5479, %v5777
      %v6432 = vsel %vm492, %v5481, %v5779
      %v6433 = vsel %vm492, %v5482, %v5781
      %v6434 = vsel %vm492, %v5484, %v5783
      %v6435 = vsel %vm492, %v5485, %v5785
      %v6436 = vsel %vm492, %v5487, %v5787
      %v6437 = vsel %vm492, %v5488, %v5789
      %v6438 = vsel %vm492, %v5490, %v5791
      %v6439 = vsel %vm492, %v5491, %v5793
      %v6440 = vsel %vm492, %v5493, %v5795
      %v6441 = vsel %vm492, %v5494, %v5797
      %v6442 = vsel %vm492, %v5496, %v5799
      %v6443 = vsel %vm492, %v5497, %v5801
      %v6444 = vsel %vm492, %v5499, %v5803
      %v6445 = vsel %vm492, %v5500, %v5805
      %v6446 = vsel %vm1899, %v6414, %v5839
      %v6447 = vsel %vm1899, %v6415, %v5841
      %v6448 = vsel %vm1899, %v6416, %v5843
      %v6449 = vsel %vm1899, %v6417, %v5845
      %v6450 = vsel %vm1899, %v6418, %v5847
      %v6451 = vsel %vm1899, %v6419, %v5849
      %v6452 = vsel %vm1899, %v6420, %v5851
      %v6453 = vsel %vm1899, %v6421, %v5853
      %v6454 = vsel %vm1899, %v6422, %v5855
      %v6455 = vsel %vm1899, %v6423, %v5857
      %v6456 = vsel %vm1899, %v6424, %v5859
      %v6457 = vsel %vm1899, %v6425, %v5861
      %v6458 = vsel %vm1899, %v6426, %v5863
      %v6459 = vsel %vm1899, %v6427, %v5865
      %v6460 = vsel %vm1899, %v6428, %v5867
      %v6461 = vsel %vm1899, %v6429, %v5869
      %v6462 = vsel %vm1899, %v6430, %v5871
      %v6463 = vsel %vm1899, %v6431, %v5873
      %v6464 = vsel %vm1899, %v6432, %v5875
      %v6465 = vsel %vm1899, %v6433, %v5877
      %v6466 = vsel %vm1899, %v6434, %v5879
      %v6467 = vsel %vm1899, %v6435, %v5881
      %v6468 = vsel %vm1899, %v6436, %v5883
      %v6469 = vsel %vm1899, %v6437, %v5885
      %v6470 = vsel %vm1899, %v6438, %v5887
      %v6471 = vsel %vm1899, %v6439, %v5889
      %v6472 = vsel %vm1899, %v6440, %v5891
      %v6473 = vsel %vm1899, %v6441, %v5893
      %v6474 = vsel %vm1899, %v6442, %v5895
      %v6475 = vsel %vm1899, %v6443, %v5897
      %v6476 = vsel %vm1899, %v6444, %v5899
      %v6477 = vsel %vm1899, %v6445, %v5901
      %v6478 = vsel %vm3469, %v6446, %v5935
      %v6479 = vsel %vm3469, %v6447, %v5937
      %v6480 = vsel %vm3469, %v6448, %v5939
      %v6481 = vsel %vm3469, %v6449, %v5941
      %v6482 = vsel %vm3469, %v6450, %v5943
      %v6483 = vsel %vm3469, %v6451, %v5945
      %v6484 = vsel %vm3469, %v6452, %v5947
      %v6485 = vsel %vm3469, %v6453, %v5949
      %v6486 = vsel %vm3469, %v6454, %v5951
      %v6487 = vsel %vm3469, %v6455, %v5953
      %v6488 = vsel %vm3469, %v6456, %v5955
      %v6489 = vsel %vm3469, %v6457, %v5957
      %v6490 = vsel %vm3469, %v6458, %v5959
      %v6491 = vsel %vm3469, %v6459, %v5961
      %v6492 = vsel %vm3469, %v6460, %v5963
      %v6493 = vsel %vm3469, %v6461, %v5965
      %v6494 = vsel %vm3469, %v6462, %v5967
      %v6495 = vsel %vm3469, %v6463, %v5969
      %v6496 = vsel %vm3469, %v6464, %v5971
      %v6497 = vsel %vm3469, %v6465, %v5973
      %v6498 = vsel %vm3469, %v6466, %v5975
      %v6499 = vsel %vm3469, %v6467, %v5977
      %v6500 = vsel %vm3469, %v6468, %v5979
      %v6501 = vsel %vm3469, %v6469, %v5981
      %v6502 = vsel %vm3469, %v6470, %v5983
      %v6503 = vsel %vm3469, %v6471, %v5985
      %v6504 = vsel %vm3469, %v6472, %v5987
      %v6505 = vsel %vm3469, %v6473, %v5989
      %v6506 = vsel %vm3469, %v6474, %v5991
      %v6507 = vsel %vm3469, %v6475, %v5993
      %v6508 = vsel %vm3469, %v6476, %v5995
      %v6509 = vsel %vm3469, %v6477, %v5997
      %v6510 = vsel %vm3535, %v6478, %v6031
      %v6511 = vsel %vm3535, %v6479, %v6033
      %v6512 = vsel %vm3535, %v6480, %v6035
      %v6513 = vsel %vm3535, %v6481, %v6037
      %v6514 = vsel %vm3535, %v6482, %v6039
      %v6515 = vsel %vm3535, %v6483, %v6041
      %v6516 = vsel %vm3535, %v6484, %v6043
      %v6517 = vsel %vm3535, %v6485, %v6045
      %v6518 = vsel %vm3535, %v6486, %v6047
      %v6519 = vsel %vm3535, %v6487, %v6049
      %v6520 = vsel %vm3535, %v6488, %v6051
      %v6521 = vsel %vm3535, %v6489, %v6053
      %v6522 = vsel %vm3535, %v6490, %v6055
      %v6523 = vsel %vm3535, %v6491, %v6057
      %v6524 = vsel %vm3535, %v6492, %v6059
      %v6525 = vsel %vm3535, %v6493, %v6061
      %v6526 = vsel %vm3535, %v6494, %v6063
      %v6527 = vsel %vm3535, %v6495, %v6065
      %v6528 = vsel %vm3535, %v6496, %v6067
      %v6529 = vsel %vm3535, %v6497, %v6069
      %v6530 = vsel %vm3535, %v6498, %v6071
      %v6531 = vsel %vm3535, %v6499, %v6073
      %v6532 = vsel %vm3535, %v6500, %v6075
      %v6533 = vsel %vm3535, %v6501, %v6077
      %v6534 = vsel %vm3535, %v6502, %v6079
      %v6535 = vsel %vm3535, %v6503, %v6081
      %v6536 = vsel %vm3535, %v6504, %v6083
      %v6537 = vsel %vm3535, %v6505, %v6085
      %v6538 = vsel %vm3535, %v6506, %v6087
      %v6539 = vsel %vm3535, %v6507, %v6089
      %v6540 = vsel %vm3535, %v6508, %v6091
      %v6541 = vsel %vm3535, %v6509, %v6093
      %vm6542 = vcmask 654336
      %v6543 = vsel %vm6542, %v6510, %v6127
      %v6544 = vsel %vm6542, %v6511, %v6129
      %v6545 = vsel %vm6542, %v6512, %v6131
      %v6546 = vsel %vm6542, %v6513, %v6133
      %v6547 = vsel %vm6542, %v6514, %v6135
      %v6548 = vsel %vm6542, %v6515, %v6137
      %v6549 = vsel %vm6542, %v6516, %v6139
      %v6550 = vsel %vm6542, %v6517, %v6141
      %v6551 = vsel %vm6542, %v6518, %v6143
      %v6552 = vsel %vm6542, %v6519, %v6145
      %v6553 = vsel %vm6542, %v6520, %v6147
      %v6554 = vsel %vm6542, %v6521, %v6149
      %v6555 = vsel %vm6542, %v6522, %v6151
      %v6556 = vsel %vm6542, %v6523, %v6153
      %v6557 = vsel %vm6542, %v6524, %v6155
      %v6558 = vsel %vm6542, %v6525, %v6157
      %v6559 = vsel %vm6542, %v6526, %v6159
      %v6560 = vsel %vm6542, %v6527, %v6161
      %v6561 = vsel %vm6542, %v6528, %v6163
      %v6562 = vsel %vm6542, %v6529, %v6165
      %v6563 = vsel %vm6542, %v6530, %v6167
      %v6564 = vsel %vm6542, %v6531, %v6169
      %v6565 = vsel %vm6542, %v6532, %v6171
      %v6566 = vsel %vm6542, %v6533, %v6173
      %v6567 = vsel %vm6542, %v6534, %v6175
      %v6568 = vsel %vm6542, %v6535, %v6177
      %v6569 = vsel %vm6542, %v6536, %v6179
      %v6570 = vsel %vm6542, %v6537, %v6181
      %v6571 = vsel %vm6542, %v6538, %v6183
      %v6572 = vsel %vm6542, %v6539, %v6185
      %v6573 = vsel %vm6542, %v6540, %v6187
      %v6574 = vsel %vm6542, %v6541, %v6189
      %vm6575 = vcmask 785408
      %v6576 = vsel %vm6575, %v6543, %v6223
      %v6577 = vsel %vm6575, %v6544, %v6225
      %v6578 = vsel %vm6575, %v6545, %v6227
      %v6579 = vsel %vm6575, %v6546, %v6229
      %v6580 = vsel %vm6575, %v6547, %v6231
      %v6581 = vsel %vm6575, %v6548, %v6233
      %v6582 = vsel %vm6575, %v6549, %v6235
      %v6583 = vsel %vm6575, %v6550, %v6237
      %v6584 = vsel %vm6575, %v6551, %v6239
      %v6585 = vsel %vm6575, %v6552, %v6241
      %v6586 = vsel %vm6575, %v6553, %v6243
      %v6587 = vsel %vm6575, %v6554, %v6245
      %v6588 = vsel %vm6575, %v6555, %v6247
      %v6589 = vsel %vm6575, %v6556, %v6249
      %v6590 = vsel %vm6575, %v6557, %v6251
      %v6591 = vsel %vm6575, %v6558, %v6253
      %v6592 = vsel %vm6575, %v6559, %v6255
      %v6593 = vsel %vm6575, %v6560, %v6257
      %v6594 = vsel %vm6575, %v6561, %v6259
      %v6595 = vsel %vm6575, %v6562, %v6261
      %v6596 = vsel %vm6575, %v6563, %v6263
      %v6597 = vsel %vm6575, %v6564, %v6265
      %v6598 = vsel %vm6575, %v6565, %v6267
      %v6599 = vsel %vm6575, %v6566, %v6269
      %v6600 = vsel %vm6575, %v6567, %v6271
      %v6601 = vsel %vm6575, %v6568, %v6273
      %v6602 = vsel %vm6575, %v6569, %v6275
      %v6603 = vsel %vm6575, %v6570, %v6277
      %v6604 = vsel %vm6575, %v6571, %v6279
      %v6605 = vsel %vm6575, %v6572, %v6281
      %v6606 = vsel %vm6575, %v6573, %v6283
      %v6607 = vsel %vm6575, %v6574, %v6285
      %vm6608 = vcmask 916480
      %v6609 = vsel %vm6608, %v6576, %v6319
      %v6610 = vsel %vm6608, %v6577, %v6321
      %v6611 = vsel %vm6608, %v6578, %v6323
      %v6612 = vsel %vm6608, %v6579, %v6325
      %v6613 = vsel %vm6608, %v6580, %v6327
      %v6614 = vsel %vm6608, %v6581, %v6329
      %v6615 = vsel %vm6608, %v6582, %v6331
      %v6616 = vsel %vm6608, %v6583, %v6333
      %v6617 = vsel %vm6608, %v6584, %v6335
      %v6618 = vsel %vm6608, %v6585, %v6337
      %v6619 = vsel %vm6608, %v6586, %v6339
      %v6620 = vsel %vm6608, %v6587, %v6341
      %v6621 = vsel %vm6608, %v6588, %v6343
      %v6622 = vsel %vm6608, %v6589, %v6345
      %v6623 = vsel %vm6608, %v6590, %v6347
      %v6624 = vsel %vm6608, %v6591, %v6349
      %v6625 = vsel %vm6608, %v6592, %v6351
      %v6626 = vsel %vm6608, %v6593, %v6353
      %v6627 = vsel %vm6608, %v6594, %v6355
      %v6628 = vsel %vm6608, %v6595, %v6357
      %v6629 = vsel %vm6608, %v6596, %v6359
      %v6630 = vsel %vm6608, %v6597, %v6361
      %v6631 = vsel %vm6608, %v6598, %v6363
      %v6632 = vsel %vm6608, %v6599, %v6365
      %v6633 = vsel %vm6608, %v6600, %v6367
      %v6634 = vsel %vm6608, %v6601, %v6369
      %v6635 = vsel %vm6608, %v6602, %v6371
      %v6636 = vsel %vm6608, %v6603, %v6373
      %v6637 = vsel %vm6608, %v6604, %v6375
      %v6638 = vsel %vm6608, %v6605, %v6377
      %v6639 = vsel %vm6608, %v6606, %v6379
      %v6640 = vsel %vm6608, %v6607, %v6381
      %v6641 = vld [vmem:[%s6] sm:$0xff]
      %v6642 = vld [vmem:[%s6 + $0x8] sm:$0xff]
      %v6643 = vld [vmem:[%s6 + $0x10] sm:$0xff]
      %v6644 = vld [vmem:[%s6 + $0x18] sm:$0xff]
      %v6645 = vld [vmem:[%s6 + $0x20] sm:$0xff]
      %v6646 = vld [vmem:[%s6 + $0x28] sm:$0xff]
      %v6647 = vld [vmem:[%s6 + $0x30] sm:$0xff]
      %v6648 = vld [vmem:[%s6 + $0x38] sm:$0xff]
      %v6649 = vld [vmem:[%s6 + $0x40] sm:$0xff]
      %v6650 = vld [vmem:[%s6 + $0x48] sm:$0xff]
      %v6651 = vld [vmem:[%s6 + $0x50] sm:$0xff]
      %v6652 = vld [vmem:[%s6 + $0x58] sm:$0xff]
      %v6653 = vld [vmem:[%s6 + $0x60] sm:$0xff]
      %v6654 = vld [vmem:[%s6 + $0x68] sm:$0xff]
      %v6655 = vld [vmem:[%s6 + $0x70] sm:$0xff]
      %v6656 = vld [vmem:[%s6 + $0x78] sm:$0xff]
      %v6657 = vld [vmem:[%s6 + $0x80] sm:$0xff]
      %v6658 = vld [vmem:[%s6 + $0x88] sm:$0xff]
      %v6659 = vld [vmem:[%s7] sm:$0x1]
      %v6661 = vperm.slane %v6659, 0
      %v6663 = vsel %vm492, %v5648, 0
      %v6665 = vsel %vm492, %v5650, 0
      %v6667 = vsel %vm492, %v5653, 0
      %v6669 = vsel %vm492, %v5655, 0
      %v6671 = vsel %vm492, %v5658, 0
      %v6673 = vsel %vm492, %v5660, 0
      %v6675 = vsel %vm492, %v5663, 0
      %v6677 = vsel %vm492, %v5665, 0
      %v6679 = vsel %vm492, %v5668, 0
      %v6681 = vsel %vm492, %v5670, 0
      %v6683 = vsel %vm492, %v5673, 0
      %v6685 = vsel %vm492, %v5675, 0
      %v6687 = vsel %vm492, %v5678, 0
      %v6689 = vsel %vm492, %v5680, 0
      %v6691 = vsel %vm492, %v5683, 0
      %v6693 = vsel %vm492, %v5685, 0
      %v6695 = vsel %vm492, %v5688, 0
      %v6697 = vsel %vm492, %v5690, 0
      %v6699 = vsel %vm492, %v5693, 0
      %v6701 = vsel %vm492, %v5695, 0
      %v6703 = vsel %vm492, %v5698, 0
      %v6705 = vsel %vm492, %v5700, 0
      %v6707 = vsel %vm492, %v5703, 0
      %v6709 = vsel %vm492, %v5705, 0
      %v6711 = vsel %vm492, %v5708, 0
      %v6713 = vsel %vm492, %v5710, 0
      %v6715 = vsel %vm492, %v5713, 0
      %v6717 = vsel %vm492, %v5715, 0
      %v6719 = vsel %vm492, %v5726, 0
      %v6721 = vsel %vm492, %v5728, 0
      %v6723 = vsel %vm492, %v5739, 0
      %v6725 = vsel %vm492, %v5741, 0
      %6727 = vmatpush.msra.mxu0 %v6656
      %6728 = vmatpush.msra.mxu0 %v6655
      %6729 = vmatpush.msra.mxu0 %v6654
      %6730 = vmatpush.msra.mxu0 %v6653
      %6731 = vmatpush.msra.mxu0 %v6652
      %6732 = vmatpush.msra.mxu0 %v6651
      %6733 = vmatpush.msra.mxu0 %v6650
      %6734 = vmatpush.msra.mxu0 %v6649
      %6735 = vmatpush.msra.mxu0 %v6648
      %6736 = vmatpush.msra.mxu0 %v6647
      %6737 = vmatpush.msra.mxu0 %v6646
      %6738 = vmatpush.msra.mxu0 %v6645
      %6739 = vmatpush.msra.mxu0 %v6644
      %6740 = vmatpush.msra.mxu0 %v6643
      %6741 = vmatpush.msra.mxu0 %v6642
      %6742 = vmatpush.msra.mxu0 %v6641
      %6743 = vmatmul.f32.gmra.mxu0 %v6609
      %v6744 = vpop.f32.mrf.mxu0
      %v6745 = vadd.f32 %v6661, %v6744
      %6746 = vmatmul.f32.gmra.mxu0 %v6610
      %v6747 = vpop.f32.mrf.mxu0
      %v6748 = vadd.f32 %v6661, %v6747
      %6749 = vmatmul.f32.gmra.mxu0 %v6611
      %v6750 = vpop.f32.mrf.mxu0
      %v6751 = vadd.f32 %v6661, %v6750
      %6752 = vmatmul.f32.gmra.mxu0 %v6612
      %v6753 = vpop.f32.mrf.mxu0
      %v6754 = vadd.f32 %v6661, %v6753
      %6755 = vmatmul.f32.gmra.mxu0 %v6613
      %v6756 = vpop.f32.mrf.mxu0
      %v6757 = vadd.f32 %v6661, %v6756
      %6758 = vmatmul.f32.gmra.mxu0 %v6614
      %v6759 = vpop.f32.mrf.mxu0
      %v6760 = vadd.f32 %v6661, %v6759
      %6761 = vmatmul.f32.gmra.mxu0 %v6615
      %v6762 = vpop.f32.mrf.mxu0
      %v6763 = vadd.f32 %v6661, %v6762
      %6764 = vmatmul.f32.gmra.mxu0 %v6616
      %v6765 = vpop.f32.mrf.mxu0
      %v6766 = vadd.f32 %v6661, %v6765
      %6767 = vmatmul.f32.gmra.mxu0 %v6617
      %v6768 = vpop.f32.mrf.mxu0
      %v6769 = vadd.f32 %v6661, %v6768
      %6770 = vmatmul.f32.gmra.mxu0 %v6618
      %v6771 = vpop.f32.mrf.mxu0
      %v6772 = vadd.f32 %v6661, %v6771
      %6773 = vmatmul.f32.gmra.mxu0 %v6619
      %v6774 = vpop.f32.mrf.mxu0
      %v6775 = vadd.f32 %v6661, %v6774
      %6776 = vmatmul.f32.gmra.mxu0 %v6620
      %v6777 = vpop.f32.mrf.mxu0
      %v6778 = vadd.f32 %v6661, %v6777
      %6779 = vmatmul.f32.gmra.mxu0 %v6621
      %v6780 = vpop.f32.mrf.mxu0
      %v6781 = vadd.f32 %v6661, %v6780
      %6782 = vmatmul.f32.gmra.mxu0 %v6622
      %v6783 = vpop.f32.mrf.mxu0
      %v6784 = vadd.f32 %v6661, %v6783
      %6785 = vmatmul.f32.gmra.mxu0 %v6623
      %v6786 = vpop.f32.mrf.mxu0
      %v6787 = vadd.f32 %v6661, %v6786
      %6788 = vmatmul.f32.gmra.mxu0 %v6624
      %v6789 = vpop.f32.mrf.mxu0
      %v6790 = vadd.f32 %v6661, %v6789
      %6791 = vmatmul.f32.gmra.mxu0 %v6625
      %v6792 = vpop.f32.mrf.mxu0
      %v6793 = vadd.f32 %v6661, %v6792
      %6794 = vmatmul.f32.gmra.mxu0 %v6626
      %v6795 = vpop.f32.mrf.mxu0
      %v6796 = vadd.f32 %v6661, %v6795
      %6797 = vmatmul.f32.gmra.mxu0 %v6627
      %v6798 = vpop.f32.mrf.mxu0
      %v6799 = vadd.f32 %v6661, %v6798
      %6800 = vmatmul.f32.gmra.mxu0 %v6628
      %v6801 = vpop.f32.mrf.mxu0
      %v6802 = vadd.f32 %v6661, %v6801
      %6803 = vmatmul.f32.gmra.mxu0 %v6629
      %v6804 = vpop.f32.mrf.mxu0
      %v6805 = vadd.f32 %v6661, %v6804
      %6806 = vmatmul.f32.gmra.mxu0 %v6630
      %v6807 = vpop.f32.mrf.mxu0
      %v6808 = vadd.f32 %v6661, %v6807
      %6809 = vmatmul.f32.gmra.mxu0 %v6631
      %v6810 = vpop.f32.mrf.mxu0
      %v6811 = vadd.f32 %v6661, %v6810
      %6812 = vmatmul.f32.gmra.mxu0 %v6632
      %v6813 = vpop.f32.mrf.mxu0
      %v6814 = vadd.f32 %v6661, %v6813
      %6815 = vmatmul.f32.gmra.mxu0 %v6633
      %v6816 = vpop.f32.mrf.mxu0
      %v6817 = vadd.f32 %v6661, %v6816
      %6818 = vmatmul.f32.gmra.mxu0 %v6634
      %v6819 = vpop.f32.mrf.mxu0
      %v6820 = vadd.f32 %v6661, %v6819
      %6821 = vmatmul.f32.gmra.mxu0 %v6635
      %v6822 = vpop.f32.mrf.mxu0
      %v6823 = vadd.f32 %v6661, %v6822
      %6824 = vmatmul.f32.gmra.mxu0 %v6636
      %v6825 = vpop.f32.mrf.mxu0
      %v6826 = vadd.f32 %v6661, %v6825
      %6827 = vmatmul.f32.gmra.mxu0 %v6637
      %v6828 = vpop.f32.mrf.mxu0
      %v6829 = vadd.f32 %v6661, %v6828
      %6830 = vmatmul.f32.gmra.mxu0 %v6638
      %v6831 = vpop.f32.mrf.mxu0
      %v6832 = vadd.f32 %v6661, %v6831
      %6833 = vmatmul.f32.gmra.mxu0 %v6639
      %v6834 = vpop.f32.mrf.mxu0
      %v6835 = vadd.f32 %v6661, %v6834
      %6836 = vmatmul.f32.gmra.mxu0 %v6640
      %v6837 = vpop.f32.mrf.mxu0
      %v6838 = vadd.f32 %v6661, %v6837
      %6839 = vdwg.mxu0
      %6840 = vmatpush.msra.mxu0 0.0
      %6841 = vmatpush.msra.mxu0 0.0
      %6842 = vmatpush.msra.mxu0 0.0
      %6843 = vmatpush.msra.mxu0 0.0
      %6844 = vmatpush.msra.mxu0 0.0
      %6845 = vmatpush.msra.mxu0 0.0
      %6846 = vmatpush.msra.mxu0 0.0
      %6847 = vmatpush.msra.mxu0 0.0
      %6848 = vmatpush.msra.mxu0 0.0
      %6849 = vmatpush.msra.mxu0 0.0
      %6850 = vmatpush.msra.mxu0 0.0
      %6851 = vmatpush.msra.mxu0 0.0
      %6852 = vmatpush.msra.mxu0 0.0
      %6853 = vmatpush.msra.mxu0 0.0
      %6854 = vmatpush.msra.mxu0 %v6658
      %6855 = vmatpush.msra.mxu0 %v6657
      %6856 = vmatmul.f32.gmra.mxu0 %v6663
      %v6857 = vpop.f32.mrf.mxu0
      %v6858 = vadd.f32 %v6745, %v6857
      %6859 = vmatmul.f32.gmra.mxu0 %v6665
      %v6860 = vpop.f32.mrf.mxu0
      %v6861 = vadd.f32 %v6748, %v6860
      %6862 = vmatmul.f32.gmra.mxu0 %v6667
      %v6863 = vpop.f32.mrf.mxu0
      %v6864 = vadd.f32 %v6751, %v6863
      %6865 = vmatmul.f32.gmra.mxu0 %v6669
      %v6866 = vpop.f32.mrf.mxu0
      %v6867 = vadd.f32 %v6754, %v6866
      %6868 = vmatmul.f32.gmra.mxu0 %v6671
      %v6869 = vpop.f32.mrf.mxu0
      %v6870 = vadd.f32 %v6757, %v6869
      %6871 = vmatmul.f32.gmra.mxu0 %v6673
      %v6872 = vpop.f32.mrf.mxu0
      %v6873 = vadd.f32 %v6760, %v6872
      %6874 = vmatmul.f32.gmra.mxu0 %v6675
      %v6875 = vpop.f32.mrf.mxu0
      %v6876 = vadd.f32 %v6763, %v6875
      %6877 = vmatmul.f32.gmra.mxu0 %v6677
      %v6878 = vpop.f32.mrf.mxu0
      %v6879 = vadd.f32 %v6766, %v6878
      %6880 = vmatmul.f32.gmra.mxu0 %v6679
      %v6881 = vpop.f32.mrf.mxu0
      %v6882 = vadd.f32 %v6769, %v6881
      %6883 = vmatmul.f32.gmra.mxu0 %v6681
      %v6884 = vpop.f32.mrf.mxu0
      %v6885 = vadd.f32 %v6772, %v6884
      %6886 = vmatmul.f32.gmra.mxu0 %v6683
      %v6887 = vpop.f32.mrf.mxu0
      %v6888 = vadd.f32 %v6775, %v6887
      %6889 = vmatmul.f32.gmra.mxu0 %v6685
      %v6890 = vpop.f32.mrf.mxu0
      %v6891 = vadd.f32 %v6778, %v6890
      %6892 = vmatmul.f32.gmra.mxu0 %v6687
      %v6893 = vpop.f32.mrf.mxu0
      %v6894 = vadd.f32 %v6781, %v6893
      %6895 = vmatmul.f32.gmra.mxu0 %v6689
      %v6896 = vpop.f32.mrf.mxu0
      %v6897 = vadd.f32 %v6784, %v6896
      %6898 = vmatmul.f32.gmra.mxu0 %v6691
      %v6899 = vpop.f32.mrf.mxu0
      %v6900 = vadd.f32 %v6787, %v6899
      %6901 = vmatmul.f32.gmra.mxu0 %v6693
      %v6902 = vpop.f32.mrf.mxu0
      %v6903 = vadd.f32 %v6790, %v6902
      %6904 = vmatmul.f32.gmra.mxu0 %v6695
      %v6905 = vpop.f32.mrf.mxu0
      %v6906 = vadd.f32 %v6793, %v6905
      %6907 = vmatmul.f32.gmra.mxu0 %v6697
      %v6908 = vpop.f32.mrf.mxu0
      %v6909 = vadd.f32 %v6796, %v6908
      %6910 = vmatmul.f32.gmra.mxu0 %v6699
      %v6911 = vpop.f32.mrf.mxu0
      %v6912 = vadd.f32 %v6799, %v6911
      %6913 = vmatmul.f32.gmra.mxu0 %v6701
      %v6914 = vpop.f32.mrf.mxu0
      %v6915 = vadd.f32 %v6802, %v6914
      %6916 = vmatmul.f32.gmra.mxu0 %v6703
      %v6917 = vpop.f32.mrf.mxu0
      %v6918 = vadd.f32 %v6805, %v6917
      %6919 = vmatmul.f32.gmra.mxu0 %v6705
      %v6920 = vpop.f32.mrf.mxu0
      %v6921 = vadd.f32 %v6808, %v6920
      %6922 = vmatmul.f32.gmra.mxu0 %v6707
      %v6923 = vpop.f32.mrf.mxu0
      %v6924 = vadd.f32 %v6811, %v6923
      %6925 = vmatmul.f32.gmra.mxu0 %v6709
      %v6926 = vpop.f32.mrf.mxu0
      %v6927 = vadd.f32 %v6814, %v6926
      %6928 = vmatmul.f32.gmra.mxu0 %v6711
      %v6929 = vpop.f32.mrf.mxu0
      %v6930 = vadd.f32 %v6817, %v6929
      %6931 = vmatmul.f32.gmra.mxu0 %v6713
      %v6932 = vpop.f32.mrf.mxu0
      %v6933 = vadd.f32 %v6820, %v6932
      %6934 = vmatmul.f32.gmra.mxu0 %v6715
      %v6935 = vpop.f32.mrf.mxu0
      %v6936 = vadd.f32 %v6823, %v6935
      %6937 = vmatmul.f32.gmra.mxu0 %v6717
      %v6938 = vpop.f32.mrf.mxu0
      %v6939 = vadd.f32 %v6826, %v6938
      %6940 = vmatmul.f32.gmra.mxu0 %v6719
      %v6941 = vpop.f32.mrf.mxu0
      %v6942 = vadd.f32 %v6829, %v6941
      %6943 = vmatmul.f32.gmra.mxu0 %v6721
      %v6944 = vpop.f32.mrf.mxu0
      %v6945 = vadd.f32 %v6832, %v6944
      %6946 = vmatmul.f32.gmra.mxu0 %v6723
      %v6947 = vpop.f32.mrf.mxu0
      %v6948 = vadd.f32 %v6835, %v6947
      %6949 = vmatmul.f32.gmra.mxu0 %v6725
      %v6950 = vpop.f32.mrf.mxu0
      %v6951 = vadd.f32 %v6838, %v6950
      %6952 = vdwg.mxu0
      %v6953 = vadd.f32 %v3696, %v6858
      %v6954 = vadd.f32 %v3699, %v6861
      %v6955 = vadd.f32 %v3702, %v6864
      %v6956 = vadd.f32 %v3705, %v6867
      %v6957 = vadd.f32 %v3708, %v6870
      %v6958 = vadd.f32 %v3711, %v6873
      %v6959 = vadd.f32 %v3714, %v6876
      %v6960 = vadd.f32 %v3717, %v6879
      %v6961 = vadd.f32 %v3720, %v6882
      %v6962 = vadd.f32 %v3723, %v6885
      %v6963 = vadd.f32 %v3726, %v6888
      %v6964 = vadd.f32 %v3729, %v6891
      %v6965 = vadd.f32 %v3732, %v6894
      %v6966 = vadd.f32 %v3735, %v6897
      %v6967 = vadd.f32 %v3738, %v6900
      %v6968 = vadd.f32 %v3741, %v6903
      %v6969 = vadd.f32 %v3744, %v6906
      %v6970 = vadd.f32 %v3747, %v6909
      %v6971 = vadd.f32 %v3750, %v6912
      %v6972 = vadd.f32 %v3753, %v6915
      %v6973 = vadd.f32 %v3756, %v6918
      %v6974 = vadd.f32 %v3759, %v6921
      %v6975 = vadd.f32 %v3762, %v6924
      %v6976 = vadd.f32 %v3765, %v6927
      %v6977 = vadd.f32 %v3768, %v6930
      %v6978 = vadd.f32 %v3771, %v6933
      %v6979 = vadd.f32 %v3774, %v6936
      %v6980 = vadd.f32 %v3777, %v6939
      %v6981 = vadd.f32 %v3780, %v6942
      %v6982 = vadd.f32 %v3783, %v6945
      %v6983 = vadd.f32 %v3786, %v6948
      %v6984 = vadd.f32 %v3789, %v6951
      %6985 = vst.msk [vmem:[%s379] sm:$0xff] %vm492, %v6953
      %6986 = vst.msk [vmem:[%s379 + $0x8] sm:$0xff] %vm492, %v6954
      %6987 = vst.msk [vmem:[%s379 + $0x10] sm:$0xff] %vm492, %v6955
      %6988 = vst.msk [vmem:[%s379 + $0x18] sm:$0xff] %vm492, %v6956
      %6989 = vst.msk [vmem:[%s379 + $0x20] sm:$0xff] %vm492, %v6957
      %6990 = vst.msk [vmem:[%s379 + $0x28] sm:$0xff] %vm492, %v6958
      %6991 = vst.msk [vmem:[%s379 + $0x30] sm:$0xff] %vm492, %v6959
      %6992 = vst.msk [vmem:[%s379 + $0x38] sm:$0xff] %vm492, %v6960
      %6993 = vst.msk [vmem:[%s379 + $0x40] sm:$0xff] %vm492, %v6961
      %6994 = vst.msk [vmem:[%s379 + $0x48] sm:$0xff] %vm492, %v6962
      %6995 = vst.msk [vmem:[%s379 + $0x50] sm:$0xff] %vm492, %v6963
      %6996 = vst.msk [vmem:[%s379 + $0x58] sm:$0xff] %vm492, %v6964
      %6997 = vst.msk [vmem:[%s379 + $0x60] sm:$0xff] %vm492, %v6965
      %6998 = vst.msk [vmem:[%s379 + $0x68] sm:$0xff] %vm492, %v6966
      %6999 = vst.msk [vmem:[%s379 + $0x70] sm:$0xff] %vm492, %v6967
      %7000 = vst.msk [vmem:[%s379 + $0x78] sm:$0xff] %vm492, %v6968
      %7001 = vst.msk [vmem:[%s379 + $0x80] sm:$0xff] %vm492, %v6969
      %7002 = vst.msk [vmem:[%s379 + $0x88] sm:$0xff] %vm492, %v6970
      %7003 = vst.msk [vmem:[%s379 + $0x90] sm:$0xff] %vm492, %v6971
      %7004 = vst.msk [vmem:[%s379 + $0x98] sm:$0xff] %vm492, %v6972
      %7005 = vst.msk [vmem:[%s379 + $0xa0] sm:$0xff] %vm492, %v6973
      %7006 = vst.msk [vmem:[%s379 + $0xa8] sm:$0xff] %vm492, %v6974
      %7007 = vst.msk [vmem:[%s379 + $0xb0] sm:$0xff] %vm492, %v6975
      %7008 = vst.msk [vmem:[%s379 + $0xb8] sm:$0xff] %vm492, %v6976
      %7009 = vst.msk [vmem:[%s379 + $0xc0] sm:$0xff] %vm492, %v6977
      %7010 = vst.msk [vmem:[%s379 + $0xc8] sm:$0xff] %vm492, %v6978
      %7011 = vst.msk [vmem:[%s379 + $0xd0] sm:$0xff] %vm492, %v6979
      %7012 = vst.msk [vmem:[%s379 + $0xd8] sm:$0xff] %vm492, %v6980
      %7013 = vst.msk [vmem:[%s379 + $0xe0] sm:$0xff] %vm492, %v6981
      %7014 = vst.msk [vmem:[%s379 + $0xe8] sm:$0xff] %vm492, %v6982
      %7015 = vst.msk [vmem:[%s379 + $0xf0] sm:$0xff] %vm492, %v6983
      %7016 = vst.msk [vmem:[%s379 + $0xf8] sm:$0xff] %vm492, %v6984
      %p7017 = scmp.lt.s32.totalorder %s21, 1
      %s7018 = scalar_select %p7017, %s21, 1
      %s7019 = smul.addr %s7018, 32
      %s7020 = smul.addr %s7019, 8
      %s7021 = scalar_lea.vmem %s10, %s7020
      // Predicated region
      $region61: #{upsample_block_forward.1} parent=59 // pred_check
        %p7022 = pneg %p259
      $region62: #{upsample_block_forward.1} parent=59 // pred_check_branch
        %7024 = sbr.rel (%p7022) target = $region64
      $region63: #{upsample_block_forward.1} parent=59 // pred_region
        _
      $region64: #{upsample_block_forward.1} parent=59 // pred_fallthru
        _
    $region60: #{upsample_block_forward.1} parent=5 // pred_fallthru
      _
    %p7025 = scmp.le.s32.totalorder 2, %s16
    // Predicated region
    $region65: #{upsample_block_forward.1} parent=5 // pred_check
      %p7026 = pneg %p7025
    $region66: #{upsample_block_forward.1} parent=5 // pred_check_branch
      %7028 = sbr.rel (%p7026) target = $region68
    $region67: #{upsample_block_forward.1} parent=5 // pred_region
      %s7029 = ssub.s32 %s16, 2
      // Predicated region
      $region69: #{upsample_block_forward.1} parent=67 // pred_check
        %p7030 = pneg %p265
      $region70: #{upsample_block_forward.1} parent=67 // pred_check_branch
        %7032 = sbr.rel (%p7030) target = $region72
      $region71: #{upsample_block_forward.1} parent=67 // pred_region
        %p7033 = scmp.lt.s32.totalorder %s22, 1
        %s7034 = scalar_select %p7033, %s22, 1
        %s7035 = smul.addr %s7034, 32
        %s7036 = smul.addr %s7035, 8
        %s7037 = scalar_lea.vmem %s10, %s7036
      $region72: #{upsample_block_forward.1} parent=67 // pred_fallthru
        _
    $region68: #{upsample_block_forward.1} parent=5 // pred_fallthru
      _
  $region6: #{upsample_block_forward.1} parent=0 // loop_footer
    %s20 = sadd.s32 1, %s16
  $region7: #{upsample_block_forward.1} parent=0 // loop_footer_branch
    %15 = sbr.rel target = $region3
  $region8: #{upsample_block_forward.1} parent=0 // loop_exit
    _

</llo_original>
